<compile_context>
chip_gen: v5e
topology: v5e:2x2
jax: 0.10.0
libtpu: 0.0.40
codegen_flags: <defaults>
</compile_context>

<pallas_src>
import math

import jax
import jax.numpy as jnp
import numpy as np
from jax import lax
from jax.experimental import pallas as pl
from jax.experimental.pallas import tpu as pltpu

# ------------------------- config (small, synthetic) -------------------------
BATCH = 2
SEQ = 64            # must be a multiple of 32 (mra2 block size)
DIM = 32            # hidden dim
NUM_HEAD = 4
HEAD_DIM = 8        # num_head * head_dim == 32
INNER = NUM_HEAD * HEAD_DIM
HIDDEN = 64         # Block FFN hidden dim
LN_EPS = 1e-5       # nn.LayerNorm default


# ---------------------------- shared math helpers -----------------------------
def _gelu_tanh(x):
    # nn.GELU() is erf-based; the tanh formulation (max abs diff ~3e-4) is used
    # in both kernel and reference so they match exactly.
    c = math.sqrt(2.0 / math.pi)
    return 0.5 * x * (1.0 + jnp.tanh(c * (x + 0.044715 * x * x * x)))


def _layernorm(x, gamma, beta):
    mu = jnp.mean(x, axis=-1, keepdims=True)
    xc = x - mu
    var = jnp.mean(xc * xc, axis=-1, keepdims=True)
    return xc * lax.rsqrt(var + LN_EPS) * gamma + beta


# ------------------------------- Pallas kernel --------------------------------
def block_kernel(x_ref, kbias_ref, mq_ref,
                 wqkv_ref, wo_ref, w1_ref, w2_ref,
                 bias_ref, hm_ref, out_ref):
    """Whole batch in one invocation.

    x_ref    : (B*S, DIM)       flattened tokens
    kbias_ref: (B, S)           additive key bias, -1e9 on padded keys
    mq_ref   : (B*S, 1)         query mask (zeros masked query rows)
    wqkv_ref : (DIM, 3*INNER)   fused, pre-transposed Q|K|V weight
                                (softmax scale folded into the Q columns)
    wo_ref   : (INNER, DIM)     attention output projection (pre-transposed)
    w1_ref   : (DIM, HIDDEN)    FFN weights (pre-transposed)
    w2_ref   : (HIDDEN, DIM)
    bias_ref : (8, 128)         packed bias / gamma / beta slab
    hm_ref   : (NUM_HEAD*S, INNER)  0/1 block-diagonal head mask
    out_ref  : (B*S, DIM)
    """
    x = x_ref[...]                       # (B*S, D)
    slab = bias_ref[...]                 # (8, 128)
    bqkv = slab[0:1, 0:3 * INNER]        # (1, 96)
    b1   = slab[1:2, 0:HIDDEN]           # (1, 64)
    bo   = slab[2:3, 0:DIM]
    g1   = slab[3:4, 0:DIM]
    be1  = slab[4:5, 0:DIM]
    b2   = slab[5:6, 0:DIM]
    g2   = slab[6:7, 0:DIM]
    be2  = slab[7:8, 0:DIM]

    head_mask = hm_ref[...]              # (H*S, INNER)
    kbias = kbias_ref[...]               # (B, S)

    # Fused Q/K/V projection: one MXU call, f32 accumulate.
    qkv = jnp.dot(x, wqkv_ref[...], preferred_element_type=jnp.float32) + bqkv
    q = qkv[:, 0:INNER]                  # already scaled by 1/sqrt(head_dim)
    k = qkv[:, INNER:2 * INNER]
    v = qkv[:, 2 * INNER:3 * INNER]

    dn = (((1,), (1,)), ((), ()))        # contract last dims: A @ B^T, no .T

    # Static 2-iteration batch loop (fully unrolled at trace time).
    ctx_blocks = []
    for b in range(BATCH):
        rows = slice(b * SEQ, (b + 1) * SEQ)
        q_b, k_b, v_b = q[rows], k[rows], v[rows]

        # Sublane-stacked per-head queries: head-h row block keeps only
        # head-h columns (block-diagonal 0/1 mask from the wrapper).
        q_bd = jnp.concatenate([q_b] * NUM_HEAD, axis=0) * head_mask  # (H*S, INNER)

        s = lax.dot_general(q_bd, k_b, dn,
                            preferred_element_type=jnp.float32)       # (H*S, S)
        s = s + kbias[b:b + 1, :]        # key-padding bias, broadcast over rows

        m = jnp.max(s, axis=-1, keepdims=True)
        p = jnp.exp(s - m)
        l = jnp.sum(p, axis=-1, keepdims=True)

        ctx = jnp.dot(p, v_b, preferred_element_type=jnp.float32)     # (H*S, INNER)
        # Re-mask to head-h columns and apply the deferred softmax
        # normalization (approx reciprocal -> EUP slot).
        ctx = ctx * head_mask * pl.reciprocal(l, approx=True)
        # Summing the H row blocks yields combine_heads: (S, INNER) with head-h
        # context in head-h column positions.
        comb = ctx[0:SEQ]
        for h in range(1, NUM_HEAD):
            comb = comb + ctx[h * SEQ:(h + 1) * SEQ]
        ctx_blocks.append(comb)

    ctx_all = jnp.concatenate(ctx_blocks, axis=0) * mq_ref[...]        # (B*S, INNER)

    # Single attention output projection for the whole batch.
    mha = jnp.dot(ctx_all, wo_ref[...], preferred_element_type=jnp.float32) + bo

    # residual + LayerNorm 1 (dropout1 is identity in eval mode)
    h1 = _layernorm(x + mha, g1, be1)

    # FFN: Linear -> GELU -> Linear; residual + LayerNorm 2
    f = jnp.dot(h1, w1_ref[...], preferred_element_type=jnp.float32) + b1
    f = _gelu_tanh(f)
    f = jnp.dot(f, w2_ref[...], preferred_element_type=jnp.float32) + b2
    h2 = _layernorm(h1 + f, g2, be2)

    out_ref[...] = h2.astype(out_ref.dtype)


# --------------------------------- wrapper -------------------------------------
def block_forward(x, mask, params):
    """x: (B, S, DIM) float32, mask: (B, S) float32 (1 = keep, 0 = pad)."""
    B, S, D = x.shape
    assert B == BATCH and S == SEQ and D == DIM

    (wq, bq, wk, bk, wv, bv, wo, bo,
     g1, be1, w1, b1, w2, b2, g2, be2) = params

    scale = 1.0 / math.sqrt(HEAD_DIM)
    # Fused, pre-transposed (in, 3*out) QKV weight; softmax scale folded into
    # the Q columns and bias (one-time weight prep, not per-step data scaling).
    wqkv_t = jnp.concatenate([wq.T * scale, wk.T, wv.T], axis=1)   # (DIM, 3*INNER)
    bqkv = jnp.concatenate([bq * scale, bk, bv], axis=0)           # (3*INNER,)
    wo_t = wo.T                                                    # (INNER, DIM)
    w1_t = w1.T                                                    # (DIM, HIDDEN)
    w2_t = w2.T                                                    # (HIDDEN, DIM)

    # Pack every small bias / affine vector into one (8,128) slab -> one DMA.
    slab = np.zeros((8, 128), np.float32)
    slab[0, :3 * INNER] = np.asarray(bqkv)
    slab[1, :HIDDEN] = np.asarray(b1)
    slab[2, :DIM] = np.asarray(bo)
    slab[3, :DIM] = np.asarray(g1)
    slab[4, :DIM] = np.asarray(be1)
    slab[5, :DIM] = np.asarray(b2)
    slab[6, :DIM] = np.asarray(g2)
    slab[7, :DIM] = np.asarray(be2)
    slab = jnp.asarray(slab)

    # 0/1 block-diagonal head mask, (NUM_HEAD*S, INNER).
    hm = np.zeros((NUM_HEAD * S, INNER), np.float32)
    for h in range(NUM_HEAD):
        hm[h * S:(h + 1) * S, h * HEAD_DIM:(h + 1) * HEAD_DIM] = 1.0
    hm = jnp.asarray(hm)

    x_flat = x.reshape(B * S, D)
    kbias = (-1e9 * (1.0 - mask)).astype(jnp.float32)              # (B, S)
    mask_q = mask.reshape(B * S, 1).astype(jnp.float32)

    full = lambda shp: pl.BlockSpec(shp, lambda i: (0, 0))

    grid_spec = pltpu.PrefetchScalarGridSpec(
        num_scalar_prefetch=0,
        grid=(1,),
        in_specs=[
            full((B * S, D)),               # X (flattened)
            full((B, S)),                   # key bias
            full((B * S, 1)),               # query mask
            full((D, 3 * INNER)),           # fused QKV weight
            full((INNER, D)),               # attn ff weight
            full((D, HIDDEN)),              # FFN W1
            full((HIDDEN, D)),              # FFN W2
            full((8, 128)),                 # packed bias slab
            full((NUM_HEAD * S, INNER)),    # head mask
        ],
        out_specs=full((B * S, D)),
    )

    out = pl.pallas_call(
        block_kernel,
        out_shape=jax.ShapeDtypeStruct((B * S, D), jnp.float32),
        grid_spec=grid_spec,
        compiler_params=pltpu.CompilerParams(
            dimension_semantics=("arbitrary",)),
    )(x_flat, kbias, mask_q, wqkv_t, wo_t, w1_t, w2_t, slab, hm)
    return out.reshape(B, S, D)


# --------------------------- plain-JAX reference --------------------------------
def reference(x, mask, params):
    (wq, bq, wk, bk, wv, bv, wo, bo,
     g1, be1, w1, b1, w2, b2, g2, be2) = params
    B, S, D = x.shape

    def split(y):
        return y.reshape(B, S, NUM_HEAD, HEAD_DIM).transpose(0, 2, 1, 3)

    q = split(x @ wq.T + bq)
    k = split(x @ wk.T + bk)
    v = split(x @ wv.T + bv)
    scores = jnp.einsum("bhqd,bhkd->bhqk", q, k) / math.sqrt(HEAD_DIM)
    scores = scores + (-1e9) * (1.0 - mask[:, None, None, :])
    attn = jax.nn.softmax(scores, axis=-1)
    ctx = jnp.einsum("bhqk,bhkd->bhqd", attn, v)
    ctx = ctx * mask[:, None, :, None]
    ctx = ctx.transpose(0, 2, 1, 3).reshape(B, S, INNER)
    mha = ctx @ wo.T + bo

    h1 = _layernorm(x + mha, g1, be1)
    f = _gelu_tanh(h1 @ w1.T + b1) @ w2.T + b2
    return _layernorm(h1 + f, g2, be2)


# ----------------------------------- main ----------------------------------------
def init_linear(key, out_f, in_f):
    # nn.Linear default: U(-1/sqrt(in_f), 1/sqrt(in_f)) for both weight & bias.
    k1, k2 = jax.random.split(key)
    bound = 1.0 / math.sqrt(in_f)
    w = jax.random.uniform(k1, (out_f, in_f), jnp.float32, -bound, bound)
    b = jax.random.uniform(k2, (out_f,), jnp.float32, -bound, bound)
    return w, b


if __name__ == "__main__":
    key = jax.random.PRNGKey(0)
    kx, kq, kk, kv, ko, kf1, kf2 = jax.random.split(key, 7)

    x = jax.random.normal(kx, (BATCH, SEQ, DIM), jnp.float32)
    # mask: batch 0 fully visible, batch 1 has the last 16 tokens padded out.
    mask = jnp.ones((BATCH, SEQ), jnp.float32)
    mask = mask.at[1, SEQ - 16:].set(0.0)

    wq, bq = init_linear(kq, INNER, DIM)
    wk, bk = init_linear(kk, INNER, DIM)
    wv, bv = init_linear(kv, INNER, DIM)
    wo, bo = init_linear(ko, DIM, INNER)
    w1, b1 = init_linear(kf1, HIDDEN, DIM)
    w2, b2 = init_linear(kf2, DIM, HIDDEN)
    g1, be1 = jnp.ones((DIM,), jnp.float32), jnp.zeros((DIM,), jnp.float32)
    g2, be2 = jnp.ones((DIM,), jnp.float32), jnp.zeros((DIM,), jnp.float32)
    params = (wq, bq, wk, bk, wv, bv, wo, bo,
              g1, be1, w1, b1, w2, b2, g2, be2)

    out = block_forward(x, mask, params)
    out = jax.block_until_ready(out)

    ref = reference(x, mask, params)
    # Tolerance covers the EUP approx-reciprocal in the softmax denominator.
    np.testing.assert_allclose(np.asarray(out), np.asarray(ref),
                               rtol=2e-3, atol=2e-3)

    print("KERNEL_OK")
</pallas_src>

<mosaic_0001>
module attributes {stable_mosaic.version = 11 : i64} {
  func.func @block_kernel(%arg0: i32, %arg1: memref<128x32xf32, #tpu.memory_space<vmem>>, %arg2: memref<2x64xf32, #tpu.memory_space<vmem>>, %arg3: memref<128x1xf32, #tpu.memory_space<vmem>>, %arg4: memref<32x96xf32, #tpu.memory_space<vmem>>, %arg5: memref<32x32xf32, #tpu.memory_space<vmem>>, %arg6: memref<32x64xf32, #tpu.memory_space<vmem>>, %arg7: memref<64x32xf32, #tpu.memory_space<vmem>>, %arg8: memref<8x128xf32, #tpu.memory_space<vmem>>, %arg9: memref<256x32xf32, #tpu.memory_space<vmem>>, %arg10: memref<128x32xf32, #tpu.memory_space<vmem>>) attributes {dimension_semantics = [#tpu.dimension_semantics<arbitrary>], iteration_bounds = array<i64: 1>, scalar_prefetch = 0 : i64, scratch_operands = 0 : i64, tpu.core_type = #tpu.core_type<tc>, window_params = [{pipeline_mode = #tpu.pipeline_mode<synchronous>, transform_indices = @transform_0, window_bounds = array<i64: 128, 32>}, {pipeline_mode = #tpu.pipeline_mode<synchronous>, transform_indices = @transform_1, window_bounds = array<i64: 2, 64>}, {pipeline_mode = #tpu.pipeline_mode<synchronous>, transform_indices = @transform_2, window_bounds = array<i64: 128, 1>}, {pipeline_mode = #tpu.pipeline_mode<synchronous>, transform_indices = @transform_3, window_bounds = array<i64: 32, 96>}, {pipeline_mode = #tpu.pipeline_mode<synchronous>, transform_indices = @transform_4, window_bounds = array<i64: 32, 32>}, {pipeline_mode = #tpu.pipeline_mode<synchronous>, transform_indices = @transform_5, window_bounds = array<i64: 32, 64>}, {pipeline_mode = #tpu.pipeline_mode<synchronous>, transform_indices = @transform_6, window_bounds = array<i64: 64, 32>}, {pipeline_mode = #tpu.pipeline_mode<synchronous>, transform_indices = @transform_7, window_bounds = array<i64: 8, 128>}, {pipeline_mode = #tpu.pipeline_mode<synchronous>, transform_indices = @transform_8, window_bounds = array<i64: 256, 32>}, {pipeline_mode = #tpu.pipeline_mode<synchronous>, transform_indices = @transform_9, window_bounds = array<i64: 128, 32>}]} {
    %c0 = arith.constant 0 : index
    %c0_0 = arith.constant 0 : index
    %0 = vector.load %arg1[%c0, %c0_0] : memref<128x32xf32, #tpu.memory_space<vmem>>, vector<128x32xf32>
    %c0_1 = arith.constant 0 : index
    %c0_2 = arith.constant 0 : index
    %1 = vector.load %arg8[%c0_1, %c0_2] : memref<8x128xf32, #tpu.memory_space<vmem>>, vector<8x128xf32>
    %2 = vector.extract_strided_slice %1 {offsets = [0, 0], sizes = [1, 96], strides = [1, 1]} : vector<8x128xf32> to vector<1x96xf32>
    %3 = vector.extract_strided_slice %1 {offsets = [1, 0], sizes = [1, 64], strides = [1, 1]} : vector<8x128xf32> to vector<1x64xf32>
    %4 = vector.extract_strided_slice %1 {offsets = [2, 0], sizes = [1, 32], strides = [1, 1]} : vector<8x128xf32> to vector<1x32xf32>
    %5 = vector.extract_strided_slice %1 {offsets = [3, 0], sizes = [1, 32], strides = [1, 1]} : vector<8x128xf32> to vector<1x32xf32>
    %6 = vector.extract_strided_slice %1 {offsets = [4, 0], sizes = [1, 32], strides = [1, 1]} : vector<8x128xf32> to vector<1x32xf32>
    %7 = vector.extract_strided_slice %1 {offsets = [5, 0], sizes = [1, 32], strides = [1, 1]} : vector<8x128xf32> to vector<1x32xf32>
    %8 = vector.extract_strided_slice %1 {offsets = [6, 0], sizes = [1, 32], strides = [1, 1]} : vector<8x128xf32> to vector<1x32xf32>
    %9 = vector.extract_strided_slice %1 {offsets = [7, 0], sizes = [1, 32], strides = [1, 1]} : vector<8x128xf32> to vector<1x32xf32>
    %c0_3 = arith.constant 0 : index
    %c0_4 = arith.constant 0 : index
    %10 = vector.load %arg9[%c0_3, %c0_4] : memref<256x32xf32, #tpu.memory_space<vmem>>, vector<256x32xf32>
    %c0_5 = arith.constant 0 : index
    %c0_6 = arith.constant 0 : index
    %11 = vector.load %arg2[%c0_5, %c0_6] : memref<2x64xf32, #tpu.memory_space<vmem>>, vector<2x64xf32>
    %c0_7 = arith.constant 0 : index
    %c0_8 = arith.constant 0 : index
    %12 = vector.load %arg4[%c0_7, %c0_8] : memref<32x96xf32, #tpu.memory_space<vmem>>, vector<32x96xf32>
    %cst = arith.constant dense<0.000000e+00> : vector<128x96xf32>
    %13 = tpu.matmul %0, %12, %cst {dimension_numbers = #tpu.dot_dimension_numbers<[1], [0], [0], [1], [0, 0, 1, 1], [], []>} : vector<128x32xf32>, vector<32x96xf32>, vector<128x96xf32> -> vector<128x96xf32>
    %14 = vector.broadcast %2 : vector<1x96xf32> to vector<128x96xf32>
    %15 = arith.addf %13, %14 : vector<128x96xf32>
    %16 = vector.extract_strided_slice %15 {offsets = [0, 0], sizes = [128, 32], strides = [1, 1]} : vector<128x96xf32> to vector<128x32xf32>
    %17 = vector.extract_strided_slice %15 {offsets = [0, 32], sizes = [128, 32], strides = [1, 1]} : vector<128x96xf32> to vector<128x32xf32>
    %18 = vector.extract_strided_slice %15 {offsets = [0, 64], sizes = [128, 32], strides = [1, 1]} : vector<128x96xf32> to vector<128x32xf32>
    %19 = vector.extract_strided_slice %16 {offsets = [0, 0], sizes = [64, 32], strides = [1, 1]} : vector<128x32xf32> to vector<64x32xf32>
    %20 = vector.extract_strided_slice %17 {offsets = [0, 0], sizes = [64, 32], strides = [1, 1]} : vector<128x32xf32> to vector<64x32xf32>
    %21 = vector.extract_strided_slice %18 {offsets = [0, 0], sizes = [64, 32], strides = [1, 1]} : vector<128x32xf32> to vector<64x32xf32>
    %22 = tpu.concatenate %19, %19, %19, %19 in 0 : vector<64x32xf32>, vector<64x32xf32>, vector<64x32xf32>, vector<64x32xf32> -> vector<256x32xf32>
    %23 = arith.mulf %22, %10 : vector<256x32xf32>
    %cst_9 = arith.constant dense<0.000000e+00> : vector<256x64xf32>
    %24 = tpu.matmul %23, %20, %cst_9 {dimension_numbers = #tpu.dot_dimension_numbers<[1], [1], [0], [0], [0, 0, 1, 0], [], []>} : vector<256x32xf32>, vector<64x32xf32>, vector<256x64xf32> -> vector<256x64xf32>
    %25 = vector.extract_strided_slice %11 {offsets = [0, 0], sizes = [1, 64], strides = [1, 1]} : vector<2x64xf32> to vector<1x64xf32>
    %26 = vector.broadcast %25 : vector<1x64xf32> to vector<256x64xf32>
    %27 = arith.addf %24, %26 : vector<256x64xf32>
    %cst_10 = arith.constant dense<0xFF800000> : vector<256xf32>
    %28 = vector.multi_reduction <maximumf>, %27, %cst_10 [1] : vector<256x64xf32> to vector<256xf32>
    %29 = vector.shape_cast %28 : vector<256xf32> to vector<256x1xf32>
    %30 = vector.broadcast %29 : vector<256x1xf32> to vector<256x64xf32>
    %31 = arith.subf %27, %30 : vector<256x64xf32>
    %32 = math.exp %31 : vector<256x64xf32>
    %cst_11 = arith.constant dense<0.000000e+00> : vector<256xf32>
    %33 = vector.multi_reduction <add>, %32, %cst_11 [1] : vector<256x64xf32> to vector<256xf32>
    %34 = vector.shape_cast %33 : vector<256xf32> to vector<256x1xf32>
    %cst_12 = arith.constant dense<0.000000e+00> : vector<256x32xf32>
    %35 = tpu.matmul %32, %21, %cst_12 {dimension_numbers = #tpu.dot_dimension_numbers<[1], [0], [0], [1], [0, 0, 1, 1], [], []>} : vector<256x64xf32>, vector<64x32xf32>, vector<256x32xf32> -> vector<256x32xf32>
    %36 = arith.mulf %35, %10 : vector<256x32xf32>
    %37 = tpu.reciprocal %34 {approx = true} : vector<256x1xf32> -> vector<256x1xf32>
    %38 = vector.broadcast %37 : vector<256x1xf32> to vector<256x32xf32>
    %39 = arith.mulf %36, %38 : vector<256x32xf32>
    %40 = vector.extract_strided_slice %39 {offsets = [0, 0], sizes = [64, 32], strides = [1, 1]} : vector<256x32xf32> to vector<64x32xf32>
    %41 = vector.extract_strided_slice %39 {offsets = [64, 0], sizes = [64, 32], strides = [1, 1]} : vector<256x32xf32> to vector<64x32xf32>
    %42 = arith.addf %40, %41 : vector<64x32xf32>
    %43 = vector.extract_strided_slice %39 {offsets = [128, 0], sizes = [64, 32], strides = [1, 1]} : vector<256x32xf32> to vector<64x32xf32>
    %44 = arith.addf %42, %43 : vector<64x32xf32>
    %45 = vector.extract_strided_slice %39 {offsets = [192, 0], sizes = [64, 32], strides = [1, 1]} : vector<256x32xf32> to vector<64x32xf32>
    %46 = arith.addf %44, %45 : vector<64x32xf32>
    %47 = vector.extract_strided_slice %16 {offsets = [64, 0], sizes = [64, 32], strides = [1, 1]} : vector<128x32xf32> to vector<64x32xf32>
    %48 = vector.extract_strided_slice %17 {offsets = [64, 0], sizes = [64, 32], strides = [1, 1]} : vector<128x32xf32> to vector<64x32xf32>
    %49 = vector.extract_strided_slice %18 {offsets = [64, 0], sizes = [64, 32], strides = [1, 1]} : vector<128x32xf32> to vector<64x32xf32>
    %50 = tpu.concatenate %47, %47, %47, %47 in 0 : vector<64x32xf32>, vector<64x32xf32>, vector<64x32xf32>, vector<64x32xf32> -> vector<256x32xf32>
    %51 = arith.mulf %50, %10 : vector<256x32xf32>
    %cst_13 = arith.constant dense<0.000000e+00> : vector<256x64xf32>
    %52 = tpu.matmul %51, %48, %cst_13 {dimension_numbers = #tpu.dot_dimension_numbers<[1], [1], [0], [0], [0, 0, 1, 0], [], []>} : vector<256x32xf32>, vector<64x32xf32>, vector<256x64xf32> -> vector<256x64xf32>
    %53 = vector.extract_strided_slice %11 {offsets = [1, 0], sizes = [1, 64], strides = [1, 1]} : vector<2x64xf32> to vector<1x64xf32>
    %54 = vector.broadcast %53 : vector<1x64xf32> to vector<256x64xf32>
    %55 = arith.addf %52, %54 : vector<256x64xf32>
    %cst_14 = arith.constant dense<0xFF800000> : vector<256xf32>
    %56 = vector.multi_reduction <maximumf>, %55, %cst_14 [1] : vector<256x64xf32> to vector<256xf32>
    %57 = vector.shape_cast %56 : vector<256xf32> to vector<256x1xf32>
    %58 = vector.broadcast %57 : vector<256x1xf32> to vector<256x64xf32>
    %59 = arith.subf %55, %58 : vector<256x64xf32>
    %60 = math.exp %59 : vector<256x64xf32>
    %cst_15 = arith.constant dense<0.000000e+00> : vector<256xf32>
    %61 = vector.multi_reduction <add>, %60, %cst_15 [1] : vector<256x64xf32> to vector<256xf32>
    %62 = vector.shape_cast %61 : vector<256xf32> to vector<256x1xf32>
    %cst_16 = arith.constant dense<0.000000e+00> : vector<256x32xf32>
    %63 = tpu.matmul %60, %49, %cst_16 {dimension_numbers = #tpu.dot_dimension_numbers<[1], [0], [0], [1], [0, 0, 1, 1], [], []>} : vector<256x64xf32>, vector<64x32xf32>, vector<256x32xf32> -> vector<256x32xf32>
    %64 = arith.mulf %63, %10 : vector<256x32xf32>
    %65 = tpu.reciprocal %62 {approx = true} : vector<256x1xf32> -> vector<256x1xf32>
    %66 = vector.broadcast %65 : vector<256x1xf32> to vector<256x32xf32>
    %67 = arith.mulf %64, %66 : vector<256x32xf32>
    %68 = vector.extract_strided_slice %67 {offsets = [0, 0], sizes = [64, 32], strides = [1, 1]} : vector<256x32xf32> to vector<64x32xf32>
    %69 = vector.extract_strided_slice %67 {offsets = [64, 0], sizes = [64, 32], strides = [1, 1]} : vector<256x32xf32> to vector<64x32xf32>
    %70 = arith.addf %68, %69 : vector<64x32xf32>
    %71 = vector.extract_strided_slice %67 {offsets = [128, 0], sizes = [64, 32], strides = [1, 1]} : vector<256x32xf32> to vector<64x32xf32>
    %72 = arith.addf %70, %71 : vector<64x32xf32>
    %73 = vector.extract_strided_slice %67 {offsets = [192, 0], sizes = [64, 32], strides = [1, 1]} : vector<256x32xf32> to vector<64x32xf32>
    %74 = arith.addf %72, %73 : vector<64x32xf32>
    %75 = tpu.concatenate %46, %74 in 0 : vector<64x32xf32>, vector<64x32xf32> -> vector<128x32xf32>
    %c0_17 = arith.constant 0 : index
    %c0_18 = arith.constant 0 : index
    %76 = vector.load %arg3[%c0_17, %c0_18] : memref<128x1xf32, #tpu.memory_space<vmem>>, vector<128x1xf32>
    %77 = vector.broadcast %76 : vector<128x1xf32> to vector<128x32xf32>
    %78 = arith.mulf %75, %77 : vector<128x32xf32>
    %c0_19 = arith.constant 0 : index
    %c0_20 = arith.constant 0 : index
    %79 = vector.load %arg5[%c0_19, %c0_20] : memref<32x32xf32, #tpu.memory_space<vmem>>, vector<32x32xf32>
    %cst_21 = arith.constant dense<0.000000e+00> : vector<128x32xf32>
    %80 = tpu.matmul %78, %79, %cst_21 {dimension_numbers = #tpu.dot_dimension_numbers<[1], [0], [0], [1], [0, 0, 1, 1], [], []>} : vector<128x32xf32>, vector<32x32xf32>, vector<128x32xf32> -> vector<128x32xf32>
    %81 = vector.broadcast %4 : vector<1x32xf32> to vector<128x32xf32>
    %82 = arith.addf %80, %81 : vector<128x32xf32>
    %83 = arith.addf %0, %82 : vector<128x32xf32>
    %cst_22 = arith.constant dense<0.000000e+00> : vector<128xf32>
    %84 = vector.multi_reduction <add>, %83, %cst_22 [1] : vector<128x32xf32> to vector<128xf32>
    %85 = vector.shape_cast %84 : vector<128xf32> to vector<128x1xf32>
    %cst_23 = arith.constant 3.200000e+01 : f32
    %86 = vector.broadcast %cst_23 : f32 to vector<128x1xf32>
    %87 = arith.divf %85, %86 : vector<128x1xf32>
    %88 = vector.broadcast %87 : vector<128x1xf32> to vector<128x32xf32>
    %89 = arith.subf %83, %88 : vector<128x32xf32>
    %90 = arith.mulf %89, %89 : vector<128x32xf32>
    %cst_24 = arith.constant dense<0.000000e+00> : vector<128xf32>
    %91 = vector.multi_reduction <add>, %90, %cst_24 [1] : vector<128x32xf32> to vector<128xf32>
    %92 = vector.shape_cast %91 : vector<128xf32> to vector<128x1xf32>
    %cst_25 = arith.constant 3.200000e+01 : f32
    %93 = vector.broadcast %cst_25 : f32 to vector<128x1xf32>
    %94 = arith.divf %92, %93 : vector<128x1xf32>
    %cst_26 = arith.constant 9.99999974E-6 : f32
    %95 = vector.broadcast %cst_26 : f32 to vector<128x1xf32>
    %96 = arith.addf %94, %95 : vector<128x1xf32>
    %97 = math.rsqrt %96 : vector<128x1xf32>
    %98 = vector.broadcast %97 : vector<128x1xf32> to vector<128x32xf32>
    %99 = arith.mulf %89, %98 : vector<128x32xf32>
    %100 = vector.broadcast %5 : vector<1x32xf32> to vector<128x32xf32>
    %101 = arith.mulf %99, %100 : vector<128x32xf32>
    %102 = vector.broadcast %6 : vector<1x32xf32> to vector<128x32xf32>
    %103 = arith.addf %101, %102 : vector<128x32xf32>
    %c0_27 = arith.constant 0 : index
    %c0_28 = arith.constant 0 : index
    %104 = vector.load %arg6[%c0_27, %c0_28] : memref<32x64xf32, #tpu.memory_space<vmem>>, vector<32x64xf32>
    %cst_29 = arith.constant dense<0.000000e+00> : vector<128x64xf32>
    %105 = tpu.matmul %103, %104, %cst_29 {dimension_numbers = #tpu.dot_dimension_numbers<[1], [0], [0], [1], [0, 0, 1, 1], [], []>} : vector<128x32xf32>, vector<32x64xf32>, vector<128x64xf32> -> vector<128x64xf32>
    %106 = vector.broadcast %3 : vector<1x64xf32> to vector<128x64xf32>
    %107 = arith.addf %105, %106 : vector<128x64xf32>
    %cst_30 = arith.constant 5.000000e-01 : f32
    %108 = vector.broadcast %cst_30 : f32 to vector<128x64xf32>
    %109 = arith.mulf %108, %107 : vector<128x64xf32>
    %cst_31 = arith.constant 4.471500e-02 : f32
    %110 = vector.broadcast %cst_31 : f32 to vector<128x64xf32>
    %111 = arith.mulf %110, %107 : vector<128x64xf32>
    %112 = arith.mulf %111, %107 : vector<128x64xf32>
    %113 = arith.mulf %112, %107 : vector<128x64xf32>
    %114 = arith.addf %107, %113 : vector<128x64xf32>
    %cst_32 = arith.constant 0.797884583 : f32
    %115 = vector.broadcast %cst_32 : f32 to vector<128x64xf32>
    %116 = arith.mulf %115, %114 : vector<128x64xf32>
    %117 = math.tanh %116 : vector<128x64xf32>
    %cst_33 = arith.constant 1.000000e+00 : f32
    %118 = vector.broadcast %cst_33 : f32 to vector<128x64xf32>
    %119 = arith.addf %118, %117 : vector<128x64xf32>
    %120 = arith.mulf %109, %119 : vector<128x64xf32>
    %c0_34 = arith.constant 0 : index
    %c0_35 = arith.constant 0 : index
    %121 = vector.load %arg7[%c0_34, %c0_35] : memref<64x32xf32, #tpu.memory_space<vmem>>, vector<64x32xf32>
    %cst_36 = arith.constant dense<0.000000e+00> : vector<128x32xf32>
    %122 = tpu.matmul %120, %121, %cst_36 {dimension_numbers = #tpu.dot_dimension_numbers<[1], [0], [0], [1], [0, 0, 1, 1], [], []>} : vector<128x64xf32>, vector<64x32xf32>, vector<128x32xf32> -> vector<128x32xf32>
    %123 = vector.broadcast %7 : vector<1x32xf32> to vector<128x32xf32>
    %124 = arith.addf %122, %123 : vector<128x32xf32>
    %125 = arith.addf %103, %124 : vector<128x32xf32>
    %cst_37 = arith.constant dense<0.000000e+00> : vector<128xf32>
    %126 = vector.multi_reduction <add>, %125, %cst_37 [1] : vector<128x32xf32> to vector<128xf32>
    %127 = vector.shape_cast %126 : vector<128xf32> to vector<128x1xf32>
    %cst_38 = arith.constant 3.200000e+01 : f32
    %128 = vector.broadcast %cst_38 : f32 to vector<128x1xf32>
    %129 = arith.divf %127, %128 : vector<128x1xf32>
    %130 = vector.broadcast %129 : vector<128x1xf32> to vector<128x32xf32>
    %131 = arith.subf %125, %130 : vector<128x32xf32>
    %132 = arith.mulf %131, %131 : vector<128x32xf32>
    %cst_39 = arith.constant dense<0.000000e+00> : vector<128xf32>
    %133 = vector.multi_reduction <add>, %132, %cst_39 [1] : vector<128x32xf32> to vector<128xf32>
    %134 = vector.shape_cast %133 : vector<128xf32> to vector<128x1xf32>
    %cst_40 = arith.constant 3.200000e+01 : f32
    %135 = vector.broadcast %cst_40 : f32 to vector<128x1xf32>
    %136 = arith.divf %134, %135 : vector<128x1xf32>
    %cst_41 = arith.constant 9.99999974E-6 : f32
    %137 = vector.broadcast %cst_41 : f32 to vector<128x1xf32>
    %138 = arith.addf %136, %137 : vector<128x1xf32>
    %139 = math.rsqrt %138 : vector<128x1xf32>
    %140 = vector.broadcast %139 : vector<128x1xf32> to vector<128x32xf32>
    %141 = arith.mulf %131, %140 : vector<128x32xf32>
    %142 = vector.broadcast %8 : vector<1x32xf32> to vector<128x32xf32>
    %143 = arith.mulf %141, %142 : vector<128x32xf32>
    %144 = vector.broadcast %9 : vector<1x32xf32> to vector<128x32xf32>
    %145 = arith.addf %143, %144 : vector<128x32xf32>
    %c0_42 = arith.constant 0 : index
    %c0_43 = arith.constant 0 : index
    %146 = vector.load %arg10[%c0_42, %c0_43] : memref<128x32xf32, #tpu.memory_space<vmem>>, vector<128x32xf32>
    tpu.vector_store %arg10[%c0_42, %c0_43], %145 {strides = array<i32>} : memref<128x32xf32, #tpu.memory_space<vmem>>, vector<128x32xf32>,
    return
  }
  func.func @transform_0(%arg0: i32) -> (i32, i32) {
    %c0_i32 = arith.constant 0 : i32
    %c0_i32_0 = arith.constant 0 : i32
    %c0_i32_1 = arith.constant 0 : i32
    return %c0_i32, %c0_i32_0 : i32, i32
  }
  func.func @transform_1(%arg0: i32) -> (i32, i32) {
    %c0_i32 = arith.constant 0 : i32
    %c0_i32_0 = arith.constant 0 : i32
    %c0_i32_1 = arith.constant 0 : i32
    return %c0_i32, %c0_i32_0 : i32, i32
  }
  func.func @transform_2(%arg0: i32) -> (i32, i32) {
    %c0_i32 = arith.constant 0 : i32
    %c0_i32_0 = arith.constant 0 : i32
    %c0_i32_1 = arith.constant 0 : i32
    return %c0_i32, %c0_i32_0 : i32, i32
  }
  func.func @transform_3(%arg0: i32) -> (i32, i32) {
    %c0_i32 = arith.constant 0 : i32
    %c0_i32_0 = arith.constant 0 : i32
    %c0_i32_1 = arith.constant 0 : i32
    return %c0_i32, %c0_i32_0 : i32, i32
  }
  func.func @transform_4(%arg0: i32) -> (i32, i32) {
    %c0_i32 = arith.constant 0 : i32
    %c0_i32_0 = arith.constant 0 : i32
    %c0_i32_1 = arith.constant 0 : i32
    return %c0_i32, %c0_i32_0 : i32, i32
  }
  func.func @transform_5(%arg0: i32) -> (i32, i32) {
    %c0_i32 = arith.constant 0 : i32
    %c0_i32_0 = arith.constant 0 : i32
    %c0_i32_1 = arith.constant 0 : i32
    return %c0_i32, %c0_i32_0 : i32, i32
  }
  func.func @transform_6(%arg0: i32) -> (i32, i32) {
    %c0_i32 = arith.constant 0 : i32
    %c0_i32_0 = arith.constant 0 : i32
    %c0_i32_1 = arith.constant 0 : i32
    return %c0_i32, %c0_i32_0 : i32, i32
  }
  func.func @transform_7(%arg0: i32) -> (i32, i32) {
    %c0_i32 = arith.constant 0 : i32
    %c0_i32_0 = arith.constant 0 : i32
    %c0_i32_1 = arith.constant 0 : i32
    return %c0_i32, %c0_i32_0 : i32, i32
  }
  func.func @transform_8(%arg0: i32) -> (i32, i32) {
    %c0_i32 = arith.constant 0 : i32
    %c0_i32_0 = arith.constant 0 : i32
    %c0_i32_1 = arith.constant 0 : i32
    return %c0_i32, %c0_i32_0 : i32, i32
  }
  func.func @transform_9(%arg0: i32) -> (i32, i32) {
    %c0_i32 = arith.constant 0 : i32
    %c0_i32_0 = arith.constant 0 : i32
    %c0_i32_1 = arith.constant 0 : i32
    return %c0_i32, %c0_i32_0 : i32, i32
  }
}

</mosaic_0001>

<llo_original>
// kernel: tpu_custom_call.1
$region0: #{tpu_custom_call.1}
  #allocation0 [shape = 'u32[]', space=smem, size = 0x4, offset = 0x4, fixed_abs, tag = 'smem constant byte address 0x4 - core index']
  #allocation1 [shape = 'u32[72,128]{1,0:T(1,128)}', space=vmem, size = 0x9000, scoped, tag = 'internal scratch']
  %s0 = inlined_call_operand.vmem [shape: f32[128,32], index: 0, kind: input, shape index: {}]
  %s1 = inlined_call_operand.vmem [shape: f32[2,64], index: 1, kind: input, shape index: {}]
  %s2 = inlined_call_operand.vmem [shape: f32[128,1], index: 2, kind: input, shape index: {}]
  %s3 = inlined_call_operand.vmem [shape: f32[32,96], index: 3, kind: input, shape index: {}]
  %s4 = inlined_call_operand.vmem [shape: f32[32,32], index: 4, kind: input, shape index: {}]
  %s5 = inlined_call_operand.vmem [shape: f32[32,64], index: 5, kind: input, shape index: {}]
  %s6 = inlined_call_operand.vmem [shape: f32[64,32], index: 6, kind: input, shape index: {}]
  %s7 = inlined_call_operand.vmem [shape: f32[8,128], index: 7, kind: input, shape index: {}]
  %s8 = inlined_call_operand.vmem [shape: f32[256,32], index: 8, kind: input, shape index: {}]
  %s9 = inlined_call_operand.vmem [shape: f32[128,32], index: 9, kind: output, shape index: {}]
  %s10 = sld [smem:[#allocation0]]
  $region46: #{tpu_custom_call.1} parent=0
    _
  %s12 = ssub.s32 1, %s10
  %s13 = scalar_select 0, %s12, %s10
  // Predicated region
  $region2: #{tpu_custom_call.1} parent=0 // pred_check
    _
  $region3: #{tpu_custom_call.1} parent=0 // pred_check_branch
    %15 = sbr.rel (0) target = $region5
  $region4: #{tpu_custom_call.1} parent=0 // pred_region
    _
  $region5: #{tpu_custom_call.1} parent=0 // pred_fallthru
    _
  // Predicated region
  $region6: #{tpu_custom_call.1} parent=0 // pred_check
    _
  $region7: #{tpu_custom_call.1} parent=0 // pred_check_branch
    %17 = sbr.rel (0) target = $region9
  $region8: #{tpu_custom_call.1} parent=0 // pred_region
    _
  $region9: #{tpu_custom_call.1} parent=0 // pred_fallthru
    _
  // Predicated region
  $region10: #{tpu_custom_call.1} parent=0 // pred_check
    _
  $region11: #{tpu_custom_call.1} parent=0 // pred_check_branch
    %19 = sbr.rel (0) target = $region13
  $region12: #{tpu_custom_call.1} parent=0 // pred_region
    _
  $region13: #{tpu_custom_call.1} parent=0 // pred_fallthru
    _
  // Predicated region
  $region14: #{tpu_custom_call.1} parent=0 // pred_check
    _
  $region15: #{tpu_custom_call.1} parent=0 // pred_check_branch
    %21 = sbr.rel (0) target = $region17
  $region16: #{tpu_custom_call.1} parent=0 // pred_region
    _
  $region17: #{tpu_custom_call.1} parent=0 // pred_fallthru
    _
  // Predicated region
  $region18: #{tpu_custom_call.1} parent=0 // pred_check
    _
  $region19: #{tpu_custom_call.1} parent=0 // pred_check_branch
    %23 = sbr.rel (0) target = $region21
  $region20: #{tpu_custom_call.1} parent=0 // pred_region
    _
  $region21: #{tpu_custom_call.1} parent=0 // pred_fallthru
    _
  // Predicated region
  $region22: #{tpu_custom_call.1} parent=0 // pred_check
    _
  $region23: #{tpu_custom_call.1} parent=0 // pred_check_branch
    %25 = sbr.rel (0) target = $region25
  $region24: #{tpu_custom_call.1} parent=0 // pred_region
    _
  $region25: #{tpu_custom_call.1} parent=0 // pred_fallthru
    _
  // Predicated region
  $region26: #{tpu_custom_call.1} parent=0 // pred_check
    _
  $region27: #{tpu_custom_call.1} parent=0 // pred_check_branch
    %27 = sbr.rel (0) target = $region29
  $region28: #{tpu_custom_call.1} parent=0 // pred_region
    _
  $region29: #{tpu_custom_call.1} parent=0 // pred_fallthru
    _
  // Predicated region
  $region30: #{tpu_custom_call.1} parent=0 // pred_check
    _
  $region31: #{tpu_custom_call.1} parent=0 // pred_check_branch
    %29 = sbr.rel (0) target = $region33
  $region32: #{tpu_custom_call.1} parent=0 // pred_region
    _
  $region33: #{tpu_custom_call.1} parent=0 // pred_fallthru
    _
  // Predicated region
  $region34: #{tpu_custom_call.1} parent=0 // pred_check
    _
  $region35: #{tpu_custom_call.1} parent=0 // pred_check_branch
    %31 = sbr.rel (0) target = $region37
  $region36: #{tpu_custom_call.1} parent=0 // pred_region
    _
  $region37: #{tpu_custom_call.1} parent=0 // pred_fallthru
    _
  %v32 = vld [vmem:[%s0] sm:$0xff]
  %v33 = vld [vmem:[%s0 + $0x8] sm:$0xff]
  %v34 = vld [vmem:[%s0 + $0x10] sm:$0xff]
  %v35 = vld [vmem:[%s0 + $0x18] sm:$0xff]
  %v36 = vld [vmem:[%s0 + $0x20] sm:$0xff]
  %v37 = vld [vmem:[%s0 + $0x28] sm:$0xff]
  %v38 = vld [vmem:[%s0 + $0x30] sm:$0xff]
  %v39 = vld [vmem:[%s0 + $0x38] sm:$0xff]
  %v40 = vld [vmem:[%s0 + $0x40] sm:$0xff]
  %v41 = vld [vmem:[%s0 + $0x48] sm:$0xff]
  %v42 = vld [vmem:[%s0 + $0x50] sm:$0xff]
  %v43 = vld [vmem:[%s0 + $0x58] sm:$0xff]
  %v44 = vld [vmem:[%s0 + $0x60] sm:$0xff]
  %v45 = vld [vmem:[%s0 + $0x68] sm:$0xff]
  %v46 = vld [vmem:[%s0 + $0x70] sm:$0xff]
  %v47 = vld [vmem:[%s0 + $0x78] sm:$0xff]
  %v48 = vld [vmem:[%s7] sm:$0xff]
  %v49 = vld [vmem:[%s8] sm:$0xff]
  %v50 = vld [vmem:[%s8 + $0x8] sm:$0xff]
  %v51 = vld [vmem:[%s8 + $0x10] sm:$0xff]
  %v52 = vld [vmem:[%s8 + $0x18] sm:$0xff]
  %v53 = vld [vmem:[%s8 + $0x20] sm:$0xff]
  %v54 = vld [vmem:[%s8 + $0x28] sm:$0xff]
  %v55 = vld [vmem:[%s8 + $0x30] sm:$0xff]
  %v56 = vld [vmem:[%s8 + $0x38] sm:$0xff]
  %v57 = vld [vmem:[%s8 + $0x40] sm:$0xff]
  %v58 = vld [vmem:[%s8 + $0x48] sm:$0xff]
  %v59 = vld [vmem:[%s8 + $0x50] sm:$0xff]
  %v60 = vld [vmem:[%s8 + $0x58] sm:$0xff]
  %v61 = vld [vmem:[%s8 + $0x60] sm:$0xff]
  %v62 = vld [vmem:[%s8 + $0x68] sm:$0xff]
  %v63 = vld [vmem:[%s8 + $0x70] sm:$0xff]
  %v64 = vld [vmem:[%s8 + $0x78] sm:$0xff]
  %v65 = vld [vmem:[%s8 + $0x80] sm:$0xff]
  %v66 = vld [vmem:[%s8 + $0x88] sm:$0xff]
  %v67 = vld [vmem:[%s8 + $0x90] sm:$0xff]
  %v68 = vld [vmem:[%s8 + $0x98] sm:$0xff]
  %v69 = vld [vmem:[%s8 + $0xa0] sm:$0xff]
  %v70 = vld [vmem:[%s8 + $0xa8] sm:$0xff]
  %v71 = vld [vmem:[%s8 + $0xb0] sm:$0xff]
  %v72 = vld [vmem:[%s8 + $0xb8] sm:$0xff]
  %v73 = vld [vmem:[%s8 + $0xc0] sm:$0xff]
  %v74 = vld [vmem:[%s8 + $0xc8] sm:$0xff]
  %v75 = vld [vmem:[%s8 + $0xd0] sm:$0xff]
  %v76 = vld [vmem:[%s8 + $0xd8] sm:$0xff]
  %v77 = vld [vmem:[%s8 + $0xe0] sm:$0xff]
  %v78 = vld [vmem:[%s8 + $0xe8] sm:$0xff]
  %v79 = vld [vmem:[%s8 + $0xf0] sm:$0xff]
  %v80 = vld [vmem:[%s8 + $0xf8] sm:$0xff]
  %v81 = vld [vmem:[%s1] sm:$0x3]
  %v82 = vld [vmem:[%s3] sm:$0xff]
  %v83 = vld [vmem:[%s3 + $0x8] sm:$0xff]
  %v84 = vld [vmem:[%s3 + $0x10] sm:$0xff]
  %v85 = vld [vmem:[%s3 + $0x18] sm:$0xff]
  %v86 = vperm.slane %v48, 0
  %vm87 = vcmask 261120
  %v89 = vsel %vm87, %v32, 0
  %v92 = vsel %vm87, %v33, 0
  %v95 = vsel %vm87, %v34, 0
  %v98 = vsel %vm87, %v35, 0
  %v101 = vsel %vm87, %v36, 0
  %v104 = vsel %vm87, %v37, 0
  %v107 = vsel %vm87, %v38, 0
  %v110 = vsel %vm87, %v39, 0
  %v113 = vsel %vm87, %v40, 0
  %v116 = vsel %vm87, %v41, 0
  %v119 = vsel %vm87, %v42, 0
  %v122 = vsel %vm87, %v43, 0
  %v125 = vsel %vm87, %v44, 0
  %v128 = vsel %vm87, %v45, 0
  %v131 = vsel %vm87, %v46, 0
  %v134 = vsel %vm87, %v47, 0
  %136 = vmatpush.msra.mxu0 0.0
  %137 = vmatpush.msra.mxu0 0.0
  %138 = vmatpush.msra.mxu0 0.0
  %139 = vmatpush.msra.mxu0 0.0
  %140 = vmatpush.msra.mxu0 0.0
  %141 = vmatpush.msra.mxu0 0.0
  %142 = vmatpush.msra.mxu0 0.0
  %143 = vmatpush.msra.mxu0 0.0
  %144 = vmatpush.msra.mxu0 0.0
  %145 = vmatpush.msra.mxu0 0.0
  %146 = vmatpush.msra.mxu0 0.0
  %147 = vmatpush.msra.mxu0 0.0
  %148 = vmatpush.msra.mxu0 %v85
  %149 = vmatpush.msra.mxu0 %v84
  %150 = vmatpush.msra.mxu0 %v83
  %151 = vmatpush.msra.mxu0 %v82
  %152 = vmatmul.f32.gmra.mxu0 %v89
  %v153 = vpop.f32.mrf.mxu0
  %v154 = vadd.f32 %v86, %v153
  %155 = vmatmul.f32.gmra.mxu0 %v92
  %v156 = vpop.f32.mrf.mxu0
  %v157 = vadd.f32 %v86, %v156
  %158 = vmatmul.f32.gmra.mxu0 %v95
  %v159 = vpop.f32.mrf.mxu0
  %v160 = vadd.f32 %v86, %v159
  %161 = vmatmul.f32.gmra.mxu0 %v98
  %v162 = vpop.f32.mrf.mxu0
  %v163 = vadd.f32 %v86, %v162
  %164 = vmatmul.f32.gmra.mxu0 %v101
  %v165 = vpop.f32.mrf.mxu0
  %v166 = vadd.f32 %v86, %v165
  %167 = vmatmul.f32.gmra.mxu0 %v104
  %v168 = vpop.f32.mrf.mxu0
  %v169 = vadd.f32 %v86, %v168
  %170 = vmatmul.f32.gmra.mxu0 %v107
  %v171 = vpop.f32.mrf.mxu0
  %v172 = vadd.f32 %v86, %v171
  %173 = vmatmul.f32.gmra.mxu0 %v110
  %v174 = vpop.f32.mrf.mxu0
  %v175 = vadd.f32 %v86, %v174
  %176 = vmatmul.f32.gmra.mxu0 %v113
  %v177 = vpop.f32.mrf.mxu0
  %v178 = vadd.f32 %v86, %v177
  %179 = vmatmul.f32.gmra.mxu0 %v116
  %v180 = vpop.f32.mrf.mxu0
  %v181 = vadd.f32 %v86, %v180
  %182 = vmatmul.f32.gmra.mxu0 %v119
  %v183 = vpop.f32.mrf.mxu0
  %v184 = vadd.f32 %v86, %v183
  %185 = vmatmul.f32.gmra.mxu0 %v122
  %v186 = vpop.f32.mrf.mxu0
  %v187 = vadd.f32 %v86, %v186
  %188 = vmatmul.f32.gmra.mxu0 %v125
  %v189 = vpop.f32.mrf.mxu0
  %v190 = vadd.f32 %v86, %v189
  %191 = vmatmul.f32.gmra.mxu0 %v128
  %v192 = vpop.f32.mrf.mxu0
  %v193 = vadd.f32 %v86, %v192
  %194 = vmatmul.f32.gmra.mxu0 %v131
  %v195 = vpop.f32.mrf.mxu0
  %v196 = vadd.f32 %v86, %v195
  %197 = vmatmul.f32.gmra.mxu0 %v134
  %v198 = vpop.f32.mrf.mxu0
  %v199 = vadd.f32 %v86, %v198
  %200 = vdwg.mxu0
  %v201 = vmul.f32 %v154, %v49
  %v202 = vmul.f32 %v157, %v50
  %v203 = vmul.f32 %v160, %v51
  %v204 = vmul.f32 %v163, %v52
  %v205 = vmul.f32 %v166, %v53
  %v206 = vmul.f32 %v169, %v54
  %v207 = vmul.f32 %v172, %v55
  %v208 = vmul.f32 %v175, %v56
  %v209 = vmul.f32 %v154, %v57
  %v210 = vmul.f32 %v157, %v58
  %v211 = vmul.f32 %v160, %v59
  %v212 = vmul.f32 %v163, %v60
  %v213 = vmul.f32 %v166, %v61
  %v214 = vmul.f32 %v169, %v62
  %v215 = vmul.f32 %v172, %v63
  %v216 = vmul.f32 %v175, %v64
  %v217 = vmul.f32 %v154, %v65
  %v218 = vmul.f32 %v157, %v66
  %v219 = vmul.f32 %v160, %v67
  %v220 = vmul.f32 %v163, %v68
  %v221 = vmul.f32 %v166, %v69
  %v222 = vmul.f32 %v169, %v70
  %v223 = vmul.f32 %v172, %v71
  %v224 = vmul.f32 %v175, %v72
  %v225 = vmul.f32 %v154, %v73
  %v226 = vmul.f32 %v157, %v74
  %v227 = vmul.f32 %v160, %v75
  %v228 = vmul.f32 %v163, %v76
  %v229 = vmul.f32 %v166, %v77
  %v230 = vmul.f32 %v169, %v78
  %v231 = vmul.f32 %v172, %v79
  %v232 = vmul.f32 %v175, %v80
  %v233 = vperm.slane %v81, 0
  %242 = vrot.lane.b32.xlu0 %v154, 96
  %v243 = vpop.permute.xlu0 %242
  %244 = vrot.lane.b32.xlu0 %v157, 96
  %v245 = vpop.permute.xlu0 %244
  %246 = vrot.lane.b32.xlu0 %v160, 96
  %v247 = vpop.permute.xlu0 %246
  %248 = vrot.lane.b32.xlu0 %v163, 96
  %v249 = vpop.permute.xlu0 %248
  %250 = vrot.lane.b32.xlu0 %v166, 96
  %v251 = vpop.permute.xlu0 %250
  %252 = vrot.lane.b32.xlu0 %v169, 96
  %v253 = vpop.permute.xlu0 %252
  %254 = vrot.lane.b32.xlu0 %v172, 96
  %v255 = vpop.permute.xlu0 %254
  %256 = vrot.lane.b32.xlu0 %v175, 96
  %v257 = vpop.permute.xlu0 %256
  %v259 = vsel %vm87, %v201, 0
  %v262 = vsel %vm87, %v202, 0
  %v265 = vsel %vm87, %v203, 0
  %v268 = vsel %vm87, %v204, 0
  %v271 = vsel %vm87, %v205, 0
  %v274 = vsel %vm87, %v206, 0
  %v277 = vsel %vm87, %v207, 0
  %v280 = vsel %vm87, %v208, 0
  %v283 = vsel %vm87, %v209, 0
  %v286 = vsel %vm87, %v210, 0
  %v289 = vsel %vm87, %v211, 0
  %v292 = vsel %vm87, %v212, 0
  %v295 = vsel %vm87, %v213, 0
  %v298 = vsel %vm87, %v214, 0
  %v301 = vsel %vm87, %v215, 0
  %v304 = vsel %vm87, %v216, 0
  %v307 = vsel %vm87, %v217, 0
  %v310 = vsel %vm87, %v218, 0
  %v313 = vsel %vm87, %v219, 0
  %v316 = vsel %vm87, %v220, 0
  %v319 = vsel %vm87, %v221, 0
  %v322 = vsel %vm87, %v222, 0
  %v325 = vsel %vm87, %v223, 0
  %v328 = vsel %vm87, %v224, 0
  %v331 = vsel %vm87, %v225, 0
  %v334 = vsel %vm87, %v226, 0
  %v337 = vsel %vm87, %v227, 0
  %v340 = vsel %vm87, %v228, 0
  %v343 = vsel %vm87, %v229, 0
  %v346 = vsel %vm87, %v230, 0
  %v349 = vsel %vm87, %v231, 0
  %v352 = vsel %vm87, %v232, 0
  %v354 = vsel %vm87, %v243, 0
  %v356 = vsel %vm87, %v245, 0
  %v358 = vsel %vm87, %v247, 0
  %v360 = vsel %vm87, %v249, 0
  %v362 = vsel %vm87, %v251, 0
  %v364 = vsel %vm87, %v253, 0
  %v366 = vsel %vm87, %v255, 0
  %v368 = vsel %vm87, %v257, 0
  %370 = vmatpush.xpose.msra.mxu0 0.0
  %371 = vmatpush.xpose.msra.mxu0 0.0
  %372 = vmatpush.xpose.msra.mxu0 0.0
  %373 = vmatpush.xpose.msra.mxu0 0.0
  %374 = vmatpush.xpose.msra.mxu0 0.0
  %375 = vmatpush.xpose.msra.mxu0 0.0
  %376 = vmatpush.xpose.msra.mxu0 0.0
  %377 = vmatpush.xpose.msra.mxu0 0.0
  %378 = vmatpush.xpose.msra.mxu0 %v368
  %379 = vmatpush.xpose.msra.mxu0 %v366
  %380 = vmatpush.xpose.msra.mxu0 %v364
  %381 = vmatpush.xpose.msra.mxu0 %v362
  %382 = vmatpush.xpose.msra.mxu0 %v360
  %383 = vmatpush.xpose.msra.mxu0 %v358
  %384 = vmatpush.xpose.msra.mxu0 %v356
  %385 = vmatpush.xpose.msra.mxu0 %v354
  %386 = vmatmul.f32.gmra.mxu0 %v259
  %v387 = vpop.f32.mrf.mxu0
  %v388 = vadd.f32 %v233, %v387
  %389 = vmatmul.f32.gmra.mxu0 %v262
  %v390 = vpop.f32.mrf.mxu0
  %v391 = vadd.f32 %v233, %v390
  %392 = vmatmul.f32.gmra.mxu0 %v265
  %v393 = vpop.f32.mrf.mxu0
  %v394 = vadd.f32 %v233, %v393
  %395 = vmatmul.f32.gmra.mxu0 %v268
  %v396 = vpop.f32.mrf.mxu0
  %v397 = vadd.f32 %v233, %v396
  %398 = vmatmul.f32.gmra.mxu0 %v271
  %v399 = vpop.f32.mrf.mxu0
  %v400 = vadd.f32 %v233, %v399
  %401 = vmatmul.f32.gmra.mxu0 %v274
  %v402 = vpop.f32.mrf.mxu0
  %v403 = vadd.f32 %v233, %v402
  %404 = vmatmul.f32.gmra.mxu0 %v277
  %v405 = vpop.f32.mrf.mxu0
  %v406 = vadd.f32 %v233, %v405
  %407 = vmatmul.f32.gmra.mxu0 %v280
  %v408 = vpop.f32.mrf.mxu0
  %v409 = vadd.f32 %v233, %v408
  %410 = vmatmul.f32.gmra.mxu0 %v283
  %v411 = vpop.f32.mrf.mxu0
  %v412 = vadd.f32 %v233, %v411
  %413 = vmatmul.f32.gmra.mxu0 %v286
  %v414 = vpop.f32.mrf.mxu0
  %v415 = vadd.f32 %v233, %v414
  %416 = vmatmul.f32.gmra.mxu0 %v289
  %v417 = vpop.f32.mrf.mxu0
  %v418 = vadd.f32 %v233, %v417
  %419 = vmatmul.f32.gmra.mxu0 %v292
  %v420 = vpop.f32.mrf.mxu0
  %v421 = vadd.f32 %v233, %v420
  %422 = vmatmul.f32.gmra.mxu0 %v295
  %v423 = vpop.f32.mrf.mxu0
  %v424 = vadd.f32 %v233, %v423
  %425 = vmatmul.f32.gmra.mxu0 %v298
  %v426 = vpop.f32.mrf.mxu0
  %v427 = vadd.f32 %v233, %v426
  %428 = vmatmul.f32.gmra.mxu0 %v301
  %v429 = vpop.f32.mrf.mxu0
  %v430 = vadd.f32 %v233, %v429
  %431 = vmatmul.f32.gmra.mxu0 %v304
  %v432 = vpop.f32.mrf.mxu0
  %v433 = vadd.f32 %v233, %v432
  %434 = vmatmul.f32.gmra.mxu0 %v307
  %v435 = vpop.f32.mrf.mxu0
  %v436 = vadd.f32 %v233, %v435
  %437 = vmatmul.f32.gmra.mxu0 %v310
  %v438 = vpop.f32.mrf.mxu0
  %v439 = vadd.f32 %v233, %v438
  %440 = vmatmul.f32.gmra.mxu0 %v313
  %v441 = vpop.f32.mrf.mxu0
  %v442 = vadd.f32 %v233, %v441
  %443 = vmatmul.f32.gmra.mxu0 %v316
  %v444 = vpop.f32.mrf.mxu0
  %v445 = vadd.f32 %v233, %v444
  %446 = vmatmul.f32.gmra.mxu0 %v319
  %v447 = vpop.f32.mrf.mxu0
  %v448 = vadd.f32 %v233, %v447
  %449 = vmatmul.f32.gmra.mxu0 %v322
  %v450 = vpop.f32.mrf.mxu0
  %v451 = vadd.f32 %v233, %v450
  %452 = vmatmul.f32.gmra.mxu0 %v325
  %v453 = vpop.f32.mrf.mxu0
  %v454 = vadd.f32 %v233, %v453
  %455 = vmatmul.f32.gmra.mxu0 %v328
  %v456 = vpop.f32.mrf.mxu0
  %v457 = vadd.f32 %v233, %v456
  %458 = vmatmul.f32.gmra.mxu0 %v331
  %v459 = vpop.f32.mrf.mxu0
  %v460 = vadd.f32 %v233, %v459
  %461 = vmatmul.f32.gmra.mxu0 %v334
  %v462 = vpop.f32.mrf.mxu0
  %v463 = vadd.f32 %v233, %v462
  %464 = vmatmul.f32.gmra.mxu0 %v337
  %v465 = vpop.f32.mrf.mxu0
  %v466 = vadd.f32 %v233, %v465
  %467 = vmatmul.f32.gmra.mxu0 %v340
  %v468 = vpop.f32.mrf.mxu0
  %v469 = vadd.f32 %v233, %v468
  %470 = vmatmul.f32.gmra.mxu0 %v343
  %v471 = vpop.f32.mrf.mxu0
  %v472 = vadd.f32 %v233, %v471
  %473 = vmatmul.f32.gmra.mxu0 %v346
  %v474 = vpop.f32.mrf.mxu0
  %v475 = vadd.f32 %v233, %v474
  %476 = vmatmul.f32.gmra.mxu0 %v349
  %v477 = vpop.f32.mrf.mxu0
  %v478 = vadd.f32 %v233, %v477
  %479 = vmatmul.f32.gmra.mxu0 %v352
  %v480 = vpop.f32.mrf.mxu0
  %v481 = vadd.f32 %v233, %v480
  %482 = vdwg.mxu0
  %vm483 = vcmask 523264
  %v484 = vsel %vm483, %v388, -inf
  %485 = vmax.xlane.f32.xlu0 %v484
  %v486 = vpop.xlane.xlu0 %485
  %v487 = vsel %vm483, %v391, -inf
  %488 = vmax.xlane.f32.xlu0 %v487
  %v489 = vpop.xlane.xlu0 %488
  %v490 = vsel %vm483, %v394, -inf
  %491 = vmax.xlane.f32.xlu0 %v490
  %v492 = vpop.xlane.xlu0 %491
  %v493 = vsel %vm483, %v397, -inf
  %494 = vmax.xlane.f32.xlu0 %v493
  %v495 = vpop.xlane.xlu0 %494
  %v496 = vsel %vm483, %v400, -inf
  %497 = vmax.xlane.f32.xlu0 %v496
  %v498 = vpop.xlane.xlu0 %497
  %v499 = vsel %vm483, %v403, -inf
  %500 = vmax.xlane.f32.xlu0 %v499
  %v501 = vpop.xlane.xlu0 %500
  %v502 = vsel %vm483, %v406, -inf
  %503 = vmax.xlane.f32.xlu0 %v502
  %v504 = vpop.xlane.xlu0 %503
  %v505 = vsel %vm483, %v409, -inf
  %506 = vmax.xlane.f32.xlu0 %v505
  %v507 = vpop.xlane.xlu0 %506
  %v508 = vsel %vm483, %v412, -inf
  %509 = vmax.xlane.f32.xlu0 %v508
  %v510 = vpop.xlane.xlu0 %509
  %v511 = vsel %vm483, %v415, -inf
  %512 = vmax.xlane.f32.xlu0 %v511
  %v513 = vpop.xlane.xlu0 %512
  %v514 = vsel %vm483, %v418, -inf
  %515 = vmax.xlane.f32.xlu0 %v514
  %v516 = vpop.xlane.xlu0 %515
  %v517 = vsel %vm483, %v421, -inf
  %518 = vmax.xlane.f32.xlu0 %v517
  %v519 = vpop.xlane.xlu0 %518
  %v520 = vsel %vm483, %v424, -inf
  %521 = vmax.xlane.f32.xlu0 %v520
  %v522 = vpop.xlane.xlu0 %521
  %v523 = vsel %vm483, %v427, -inf
  %524 = vmax.xlane.f32.xlu0 %v523
  %v525 = vpop.xlane.xlu0 %524
  %v526 = vsel %vm483, %v430, -inf
  %527 = vmax.xlane.f32.xlu0 %v526
  %v528 = vpop.xlane.xlu0 %527
  %v529 = vsel %vm483, %v433, -inf
  %530 = vmax.xlane.f32.xlu0 %v529
  %v531 = vpop.xlane.xlu0 %530
  %v532 = vsel %vm483, %v436, -inf
  %533 = vmax.xlane.f32.xlu0 %v532
  %v534 = vpop.xlane.xlu0 %533
  %v535 = vsel %vm483, %v439, -inf
  %536 = vmax.xlane.f32.xlu0 %v535
  %v537 = vpop.xlane.xlu0 %536
  %v538 = vsel %vm483, %v442, -inf
  %539 = vmax.xlane.f32.xlu0 %v538
  %v540 = vpop.xlane.xlu0 %539
  %v541 = vsel %vm483, %v445, -inf
  %542 = vmax.xlane.f32.xlu0 %v541
  %v543 = vpop.xlane.xlu0 %542
  %v544 = vsel %vm483, %v448, -inf
  %545 = vmax.xlane.f32.xlu0 %v544
  %v546 = vpop.xlane.xlu0 %545
  %v547 = vsel %vm483, %v451, -inf
  %548 = vmax.xlane.f32.xlu0 %v547
  %v549 = vpop.xlane.xlu0 %548
  %v550 = vsel %vm483, %v454, -inf
  %551 = vmax.xlane.f32.xlu0 %v550
  %v552 = vpop.xlane.xlu0 %551
  %v553 = vsel %vm483, %v457, -inf
  %554 = vmax.xlane.f32.xlu0 %v553
  %v555 = vpop.xlane.xlu0 %554
  %v556 = vsel %vm483, %v460, -inf
  %557 = vmax.xlane.f32.xlu0 %v556
  %v558 = vpop.xlane.xlu0 %557
  %v559 = vsel %vm483, %v463, -inf
  %560 = vmax.xlane.f32.xlu0 %v559
  %v561 = vpop.xlane.xlu0 %560
  %v562 = vsel %vm483, %v466, -inf
  %563 = vmax.xlane.f32.xlu0 %v562
  %v564 = vpop.xlane.xlu0 %563
  %v565 = vsel %vm483, %v469, -inf
  %566 = vmax.xlane.f32.xlu0 %v565
  %v567 = vpop.xlane.xlu0 %566
  %v568 = vsel %vm483, %v472, -inf
  %569 = vmax.xlane.f32.xlu0 %v568
  %v570 = vpop.xlane.xlu0 %569
  %v571 = vsel %vm483, %v475, -inf
  %572 = vmax.xlane.f32.xlu0 %v571
  %v573 = vpop.xlane.xlu0 %572
  %v574 = vsel %vm483, %v478, -inf
  %575 = vmax.xlane.f32.xlu0 %v574
  %v576 = vpop.xlane.xlu0 %575
  %v577 = vsel %vm483, %v481, -inf
  %578 = vmax.xlane.f32.xlu0 %v577
  %v579 = vpop.xlane.xlu0 %578
  %v580 = vsub.f32 %v388, %v486
  %v581 = vsub.f32 %v391, %v489
  %v582 = vsub.f32 %v394, %v492
  %v583 = vsub.f32 %v397, %v495
  %v584 = vsub.f32 %v400, %v498
  %v585 = vsub.f32 %v403, %v501
  %v586 = vsub.f32 %v406, %v504
  %v587 = vsub.f32 %v409, %v507
  %v588 = vsub.f32 %v412, %v510
  %v589 = vsub.f32 %v415, %v513
  %v590 = vsub.f32 %v418, %v516
  %v591 = vsub.f32 %v421, %v519
  %v592 = vsub.f32 %v424, %v522
  %v593 = vsub.f32 %v427, %v525
  %v594 = vsub.f32 %v430, %v528
  %v595 = vsub.f32 %v433, %v531
  %v596 = vsub.f32 %v436, %v534
  %v597 = vsub.f32 %v439, %v537
  %v598 = vsub.f32 %v442, %v540
  %v599 = vsub.f32 %v445, %v543
  %v600 = vsub.f32 %v448, %v546
  %v601 = vsub.f32 %v451, %v549
  %v602 = vsub.f32 %v454, %v552
  %v603 = vsub.f32 %v457, %v555
  %v604 = vsub.f32 %v460, %v558
  %v605 = vsub.f32 %v463, %v561
  %v606 = vsub.f32 %v466, %v564
  %v607 = vsub.f32 %v469, %v567
  %v608 = vsub.f32 %v472, %v570
  %v609 = vsub.f32 %v475, %v573
  %v610 = vsub.f32 %v478, %v576
  %v611 = vsub.f32 %v481, %v579
  %v612 = vmul.f32 %v580, 1.442695
  %v613 = vpow.pop %v612
  %v614 = vmul.f32 %v581, 1.442695
  %v615 = vpow.pop %v614
  %v616 = vmul.f32 %v582, 1.442695
  %v617 = vpow.pop %v616
  %v618 = vmul.f32 %v583, 1.442695
  %v619 = vpow.pop %v618
  %v620 = vmul.f32 %v584, 1.442695
  %v621 = vpow.pop %v620
  %v622 = vmul.f32 %v585, 1.442695
  %v623 = vpow.pop %v622
  %v624 = vmul.f32 %v586, 1.442695
  %v625 = vpow.pop %v624
  %v626 = vmul.f32 %v587, 1.442695
  %v627 = vpow.pop %v626
  %v628 = vmul.f32 %v588, 1.442695
  %v629 = vpow.pop %v628
  %v630 = vmul.f32 %v589, 1.442695
  %v631 = vpow.pop %v630
  %v632 = vmul.f32 %v590, 1.442695
  %v633 = vpow.pop %v632
  %v634 = vmul.f32 %v591, 1.442695
  %v635 = vpow.pop %v634
  %v636 = vmul.f32 %v592, 1.442695
  %v637 = vpow.pop %v636
  %v638 = vmul.f32 %v593, 1.442695
  %v639 = vpow.pop %v638
  %v640 = vmul.f32 %v594, 1.442695
  %v641 = vpow.pop %v640
  %v642 = vmul.f32 %v595, 1.442695
  %v643 = vpow.pop %v642
  %v644 = vmul.f32 %v596, 1.442695
  %v645 = vpow.pop %v644
  %v646 = vmul.f32 %v597, 1.442695
  %v647 = vpow.pop %v646
  %v648 = vmul.f32 %v598, 1.442695
  %v649 = vpow.pop %v648
  %v650 = vmul.f32 %v599, 1.442695
  %v651 = vpow.pop %v650
  %v652 = vmul.f32 %v600, 1.442695
  %v653 = vpow.pop %v652
  %v654 = vmul.f32 %v601, 1.442695
  %v655 = vpow.pop %v654
  %v656 = vmul.f32 %v602, 1.442695
  %v657 = vpow.pop %v656
  %v658 = vmul.f32 %v603, 1.442695
  %v659 = vpow.pop %v658
  %v660 = vmul.f32 %v604, 1.442695
  %v661 = vpow.pop %v660
  %v662 = vmul.f32 %v605, 1.442695
  %v663 = vpow.pop %v662
  %v664 = vmul.f32 %v606, 1.442695
  %v665 = vpow.pop %v664
  %v666 = vmul.f32 %v607, 1.442695
  %v667 = vpow.pop %v666
  %v668 = vmul.f32 %v608, 1.442695
  %v669 = vpow.pop %v668
  %v670 = vmul.f32 %v609, 1.442695
  %v671 = vpow.pop %v670
  %v672 = vmul.f32 %v610, 1.442695
  %v673 = vpow.pop %v672
  %v674 = vmul.f32 %v611, 1.442695
  %v675 = vpow.pop %v674
  %v676 = vsel %vm483, %v613, 0.0
  %677 = vadd.xlane.f32.xlu0 %v676
  %v678 = vpop.xlane.xlu0 %677
  %v679 = vsel %vm483, %v615, 0.0
  %680 = vadd.xlane.f32.xlu0 %v679
  %v681 = vpop.xlane.xlu0 %680
  %v682 = vsel %vm483, %v617, 0.0
  %683 = vadd.xlane.f32.xlu0 %v682
  %v684 = vpop.xlane.xlu0 %683
  %v685 = vsel %vm483, %v619, 0.0
  %686 = vadd.xlane.f32.xlu0 %v685
  %v687 = vpop.xlane.xlu0 %686
  %v688 = vsel %vm483, %v621, 0.0
  %689 = vadd.xlane.f32.xlu0 %v688
  %v690 = vpop.xlane.xlu0 %689
  %v691 = vsel %vm483, %v623, 0.0
  %692 = vadd.xlane.f32.xlu0 %v691
  %v693 = vpop.xlane.xlu0 %692
  %v694 = vsel %vm483, %v625, 0.0
  %695 = vadd.xlane.f32.xlu0 %v694
  %v696 = vpop.xlane.xlu0 %695
  %v697 = vsel %vm483, %v627, 0.0
  %698 = vadd.xlane.f32.xlu0 %v697
  %v699 = vpop.xlane.xlu0 %698
  %v700 = vsel %vm483, %v629, 0.0
  %701 = vadd.xlane.f32.xlu0 %v700
  %v702 = vpop.xlane.xlu0 %701
  %v703 = vsel %vm483, %v631, 0.0
  %704 = vadd.xlane.f32.xlu0 %v703
  %v705 = vpop.xlane.xlu0 %704
  %v706 = vsel %vm483, %v633, 0.0
  %707 = vadd.xlane.f32.xlu0 %v706
  %v708 = vpop.xlane.xlu0 %707
  %v709 = vsel %vm483, %v635, 0.0
  %710 = vadd.xlane.f32.xlu0 %v709
  %v711 = vpop.xlane.xlu0 %710
  %v712 = vsel %vm483, %v637, 0.0
  %713 = vadd.xlane.f32.xlu0 %v712
  %v714 = vpop.xlane.xlu0 %713
  %v715 = vsel %vm483, %v639, 0.0
  %716 = vadd.xlane.f32.xlu0 %v715
  %v717 = vpop.xlane.xlu0 %716
  %v718 = vsel %vm483, %v641, 0.0
  %719 = vadd.xlane.f32.xlu0 %v718
  %v720 = vpop.xlane.xlu0 %719
  %v721 = vsel %vm483, %v643, 0.0
  %722 = vadd.xlane.f32.xlu0 %v721
  %v723 = vpop.xlane.xlu0 %722
  %v724 = vsel %vm483, %v645, 0.0
  %725 = vadd.xlane.f32.xlu0 %v724
  %v726 = vpop.xlane.xlu0 %725
  %v727 = vsel %vm483, %v647, 0.0
  %728 = vadd.xlane.f32.xlu0 %v727
  %v729 = vpop.xlane.xlu0 %728
  %v730 = vsel %vm483, %v649, 0.0
  %731 = vadd.xlane.f32.xlu0 %v730
  %v732 = vpop.xlane.xlu0 %731
  %v733 = vsel %vm483, %v651, 0.0
  %734 = vadd.xlane.f32.xlu0 %v733
  %v735 = vpop.xlane.xlu0 %734
  %v736 = vsel %vm483, %v653, 0.0
  %737 = vadd.xlane.f32.xlu0 %v736
  %v738 = vpop.xlane.xlu0 %737
  %v739 = vsel %vm483, %v655, 0.0
  %740 = vadd.xlane.f32.xlu0 %v739
  %v741 = vpop.xlane.xlu0 %740
  %v742 = vsel %vm483, %v657, 0.0
  %743 = vadd.xlane.f32.xlu0 %v742
  %v744 = vpop.xlane.xlu0 %743
  %v745 = vsel %vm483, %v659, 0.0
  %746 = vadd.xlane.f32.xlu0 %v745
  %v747 = vpop.xlane.xlu0 %746
  %v748 = vsel %vm483, %v661, 0.0
  %749 = vadd.xlane.f32.xlu0 %v748
  %v750 = vpop.xlane.xlu0 %749
  %v751 = vsel %vm483, %v663, 0.0
  %752 = vadd.xlane.f32.xlu0 %v751
  %v753 = vpop.xlane.xlu0 %752
  %v754 = vsel %vm483, %v665, 0.0
  %755 = vadd.xlane.f32.xlu0 %v754
  %v756 = vpop.xlane.xlu0 %755
  %v757 = vsel %vm483, %v667, 0.0
  %758 = vadd.xlane.f32.xlu0 %v757
  %v759 = vpop.xlane.xlu0 %758
  %v760 = vsel %vm483, %v669, 0.0
  %761 = vadd.xlane.f32.xlu0 %v760
  %v762 = vpop.xlane.xlu0 %761
  %v763 = vsel %vm483, %v671, 0.0
  %764 = vadd.xlane.f32.xlu0 %v763
  %v765 = vpop.xlane.xlu0 %764
  %v766 = vsel %vm483, %v673, 0.0
  %767 = vadd.xlane.f32.xlu0 %v766
  %v768 = vpop.xlane.xlu0 %767
  %v769 = vsel %vm483, %v675, 0.0
  %770 = vadd.xlane.f32.xlu0 %v769
  %v771 = vpop.xlane.xlu0 %770
  %772 = vrot.lane.b32.xlu0 %v154, 64
  %v773 = vpop.permute.xlu0 %772
  %774 = vrot.lane.b32.xlu0 %v157, 64
  %v775 = vpop.permute.xlu0 %774
  %776 = vrot.lane.b32.xlu0 %v160, 64
  %v777 = vpop.permute.xlu0 %776
  %778 = vrot.lane.b32.xlu0 %v163, 64
  %v779 = vpop.permute.xlu0 %778
  %780 = vrot.lane.b32.xlu0 %v166, 64
  %v781 = vpop.permute.xlu0 %780
  %782 = vrot.lane.b32.xlu0 %v169, 64
  %v783 = vpop.permute.xlu0 %782
  %784 = vrot.lane.b32.xlu0 %v172, 64
  %v785 = vpop.permute.xlu0 %784
  %786 = vrot.lane.b32.xlu0 %v175, 64
  %v787 = vpop.permute.xlu0 %786
  %v797 = vsel %vm483, %v613, 0
  %v800 = vsel %vm483, %v615, 0
  %v803 = vsel %vm483, %v617, 0
  %v806 = vsel %vm483, %v619, 0
  %v809 = vsel %vm483, %v621, 0
  %v812 = vsel %vm483, %v623, 0
  %v815 = vsel %vm483, %v625, 0
  %v818 = vsel %vm483, %v627, 0
  %v821 = vsel %vm483, %v629, 0
  %v824 = vsel %vm483, %v631, 0
  %v827 = vsel %vm483, %v633, 0
  %v830 = vsel %vm483, %v635, 0
  %v833 = vsel %vm483, %v637, 0
  %v836 = vsel %vm483, %v639, 0
  %v839 = vsel %vm483, %v641, 0
  %v842 = vsel %vm483, %v643, 0
  %v845 = vsel %vm483, %v645, 0
  %v848 = vsel %vm483, %v647, 0
  %v851 = vsel %vm483, %v649, 0
  %v854 = vsel %vm483, %v651, 0
  %v857 = vsel %vm483, %v653, 0
  %v860 = vsel %vm483, %v655, 0
  %v863 = vsel %vm483, %v657, 0
  %v866 = vsel %vm483, %v659, 0
  %v869 = vsel %vm483, %v661, 0
  %v872 = vsel %vm483, %v663, 0
  %v875 = vsel %vm483, %v665, 0
  %v878 = vsel %vm483, %v667, 0
  %v881 = vsel %vm483, %v669, 0
  %v884 = vsel %vm483, %v671, 0
  %v887 = vsel %vm483, %v673, 0
  %v890 = vsel %vm483, %v675, 0
  %892 = vmatpush.msra.mxu0 0.0
  %893 = vmatpush.msra.mxu0 0.0
  %894 = vmatpush.msra.mxu0 0.0
  %895 = vmatpush.msra.mxu0 0.0
  %896 = vmatpush.msra.mxu0 0.0
  %897 = vmatpush.msra.mxu0 0.0
  %898 = vmatpush.msra.mxu0 0.0
  %899 = vmatpush.msra.mxu0 0.0
  %900 = vmatpush.msra.mxu0 %v787
  %901 = vmatpush.msra.mxu0 %v785
  %902 = vmatpush.msra.mxu0 %v783
  %903 = vmatpush.msra.mxu0 %v781
  %904 = vmatpush.msra.mxu0 %v779
  %905 = vmatpush.msra.mxu0 %v777
  %906 = vmatpush.msra.mxu0 %v775
  %907 = vmatpush.msra.mxu0 %v773
  %908 = vmatmul.f32.gmra.mxu0 %v797
  %v909 = vpop.f32.mrf.mxu0
  %v910 = vadd.f32 0.0, %v909
  %911 = vmatmul.f32.gmra.mxu0 %v800
  %v912 = vpop.f32.mrf.mxu0
  %v913 = vadd.f32 0.0, %v912
  %914 = vmatmul.f32.gmra.mxu0 %v803
  %v915 = vpop.f32.mrf.mxu0
  %v916 = vadd.f32 0.0, %v915
  %917 = vmatmul.f32.gmra.mxu0 %v806
  %v918 = vpop.f32.mrf.mxu0
  %v919 = vadd.f32 0.0, %v918
  %920 = vmatmul.f32.gmra.mxu0 %v809
  %v921 = vpop.f32.mrf.mxu0
  %v922 = vadd.f32 0.0, %v921
  %923 = vmatmul.f32.gmra.mxu0 %v812
  %v924 = vpop.f32.mrf.mxu0
  %v925 = vadd.f32 0.0, %v924
  %926 = vmatmul.f32.gmra.mxu0 %v815
  %v927 = vpop.f32.mrf.mxu0
  %v928 = vadd.f32 0.0, %v927
  %929 = vmatmul.f32.gmra.mxu0 %v818
  %v930 = vpop.f32.mrf.mxu0
  %v931 = vadd.f32 0.0, %v930
  %932 = vmatmul.f32.gmra.mxu0 %v821
  %v933 = vpop.f32.mrf.mxu0
  %v934 = vadd.f32 0.0, %v933
  %935 = vmatmul.f32.gmra.mxu0 %v824
  %v936 = vpop.f32.mrf.mxu0
  %v937 = vadd.f32 0.0, %v936
  %938 = vmatmul.f32.gmra.mxu0 %v827
  %v939 = vpop.f32.mrf.mxu0
  %v940 = vadd.f32 0.0, %v939
  %941 = vmatmul.f32.gmra.mxu0 %v830
  %v942 = vpop.f32.mrf.mxu0
  %v943 = vadd.f32 0.0, %v942
  %944 = vmatmul.f32.gmra.mxu0 %v833
  %v945 = vpop.f32.mrf.mxu0
  %v946 = vadd.f32 0.0, %v945
  %947 = vmatmul.f32.gmra.mxu0 %v836
  %v948 = vpop.f32.mrf.mxu0
  %v949 = vadd.f32 0.0, %v948
  %950 = vmatmul.f32.gmra.mxu0 %v839
  %v951 = vpop.f32.mrf.mxu0
  %v952 = vadd.f32 0.0, %v951
  %953 = vmatmul.f32.gmra.mxu0 %v842
  %v954 = vpop.f32.mrf.mxu0
  %v955 = vadd.f32 0.0, %v954
  %956 = vmatmul.f32.gmra.mxu0 %v845
  %v957 = vpop.f32.mrf.mxu0
  %v958 = vadd.f32 0.0, %v957
  %959 = vmatmul.f32.gmra.mxu0 %v848
  %v960 = vpop.f32.mrf.mxu0
  %v961 = vadd.f32 0.0, %v960
  %962 = vmatmul.f32.gmra.mxu0 %v851
  %v963 = vpop.f32.mrf.mxu0
  %v964 = vadd.f32 0.0, %v963
  %965 = vmatmul.f32.gmra.mxu0 %v854
  %v966 = vpop.f32.mrf.mxu0
  %v967 = vadd.f32 0.0, %v966
  %968 = vmatmul.f32.gmra.mxu0 %v857
  %v969 = vpop.f32.mrf.mxu0
  %v970 = vadd.f32 0.0, %v969
  %971 = vmatmul.f32.gmra.mxu0 %v860
  %v972 = vpop.f32.mrf.mxu0
  %v973 = vadd.f32 0.0, %v972
  %974 = vmatmul.f32.gmra.mxu0 %v863
  %v975 = vpop.f32.mrf.mxu0
  %v976 = vadd.f32 0.0, %v975
  %977 = vmatmul.f32.gmra.mxu0 %v866
  %v978 = vpop.f32.mrf.mxu0
  %v979 = vadd.f32 0.0, %v978
  %980 = vmatmul.f32.gmra.mxu0 %v869
  %v981 = vpop.f32.mrf.mxu0
  %v982 = vadd.f32 0.0, %v981
  %983 = vmatmul.f32.gmra.mxu0 %v872
  %v984 = vpop.f32.mrf.mxu0
  %v985 = vadd.f32 0.0, %v984
  %986 = vmatmul.f32.gmra.mxu0 %v875
  %v987 = vpop.f32.mrf.mxu0
  %v988 = vadd.f32 0.0, %v987
  %989 = vmatmul.f32.gmra.mxu0 %v878
  %v990 = vpop.f32.mrf.mxu0
  %v991 = vadd.f32 0.0, %v990
  %992 = vmatmul.f32.gmra.mxu0 %v881
  %v993 = vpop.f32.mrf.mxu0
  %v994 = vadd.f32 0.0, %v993
  %995 = vmatmul.f32.gmra.mxu0 %v884
  %v996 = vpop.f32.mrf.mxu0
  %v997 = vadd.f32 0.0, %v996
  %998 = vmatmul.f32.gmra.mxu0 %v887
  %v999 = vpop.f32.mrf.mxu0
  %v1000 = vadd.f32 0.0, %v999
  %1001 = vmatmul.f32.gmra.mxu0 %v890
  %v1002 = vpop.f32.mrf.mxu0
  %v1003 = vadd.f32 0.0, %v1002
  %1004 = vdwg.mxu0
  %v1005 = vmul.f32 %v910, %v49
  %v1006 = vmul.f32 %v913, %v50
  %v1007 = vmul.f32 %v916, %v51
  %v1008 = vmul.f32 %v919, %v52
  %v1009 = vmul.f32 %v922, %v53
  %v1010 = vmul.f32 %v925, %v54
  %v1011 = vmul.f32 %v928, %v55
  %v1012 = vmul.f32 %v931, %v56
  %v1013 = vmul.f32 %v934, %v57
  %v1014 = vmul.f32 %v937, %v58
  %v1015 = vmul.f32 %v940, %v59
  %v1016 = vmul.f32 %v943, %v60
  %v1017 = vmul.f32 %v946, %v61
  %v1018 = vmul.f32 %v949, %v62
  %v1019 = vmul.f32 %v952, %v63
  %v1020 = vmul.f32 %v955, %v64
  %v1021 = vmul.f32 %v958, %v65
  %v1022 = vmul.f32 %v961, %v66
  %v1023 = vmul.f32 %v964, %v67
  %v1024 = vmul.f32 %v967, %v68
  %v1025 = vmul.f32 %v970, %v69
  %v1026 = vmul.f32 %v973, %v70
  %v1027 = vmul.f32 %v976, %v71
  %v1028 = vmul.f32 %v979, %v72
  %v1029 = vmul.f32 %v982, %v73
  %v1030 = vmul.f32 %v985, %v74
  %v1031 = vmul.f32 %v988, %v75
  %v1032 = vmul.f32 %v991, %v76
  %v1033 = vmul.f32 %v994, %v77
  %v1034 = vmul.f32 %v997, %v78
  %v1035 = vmul.f32 %v1000, %v79
  %v1036 = vmul.f32 %v1003, %v80
  %v1037 = vrcp.pop %v678
  %v1038 = vrcp.pop %v681
  %v1039 = vrcp.pop %v684
  %v1040 = vrcp.pop %v687
  %v1041 = vrcp.pop %v690
  %v1042 = vrcp.pop %v693
  %v1043 = vrcp.pop %v696
  %v1044 = vrcp.pop %v699
  %v1045 = vrcp.pop %v702
  %v1046 = vrcp.pop %v705
  %v1047 = vrcp.pop %v708
  %v1048 = vrcp.pop %v711
  %v1049 = vrcp.pop %v714
  %v1050 = vrcp.pop %v717
  %v1051 = vrcp.pop %v720
  %v1052 = vrcp.pop %v723
  %v1053 = vrcp.pop %v726
  %v1054 = vrcp.pop %v729
  %v1055 = vrcp.pop %v732
  %v1056 = vrcp.pop %v735
  %v1057 = vrcp.pop %v738
  %v1058 = vrcp.pop %v741
  %v1059 = vrcp.pop %v744
  %v1060 = vrcp.pop %v747
  %v1061 = vrcp.pop %v750
  %v1062 = vrcp.pop %v753
  %v1063 = vrcp.pop %v756
  %v1064 = vrcp.pop %v759
  %v1065 = vrcp.pop %v762
  %v1066 = vrcp.pop %v765
  %v1067 = vrcp.pop %v768
  %v1068 = vrcp.pop %v771
  %v1069 = vmul.f32 %v1005, %v1037
  %v1070 = vmul.f32 %v1006, %v1038
  %v1071 = vmul.f32 %v1007, %v1039
  %v1072 = vmul.f32 %v1008, %v1040
  %v1073 = vmul.f32 %v1009, %v1041
  %v1074 = vmul.f32 %v1010, %v1042
  %v1075 = vmul.f32 %v1011, %v1043
  %v1076 = vmul.f32 %v1012, %v1044
  %v1077 = vmul.f32 %v1013, %v1045
  %v1078 = vmul.f32 %v1014, %v1046
  %v1079 = vmul.f32 %v1015, %v1047
  %v1080 = vmul.f32 %v1016, %v1048
  %v1081 = vmul.f32 %v1017, %v1049
  %v1082 = vmul.f32 %v1018, %v1050
  %v1083 = vmul.f32 %v1019, %v1051
  %v1084 = vmul.f32 %v1020, %v1052
  %v1085 = vmul.f32 %v1021, %v1053
  %v1086 = vmul.f32 %v1022, %v1054
  %v1087 = vmul.f32 %v1023, %v1055
  %v1088 = vmul.f32 %v1024, %v1056
  %v1089 = vmul.f32 %v1025, %v1057
  %v1090 = vmul.f32 %v1026, %v1058
  %v1091 = vmul.f32 %v1027, %v1059
  %v1092 = vmul.f32 %v1028, %v1060
  %v1093 = vmul.f32 %v1029, %v1061
  %v1094 = vmul.f32 %v1030, %v1062
  %v1095 = vmul.f32 %v1031, %v1063
  %v1096 = vmul.f32 %v1032, %v1064
  %v1097 = vmul.f32 %v1033, %v1065
  %v1098 = vmul.f32 %v1034, %v1066
  %v1099 = vmul.f32 %v1035, %v1067
  %v1100 = vmul.f32 %v1036, %v1068
  %v1101 = vadd.f32 %v1069, %v1077
  %v1102 = vadd.f32 %v1070, %v1078
  %v1103 = vadd.f32 %v1071, %v1079
  %v1104 = vadd.f32 %v1072, %v1080
  %v1105 = vadd.f32 %v1073, %v1081
  %v1106 = vadd.f32 %v1074, %v1082
  %v1107 = vadd.f32 %v1075, %v1083
  %v1108 = vadd.f32 %v1076, %v1084
  %v1109 = vadd.f32 %v1101, %v1085
  %v1110 = vadd.f32 %v1102, %v1086
  %v1111 = vadd.f32 %v1103, %v1087
  %v1112 = vadd.f32 %v1104, %v1088
  %v1113 = vadd.f32 %v1105, %v1089
  %v1114 = vadd.f32 %v1106, %v1090
  %v1115 = vadd.f32 %v1107, %v1091
  %v1116 = vadd.f32 %v1108, %v1092
  %v1117 = vadd.f32 %v1109, %v1093
  %v1118 = vadd.f32 %v1110, %v1094
  %v1119 = vadd.f32 %v1111, %v1095
  %v1120 = vadd.f32 %v1112, %v1096
  %v1121 = vadd.f32 %v1113, %v1097
  %v1122 = vadd.f32 %v1114, %v1098
  %v1123 = vadd.f32 %v1115, %v1099
  %v1124 = vadd.f32 %v1116, %v1100
  %v1125 = vmul.f32 %v178, %v49
  %v1126 = vmul.f32 %v181, %v50
  %v1127 = vmul.f32 %v184, %v51
  %v1128 = vmul.f32 %v187, %v52
  %v1129 = vmul.f32 %v190, %v53
  %v1130 = vmul.f32 %v193, %v54
  %v1131 = vmul.f32 %v196, %v55
  %v1132 = vmul.f32 %v199, %v56
  %v1133 = vmul.f32 %v178, %v57
  %v1134 = vmul.f32 %v181, %v58
  %v1135 = vmul.f32 %v184, %v59
  %v1136 = vmul.f32 %v187, %v60
  %v1137 = vmul.f32 %v190, %v61
  %v1138 = vmul.f32 %v193, %v62
  %v1139 = vmul.f32 %v196, %v63
  %v1140 = vmul.f32 %v199, %v64
  %v1141 = vmul.f32 %v178, %v65
  %v1142 = vmul.f32 %v181, %v66
  %v1143 = vmul.f32 %v184, %v67
  %v1144 = vmul.f32 %v187, %v68
  %v1145 = vmul.f32 %v190, %v69
  %v1146 = vmul.f32 %v193, %v70
  %v1147 = vmul.f32 %v196, %v71
  %v1148 = vmul.f32 %v199, %v72
  %v1149 = vmul.f32 %v178, %v73
  %v1150 = vmul.f32 %v181, %v74
  %v1151 = vmul.f32 %v184, %v75
  %v1152 = vmul.f32 %v187, %v76
  %v1153 = vmul.f32 %v190, %v77
  %v1154 = vmul.f32 %v193, %v78
  %v1155 = vmul.f32 %v196, %v79
  %v1156 = vmul.f32 %v199, %v80
  %v1157 = vperm.slane %v81, 1
  %1166 = vrot.lane.b32.xlu0 %v178, 96
  %v1167 = vpop.permute.xlu0 %1166
  %1168 = vrot.lane.b32.xlu0 %v181, 96
  %v1169 = vpop.permute.xlu0 %1168
  %1170 = vrot.lane.b32.xlu0 %v184, 96
  %v1171 = vpop.permute.xlu0 %1170
  %1172 = vrot.lane.b32.xlu0 %v187, 96
  %v1173 = vpop.permute.xlu0 %1172
  %1174 = vrot.lane.b32.xlu0 %v190, 96
  %v1175 = vpop.permute.xlu0 %1174
  %1176 = vrot.lane.b32.xlu0 %v193, 96
  %v1177 = vpop.permute.xlu0 %1176
  %1178 = vrot.lane.b32.xlu0 %v196, 96
  %v1179 = vpop.permute.xlu0 %1178
  %1180 = vrot.lane.b32.xlu0 %v199, 96
  %v1181 = vpop.permute.xlu0 %1180
  %v1183 = vsel %vm87, %v1125, 0
  %v1186 = vsel %vm87, %v1126, 0
  %v1189 = vsel %vm87, %v1127, 0
  %v1192 = vsel %vm87, %v1128, 0
  %v1195 = vsel %vm87, %v1129, 0
  %v1198 = vsel %vm87, %v1130, 0
  %v1201 = vsel %vm87, %v1131, 0
  %v1204 = vsel %vm87, %v1132, 0
  %v1207 = vsel %vm87, %v1133, 0
  %v1210 = vsel %vm87, %v1134, 0
  %v1213 = vsel %vm87, %v1135, 0
  %v1216 = vsel %vm87, %v1136, 0
  %v1219 = vsel %vm87, %v1137, 0
  %v1222 = vsel %vm87, %v1138, 0
  %v1225 = vsel %vm87, %v1139, 0
  %v1228 = vsel %vm87, %v1140, 0
  %v1231 = vsel %vm87, %v1141, 0
  %v1234 = vsel %vm87, %v1142, 0
  %v1237 = vsel %vm87, %v1143, 0
  %v1240 = vsel %vm87, %v1144, 0
  %v1243 = vsel %vm87, %v1145, 0
  %v1246 = vsel %vm87, %v1146, 0
  %v1249 = vsel %vm87, %v1147, 0
  %v1252 = vsel %vm87, %v1148, 0
  %v1255 = vsel %vm87, %v1149, 0
  %v1258 = vsel %vm87, %v1150, 0
  %v1261 = vsel %vm87, %v1151, 0
  %v1264 = vsel %vm87, %v1152, 0
  %v1267 = vsel %vm87, %v1153, 0
  %v1270 = vsel %vm87, %v1154, 0
  %v1273 = vsel %vm87, %v1155, 0
  %v1276 = vsel %vm87, %v1156, 0
  %v1278 = vsel %vm87, %v1167, 0
  %v1280 = vsel %vm87, %v1169, 0
  %v1282 = vsel %vm87, %v1171, 0
  %v1284 = vsel %vm87, %v1173, 0
  %v1286 = vsel %vm87, %v1175, 0
  %v1288 = vsel %vm87, %v1177, 0
  %v1290 = vsel %vm87, %v1179, 0
  %v1292 = vsel %vm87, %v1181, 0
  %1294 = vmatpush.xpose.msra.mxu0 0.0
  %1295 = vmatpush.xpose.msra.mxu0 0.0
  %1296 = vmatpush.xpose.msra.mxu0 0.0
  %1297 = vmatpush.xpose.msra.mxu0 0.0
  %1298 = vmatpush.xpose.msra.mxu0 0.0
  %1299 = vmatpush.xpose.msra.mxu0 0.0
  %1300 = vmatpush.xpose.msra.mxu0 0.0
  %1301 = vmatpush.xpose.msra.mxu0 0.0
  %1302 = vmatpush.xpose.msra.mxu0 %v1292
  %1303 = vmatpush.xpose.msra.mxu0 %v1290
  %1304 = vmatpush.xpose.msra.mxu0 %v1288
  %1305 = vmatpush.xpose.msra.mxu0 %v1286
  %1306 = vmatpush.xpose.msra.mxu0 %v1284
  %1307 = vmatpush.xpose.msra.mxu0 %v1282
  %1308 = vmatpush.xpose.msra.mxu0 %v1280
  %1309 = vmatpush.xpose.msra.mxu0 %v1278
  %1310 = vmatmul.f32.gmra.mxu0 %v1183
  %v1311 = vpop.f32.mrf.mxu0
  %v1312 = vadd.f32 %v1157, %v1311
  %1313 = vmatmul.f32.gmra.mxu0 %v1186
  %v1314 = vpop.f32.mrf.mxu0
  %v1315 = vadd.f32 %v1157, %v1314
  %1316 = vmatmul.f32.gmra.mxu0 %v1189
  %v1317 = vpop.f32.mrf.mxu0
  %v1318 = vadd.f32 %v1157, %v1317
  %1319 = vmatmul.f32.gmra.mxu0 %v1192
  %v1320 = vpop.f32.mrf.mxu0
  %v1321 = vadd.f32 %v1157, %v1320
  %1322 = vmatmul.f32.gmra.mxu0 %v1195
  %v1323 = vpop.f32.mrf.mxu0
  %v1324 = vadd.f32 %v1157, %v1323
  %1325 = vmatmul.f32.gmra.mxu0 %v1198
  %v1326 = vpop.f32.mrf.mxu0
  %v1327 = vadd.f32 %v1157, %v1326
  %1328 = vmatmul.f32.gmra.mxu0 %v1201
  %v1329 = vpop.f32.mrf.mxu0
  %v1330 = vadd.f32 %v1157, %v1329
  %1331 = vmatmul.f32.gmra.mxu0 %v1204
  %v1332 = vpop.f32.mrf.mxu0
  %v1333 = vadd.f32 %v1157, %v1332
  %1334 = vmatmul.f32.gmra.mxu0 %v1207
  %v1335 = vpop.f32.mrf.mxu0
  %v1336 = vadd.f32 %v1157, %v1335
  %1337 = vmatmul.f32.gmra.mxu0 %v1210
  %v1338 = vpop.f32.mrf.mxu0
  %v1339 = vadd.f32 %v1157, %v1338
  %1340 = vmatmul.f32.gmra.mxu0 %v1213
  %v1341 = vpop.f32.mrf.mxu0
  %v1342 = vadd.f32 %v1157, %v1341
  %1343 = vmatmul.f32.gmra.mxu0 %v1216
  %v1344 = vpop.f32.mrf.mxu0
  %v1345 = vadd.f32 %v1157, %v1344
  %1346 = vmatmul.f32.gmra.mxu0 %v1219
  %v1347 = vpop.f32.mrf.mxu0
  %v1348 = vadd.f32 %v1157, %v1347
  %1349 = vmatmul.f32.gmra.mxu0 %v1222
  %v1350 = vpop.f32.mrf.mxu0
  %v1351 = vadd.f32 %v1157, %v1350
  %1352 = vmatmul.f32.gmra.mxu0 %v1225
  %v1353 = vpop.f32.mrf.mxu0
  %v1354 = vadd.f32 %v1157, %v1353
  %1355 = vmatmul.f32.gmra.mxu0 %v1228
  %v1356 = vpop.f32.mrf.mxu0
  %v1357 = vadd.f32 %v1157, %v1356
  %1358 = vmatmul.f32.gmra.mxu0 %v1231
  %v1359 = vpop.f32.mrf.mxu0
  %v1360 = vadd.f32 %v1157, %v1359
  %1361 = vmatmul.f32.gmra.mxu0 %v1234
  %v1362 = vpop.f32.mrf.mxu0
  %v1363 = vadd.f32 %v1157, %v1362
  %1364 = vmatmul.f32.gmra.mxu0 %v1237
  %v1365 = vpop.f32.mrf.mxu0
  %v1366 = vadd.f32 %v1157, %v1365
  %1367 = vmatmul.f32.gmra.mxu0 %v1240
  %v1368 = vpop.f32.mrf.mxu0
  %v1369 = vadd.f32 %v1157, %v1368
  %1370 = vmatmul.f32.gmra.mxu0 %v1243
  %v1371 = vpop.f32.mrf.mxu0
  %v1372 = vadd.f32 %v1157, %v1371
  %1373 = vmatmul.f32.gmra.mxu0 %v1246
  %v1374 = vpop.f32.mrf.mxu0
  %v1375 = vadd.f32 %v1157, %v1374
  %1376 = vmatmul.f32.gmra.mxu0 %v1249
  %v1377 = vpop.f32.mrf.mxu0
  %v1378 = vadd.f32 %v1157, %v1377
  %1379 = vmatmul.f32.gmra.mxu0 %v1252
  %v1380 = vpop.f32.mrf.mxu0
  %v1381 = vadd.f32 %v1157, %v1380
  %1382 = vmatmul.f32.gmra.mxu0 %v1255
  %v1383 = vpop.f32.mrf.mxu0
  %v1384 = vadd.f32 %v1157, %v1383
  %1385 = vmatmul.f32.gmra.mxu0 %v1258
  %v1386 = vpop.f32.mrf.mxu0
  %v1387 = vadd.f32 %v1157, %v1386
  %1388 = vmatmul.f32.gmra.mxu0 %v1261
  %v1389 = vpop.f32.mrf.mxu0
  %v1390 = vadd.f32 %v1157, %v1389
  %1391 = vmatmul.f32.gmra.mxu0 %v1264
  %v1392 = vpop.f32.mrf.mxu0
  %v1393 = vadd.f32 %v1157, %v1392
  %1394 = vmatmul.f32.gmra.mxu0 %v1267
  %v1395 = vpop.f32.mrf.mxu0
  %v1396 = vadd.f32 %v1157, %v1395
  %1397 = vmatmul.f32.gmra.mxu0 %v1270
  %v1398 = vpop.f32.mrf.mxu0
  %v1399 = vadd.f32 %v1157, %v1398
  %1400 = vmatmul.f32.gmra.mxu0 %v1273
  %v1401 = vpop.f32.mrf.mxu0
  %v1402 = vadd.f32 %v1157, %v1401
  %1403 = vmatmul.f32.gmra.mxu0 %v1276
  %v1404 = vpop.f32.mrf.mxu0
  %v1405 = vadd.f32 %v1157, %v1404
  %1406 = vdwg.mxu0
  %v1407 = vsel %vm483, %v1312, -inf
  %1408 = vmax.xlane.f32.xlu0 %v1407
  %v1409 = vpop.xlane.xlu0 %1408
  %v1410 = vsel %vm483, %v1315, -inf
  %1411 = vmax.xlane.f32.xlu0 %v1410
  %v1412 = vpop.xlane.xlu0 %1411
  %v1413 = vsel %vm483, %v1318, -inf
  %1414 = vmax.xlane.f32.xlu0 %v1413
  %v1415 = vpop.xlane.xlu0 %1414
  %v1416 = vsel %vm483, %v1321, -inf
  %1417 = vmax.xlane.f32.xlu0 %v1416
  %v1418 = vpop.xlane.xlu0 %1417
  %v1419 = vsel %vm483, %v1324, -inf
  %1420 = vmax.xlane.f32.xlu0 %v1419
  %v1421 = vpop.xlane.xlu0 %1420
  %v1422 = vsel %vm483, %v1327, -inf
  %1423 = vmax.xlane.f32.xlu0 %v1422
  %v1424 = vpop.xlane.xlu0 %1423
  %v1425 = vsel %vm483, %v1330, -inf
  %1426 = vmax.xlane.f32.xlu0 %v1425
  %v1427 = vpop.xlane.xlu0 %1426
  %v1428 = vsel %vm483, %v1333, -inf
  %1429 = vmax.xlane.f32.xlu0 %v1428
  %v1430 = vpop.xlane.xlu0 %1429
  %v1431 = vsel %vm483, %v1336, -inf
  %1432 = vmax.xlane.f32.xlu0 %v1431
  %v1433 = vpop.xlane.xlu0 %1432
  %v1434 = vsel %vm483, %v1339, -inf
  %1435 = vmax.xlane.f32.xlu0 %v1434
  %v1436 = vpop.xlane.xlu0 %1435
  %v1437 = vsel %vm483, %v1342, -inf
  %1438 = vmax.xlane.f32.xlu0 %v1437
  %v1439 = vpop.xlane.xlu0 %1438
  %v1440 = vsel %vm483, %v1345, -inf
  %1441 = vmax.xlane.f32.xlu0 %v1440
  %v1442 = vpop.xlane.xlu0 %1441
  %v1443 = vsel %vm483, %v1348, -inf
  %1444 = vmax.xlane.f32.xlu0 %v1443
  %v1445 = vpop.xlane.xlu0 %1444
  %v1446 = vsel %vm483, %v1351, -inf
  %1447 = vmax.xlane.f32.xlu0 %v1446
  %v1448 = vpop.xlane.xlu0 %1447
  %v1449 = vsel %vm483, %v1354, -inf
  %1450 = vmax.xlane.f32.xlu0 %v1449
  %v1451 = vpop.xlane.xlu0 %1450
  %v1452 = vsel %vm483, %v1357, -inf
  %1453 = vmax.xlane.f32.xlu0 %v1452
  %v1454 = vpop.xlane.xlu0 %1453
  %v1455 = vsel %vm483, %v1360, -inf
  %1456 = vmax.xlane.f32.xlu0 %v1455
  %v1457 = vpop.xlane.xlu0 %1456
  %v1458 = vsel %vm483, %v1363, -inf
  %1459 = vmax.xlane.f32.xlu0 %v1458
  %v1460 = vpop.xlane.xlu0 %1459
  %v1461 = vsel %vm483, %v1366, -inf
  %1462 = vmax.xlane.f32.xlu0 %v1461
  %v1463 = vpop.xlane.xlu0 %1462
  %v1464 = vsel %vm483, %v1369, -inf
  %1465 = vmax.xlane.f32.xlu0 %v1464
  %v1466 = vpop.xlane.xlu0 %1465
  %v1467 = vsel %vm483, %v1372, -inf
  %1468 = vmax.xlane.f32.xlu0 %v1467
  %v1469 = vpop.xlane.xlu0 %1468
  %v1470 = vsel %vm483, %v1375, -inf
  %1471 = vmax.xlane.f32.xlu0 %v1470
  %v1472 = vpop.xlane.xlu0 %1471
  %v1473 = vsel %vm483, %v1378, -inf
  %1474 = vmax.xlane.f32.xlu0 %v1473
  %v1475 = vpop.xlane.xlu0 %1474
  %v1476 = vsel %vm483, %v1381, -inf
  %1477 = vmax.xlane.f32.xlu0 %v1476
  %v1478 = vpop.xlane.xlu0 %1477
  %v1479 = vsel %vm483, %v1384, -inf
  %1480 = vmax.xlane.f32.xlu0 %v1479
  %v1481 = vpop.xlane.xlu0 %1480
  %v1482 = vsel %vm483, %v1387, -inf
  %1483 = vmax.xlane.f32.xlu0 %v1482
  %v1484 = vpop.xlane.xlu0 %1483
  %v1485 = vsel %vm483, %v1390, -inf
  %1486 = vmax.xlane.f32.xlu0 %v1485
  %v1487 = vpop.xlane.xlu0 %1486
  %v1488 = vsel %vm483, %v1393, -inf
  %1489 = vmax.xlane.f32.xlu0 %v1488
  %v1490 = vpop.xlane.xlu0 %1489
  %v1491 = vsel %vm483, %v1396, -inf
  %1492 = vmax.xlane.f32.xlu0 %v1491
  %v1493 = vpop.xlane.xlu0 %1492
  %v1494 = vsel %vm483, %v1399, -inf
  %1495 = vmax.xlane.f32.xlu0 %v1494
  %v1496 = vpop.xlane.xlu0 %1495
  %v1497 = vsel %vm483, %v1402, -inf
  %1498 = vmax.xlane.f32.xlu0 %v1497
  %v1499 = vpop.xlane.xlu0 %1498
  %v1500 = vsel %vm483, %v1405, -inf
  %1501 = vmax.xlane.f32.xlu0 %v1500
  %v1502 = vpop.xlane.xlu0 %1501
  %v1503 = vsub.f32 %v1312, %v1409
  %v1504 = vsub.f32 %v1315, %v1412
  %v1505 = vsub.f32 %v1318, %v1415
  %v1506 = vsub.f32 %v1321, %v1418
  %v1507 = vsub.f32 %v1324, %v1421
  %v1508 = vsub.f32 %v1327, %v1424
  %v1509 = vsub.f32 %v1330, %v1427
  %v1510 = vsub.f32 %v1333, %v1430
  %v1511 = vsub.f32 %v1336, %v1433
  %v1512 = vsub.f32 %v1339, %v1436
  %v1513 = vsub.f32 %v1342, %v1439
  %v1514 = vsub.f32 %v1345, %v1442
  %v1515 = vsub.f32 %v1348, %v1445
  %v1516 = vsub.f32 %v1351, %v1448
  %v1517 = vsub.f32 %v1354, %v1451
  %v1518 = vsub.f32 %v1357, %v1454
  %v1519 = vsub.f32 %v1360, %v1457
  %v1520 = vsub.f32 %v1363, %v1460
  %v1521 = vsub.f32 %v1366, %v1463
  %v1522 = vsub.f32 %v1369, %v1466
  %v1523 = vsub.f32 %v1372, %v1469
  %v1524 = vsub.f32 %v1375, %v1472
  %v1525 = vsub.f32 %v1378, %v1475
  %v1526 = vsub.f32 %v1381, %v1478
  %v1527 = vsub.f32 %v1384, %v1481
  %v1528 = vsub.f32 %v1387, %v1484
  %v1529 = vsub.f32 %v1390, %v1487
  %v1530 = vsub.f32 %v1393, %v1490
  %v1531 = vsub.f32 %v1396, %v1493
  %v1532 = vsub.f32 %v1399, %v1496
  %v1533 = vsub.f32 %v1402, %v1499
  %v1534 = vsub.f32 %v1405, %v1502
  %v1535 = vmul.f32 %v1503, 1.442695
  %v1536 = vpow.pop %v1535
  %v1537 = vmul.f32 %v1504, 1.442695
  %v1538 = vpow.pop %v1537
  %v1539 = vmul.f32 %v1505, 1.442695
  %v1540 = vpow.pop %v1539
  %v1541 = vmul.f32 %v1506, 1.442695
  %v1542 = vpow.pop %v1541
  %v1543 = vmul.f32 %v1507, 1.442695
  %v1544 = vpow.pop %v1543
  %v1545 = vmul.f32 %v1508, 1.442695
  %v1546 = vpow.pop %v1545
  %v1547 = vmul.f32 %v1509, 1.442695
  %v1548 = vpow.pop %v1547
  %v1549 = vmul.f32 %v1510, 1.442695
  %v1550 = vpow.pop %v1549
  %v1551 = vmul.f32 %v1511, 1.442695
  %v1552 = vpow.pop %v1551
  %v1553 = vmul.f32 %v1512, 1.442695
  %v1554 = vpow.pop %v1553
  %v1555 = vmul.f32 %v1513, 1.442695
  %v1556 = vpow.pop %v1555
  %v1557 = vmul.f32 %v1514, 1.442695
  %v1558 = vpow.pop %v1557
  %v1559 = vmul.f32 %v1515, 1.442695
  %v1560 = vpow.pop %v1559
  %v1561 = vmul.f32 %v1516, 1.442695
  %v1562 = vpow.pop %v1561
  %v1563 = vmul.f32 %v1517, 1.442695
  %v1564 = vpow.pop %v1563
  %v1565 = vmul.f32 %v1518, 1.442695
  %v1566 = vpow.pop %v1565
  %v1567 = vmul.f32 %v1519, 1.442695
  %v1568 = vpow.pop %v1567
  %v1569 = vmul.f32 %v1520, 1.442695
  %v1570 = vpow.pop %v1569
  %v1571 = vmul.f32 %v1521, 1.442695
  %v1572 = vpow.pop %v1571
  %v1573 = vmul.f32 %v1522, 1.442695
  %v1574 = vpow.pop %v1573
  %v1575 = vmul.f32 %v1523, 1.442695
  %v1576 = vpow.pop %v1575
  %v1577 = vmul.f32 %v1524, 1.442695
  %v1578 = vpow.pop %v1577
  %v1579 = vmul.f32 %v1525, 1.442695
  %v1580 = vpow.pop %v1579
  %v1581 = vmul.f32 %v1526, 1.442695
  %v1582 = vpow.pop %v1581
  %v1583 = vmul.f32 %v1527, 1.442695
  %v1584 = vpow.pop %v1583
  %v1585 = vmul.f32 %v1528, 1.442695
  %v1586 = vpow.pop %v1585
  %v1587 = vmul.f32 %v1529, 1.442695
  %v1588 = vpow.pop %v1587
  %v1589 = vmul.f32 %v1530, 1.442695
  %v1590 = vpow.pop %v1589
  %v1591 = vmul.f32 %v1531, 1.442695
  %v1592 = vpow.pop %v1591
  %v1593 = vmul.f32 %v1532, 1.442695
  %v1594 = vpow.pop %v1593
  %v1595 = vmul.f32 %v1533, 1.442695
  %v1596 = vpow.pop %v1595
  %v1597 = vmul.f32 %v1534, 1.442695
  %v1598 = vpow.pop %v1597
  %v1599 = vsel %vm483, %v1536, 0.0
  %1600 = vadd.xlane.f32.xlu0 %v1599
  %v1601 = vpop.xlane.xlu0 %1600
  %v1602 = vsel %vm483, %v1538, 0.0
  %1603 = vadd.xlane.f32.xlu0 %v1602
  %v1604 = vpop.xlane.xlu0 %1603
  %v1605 = vsel %vm483, %v1540, 0.0
  %1606 = vadd.xlane.f32.xlu0 %v1605
  %v1607 = vpop.xlane.xlu0 %1606
  %v1608 = vsel %vm483, %v1542, 0.0
  %1609 = vadd.xlane.f32.xlu0 %v1608
  %v1610 = vpop.xlane.xlu0 %1609
  %v1611 = vsel %vm483, %v1544, 0.0
  %1612 = vadd.xlane.f32.xlu0 %v1611
  %v1613 = vpop.xlane.xlu0 %1612
  %v1614 = vsel %vm483, %v1546, 0.0
  %1615 = vadd.xlane.f32.xlu0 %v1614
  %v1616 = vpop.xlane.xlu0 %1615
  %v1617 = vsel %vm483, %v1548, 0.0
  %1618 = vadd.xlane.f32.xlu0 %v1617
  %v1619 = vpop.xlane.xlu0 %1618
  %v1620 = vsel %vm483, %v1550, 0.0
  %1621 = vadd.xlane.f32.xlu0 %v1620
  %v1622 = vpop.xlane.xlu0 %1621
  %v1623 = vsel %vm483, %v1552, 0.0
  %1624 = vadd.xlane.f32.xlu0 %v1623
  %v1625 = vpop.xlane.xlu0 %1624
  %v1626 = vsel %vm483, %v1554, 0.0
  %1627 = vadd.xlane.f32.xlu0 %v1626
  %v1628 = vpop.xlane.xlu0 %1627
  %v1629 = vsel %vm483, %v1556, 0.0
  %1630 = vadd.xlane.f32.xlu0 %v1629
  %v1631 = vpop.xlane.xlu0 %1630
  %v1632 = vsel %vm483, %v1558, 0.0
  %1633 = vadd.xlane.f32.xlu0 %v1632
  %v1634 = vpop.xlane.xlu0 %1633
  %v1635 = vsel %vm483, %v1560, 0.0
  %1636 = vadd.xlane.f32.xlu0 %v1635
  %v1637 = vpop.xlane.xlu0 %1636
  %v1638 = vsel %vm483, %v1562, 0.0
  %1639 = vadd.xlane.f32.xlu0 %v1638
  %v1640 = vpop.xlane.xlu0 %1639
  %v1641 = vsel %vm483, %v1564, 0.0
  %1642 = vadd.xlane.f32.xlu0 %v1641
  %v1643 = vpop.xlane.xlu0 %1642
  %v1644 = vsel %vm483, %v1566, 0.0
  %1645 = vadd.xlane.f32.xlu0 %v1644
  %v1646 = vpop.xlane.xlu0 %1645
  %v1647 = vsel %vm483, %v1568, 0.0
  %1648 = vadd.xlane.f32.xlu0 %v1647
  %v1649 = vpop.xlane.xlu0 %1648
  %v1650 = vsel %vm483, %v1570, 0.0
  %1651 = vadd.xlane.f32.xlu0 %v1650
  %v1652 = vpop.xlane.xlu0 %1651
  %v1653 = vsel %vm483, %v1572, 0.0
  %1654 = vadd.xlane.f32.xlu0 %v1653
  %v1655 = vpop.xlane.xlu0 %1654
  %v1656 = vsel %vm483, %v1574, 0.0
  %1657 = vadd.xlane.f32.xlu0 %v1656
  %v1658 = vpop.xlane.xlu0 %1657
  %v1659 = vsel %vm483, %v1576, 0.0
  %1660 = vadd.xlane.f32.xlu0 %v1659
  %v1661 = vpop.xlane.xlu0 %1660
  %v1662 = vsel %vm483, %v1578, 0.0
  %1663 = vadd.xlane.f32.xlu0 %v1662
  %v1664 = vpop.xlane.xlu0 %1663
  %v1665 = vsel %vm483, %v1580, 0.0
  %1666 = vadd.xlane.f32.xlu0 %v1665
  %v1667 = vpop.xlane.xlu0 %1666
  %v1668 = vsel %vm483, %v1582, 0.0
  %1669 = vadd.xlane.f32.xlu0 %v1668
  %v1670 = vpop.xlane.xlu0 %1669
  %v1671 = vsel %vm483, %v1584, 0.0
  %1672 = vadd.xlane.f32.xlu0 %v1671
  %v1673 = vpop.xlane.xlu0 %1672
  %v1674 = vsel %vm483, %v1586, 0.0
  %1675 = vadd.xlane.f32.xlu0 %v1674
  %v1676 = vpop.xlane.xlu0 %1675
  %v1677 = vsel %vm483, %v1588, 0.0
  %1678 = vadd.xlane.f32.xlu0 %v1677
  %v1679 = vpop.xlane.xlu0 %1678
  %v1680 = vsel %vm483, %v1590, 0.0
  %1681 = vadd.xlane.f32.xlu0 %v1680
  %v1682 = vpop.xlane.xlu0 %1681
  %v1683 = vsel %vm483, %v1592, 0.0
  %1684 = vadd.xlane.f32.xlu0 %v1683
  %v1685 = vpop.xlane.xlu0 %1684
  %v1686 = vsel %vm483, %v1594, 0.0
  %1687 = vadd.xlane.f32.xlu0 %v1686
  %v1688 = vpop.xlane.xlu0 %1687
  %v1689 = vsel %vm483, %v1596, 0.0
  %1690 = vadd.xlane.f32.xlu0 %v1689
  %v1691 = vpop.xlane.xlu0 %1690
  %v1692 = vsel %vm483, %v1598, 0.0
  %1693 = vadd.xlane.f32.xlu0 %v1692
  %v1694 = vpop.xlane.xlu0 %1693
  %1695 = vrot.lane.b32.xlu0 %v178, 64
  %v1696 = vpop.permute.xlu0 %1695
  %1697 = vrot.lane.b32.xlu0 %v181, 64
  %v1698 = vpop.permute.xlu0 %1697
  %1699 = vrot.lane.b32.xlu0 %v184, 64
  %v1700 = vpop.permute.xlu0 %1699
  %1701 = vrot.lane.b32.xlu0 %v187, 64
  %v1702 = vpop.permute.xlu0 %1701
  %1703 = vrot.lane.b32.xlu0 %v190, 64
  %v1704 = vpop.permute.xlu0 %1703
  %1705 = vrot.lane.b32.xlu0 %v193, 64
  %v1706 = vpop.permute.xlu0 %1705
  %1707 = vrot.lane.b32.xlu0 %v196, 64
  %v1708 = vpop.permute.xlu0 %1707
  %1709 = vrot.lane.b32.xlu0 %v199, 64
  %v1710 = vpop.permute.xlu0 %1709
  %v1720 = vsel %vm483, %v1536, 0
  %v1723 = vsel %vm483, %v1538, 0
  %v1726 = vsel %vm483, %v1540, 0
  %v1729 = vsel %vm483, %v1542, 0
  %v1732 = vsel %vm483, %v1544, 0
  %v1735 = vsel %vm483, %v1546, 0
  %v1738 = vsel %vm483, %v1548, 0
  %v1741 = vsel %vm483, %v1550, 0
  %v1744 = vsel %vm483, %v1552, 0
  %v1747 = vsel %vm483, %v1554, 0
  %v1750 = vsel %vm483, %v1556, 0
  %v1753 = vsel %vm483, %v1558, 0
  %v1756 = vsel %vm483, %v1560, 0
  %v1759 = vsel %vm483, %v1562, 0
  %v1762 = vsel %vm483, %v1564, 0
  %v1765 = vsel %vm483, %v1566, 0
  %v1768 = vsel %vm483, %v1568, 0
  %v1771 = vsel %vm483, %v1570, 0
  %v1774 = vsel %vm483, %v1572, 0
  %v1777 = vsel %vm483, %v1574, 0
  %v1780 = vsel %vm483, %v1576, 0
  %v1783 = vsel %vm483, %v1578, 0
  %v1786 = vsel %vm483, %v1580, 0
  %v1789 = vsel %vm483, %v1582, 0
  %v1792 = vsel %vm483, %v1584, 0
  %v1795 = vsel %vm483, %v1586, 0
  %v1798 = vsel %vm483, %v1588, 0
  %v1801 = vsel %vm483, %v1590, 0
  %v1804 = vsel %vm483, %v1592, 0
  %v1807 = vsel %vm483, %v1594, 0
  %v1810 = vsel %vm483, %v1596, 0
  %v1813 = vsel %vm483, %v1598, 0
  %1815 = vmatpush.msra.mxu0 0.0
  %1816 = vmatpush.msra.mxu0 0.0
  %1817 = vmatpush.msra.mxu0 0.0
  %1818 = vmatpush.msra.mxu0 0.0
  %1819 = vmatpush.msra.mxu0 0.0
  %1820 = vmatpush.msra.mxu0 0.0
  %1821 = vmatpush.msra.mxu0 0.0
  %1822 = vmatpush.msra.mxu0 0.0
  %1823 = vmatpush.msra.mxu0 %v1710
  %1824 = vmatpush.msra.mxu0 %v1708
  %1825 = vmatpush.msra.mxu0 %v1706
  %1826 = vmatpush.msra.mxu0 %v1704
  %1827 = vmatpush.msra.mxu0 %v1702
  %1828 = vmatpush.msra.mxu0 %v1700
  %1829 = vmatpush.msra.mxu0 %v1698
  %1830 = vmatpush.msra.mxu0 %v1696
  %1831 = vmatmul.f32.gmra.mxu0 %v1720
  %v1832 = vpop.f32.mrf.mxu0
  %v1833 = vadd.f32 0.0, %v1832
  %1834 = vmatmul.f32.gmra.mxu0 %v1723
  %v1835 = vpop.f32.mrf.mxu0
  %v1836 = vadd.f32 0.0, %v1835
  %1837 = vmatmul.f32.gmra.mxu0 %v1726
  %v1838 = vpop.f32.mrf.mxu0
  %v1839 = vadd.f32 0.0, %v1838
  %1840 = vmatmul.f32.gmra.mxu0 %v1729
  %v1841 = vpop.f32.mrf.mxu0
  %v1842 = vadd.f32 0.0, %v1841
  %1843 = vmatmul.f32.gmra.mxu0 %v1732
  %v1844 = vpop.f32.mrf.mxu0
  %v1845 = vadd.f32 0.0, %v1844
  %1846 = vmatmul.f32.gmra.mxu0 %v1735
  %v1847 = vpop.f32.mrf.mxu0
  %v1848 = vadd.f32 0.0, %v1847
  %1849 = vmatmul.f32.gmra.mxu0 %v1738
  %v1850 = vpop.f32.mrf.mxu0
  %v1851 = vadd.f32 0.0, %v1850
  %1852 = vmatmul.f32.gmra.mxu0 %v1741
  %v1853 = vpop.f32.mrf.mxu0
  %v1854 = vadd.f32 0.0, %v1853
  %1855 = vmatmul.f32.gmra.mxu0 %v1744
  %v1856 = vpop.f32.mrf.mxu0
  %v1857 = vadd.f32 0.0, %v1856
  %1858 = vmatmul.f32.gmra.mxu0 %v1747
  %v1859 = vpop.f32.mrf.mxu0
  %v1860 = vadd.f32 0.0, %v1859
  %1861 = vmatmul.f32.gmra.mxu0 %v1750
  %v1862 = vpop.f32.mrf.mxu0
  %v1863 = vadd.f32 0.0, %v1862
  %1864 = vmatmul.f32.gmra.mxu0 %v1753
  %v1865 = vpop.f32.mrf.mxu0
  %v1866 = vadd.f32 0.0, %v1865
  %1867 = vmatmul.f32.gmra.mxu0 %v1756
  %v1868 = vpop.f32.mrf.mxu0
  %v1869 = vadd.f32 0.0, %v1868
  %1870 = vmatmul.f32.gmra.mxu0 %v1759
  %v1871 = vpop.f32.mrf.mxu0
  %v1872 = vadd.f32 0.0, %v1871
  %1873 = vmatmul.f32.gmra.mxu0 %v1762
  %v1874 = vpop.f32.mrf.mxu0
  %v1875 = vadd.f32 0.0, %v1874
  %1876 = vmatmul.f32.gmra.mxu0 %v1765
  %v1877 = vpop.f32.mrf.mxu0
  %v1878 = vadd.f32 0.0, %v1877
  %1879 = vmatmul.f32.gmra.mxu0 %v1768
  %v1880 = vpop.f32.mrf.mxu0
  %v1881 = vadd.f32 0.0, %v1880
  %1882 = vmatmul.f32.gmra.mxu0 %v1771
  %v1883 = vpop.f32.mrf.mxu0
  %v1884 = vadd.f32 0.0, %v1883
  %1885 = vmatmul.f32.gmra.mxu0 %v1774
  %v1886 = vpop.f32.mrf.mxu0
  %v1887 = vadd.f32 0.0, %v1886
  %1888 = vmatmul.f32.gmra.mxu0 %v1777
  %v1889 = vpop.f32.mrf.mxu0
  %v1890 = vadd.f32 0.0, %v1889
  %1891 = vmatmul.f32.gmra.mxu0 %v1780
  %v1892 = vpop.f32.mrf.mxu0
  %v1893 = vadd.f32 0.0, %v1892
  %1894 = vmatmul.f32.gmra.mxu0 %v1783
  %v1895 = vpop.f32.mrf.mxu0
  %v1896 = vadd.f32 0.0, %v1895
  %1897 = vmatmul.f32.gmra.mxu0 %v1786
  %v1898 = vpop.f32.mrf.mxu0
  %v1899 = vadd.f32 0.0, %v1898
  %1900 = vmatmul.f32.gmra.mxu0 %v1789
  %v1901 = vpop.f32.mrf.mxu0
  %v1902 = vadd.f32 0.0, %v1901
  %1903 = vmatmul.f32.gmra.mxu0 %v1792
  %v1904 = vpop.f32.mrf.mxu0
  %v1905 = vadd.f32 0.0, %v1904
  %1906 = vmatmul.f32.gmra.mxu0 %v1795
  %v1907 = vpop.f32.mrf.mxu0
  %v1908 = vadd.f32 0.0, %v1907
  %1909 = vmatmul.f32.gmra.mxu0 %v1798
  %v1910 = vpop.f32.mrf.mxu0
  %v1911 = vadd.f32 0.0, %v1910
  %1912 = vmatmul.f32.gmra.mxu0 %v1801
  %v1913 = vpop.f32.mrf.mxu0
  %v1914 = vadd.f32 0.0, %v1913
  %1915 = vmatmul.f32.gmra.mxu0 %v1804
  %v1916 = vpop.f32.mrf.mxu0
  %v1917 = vadd.f32 0.0, %v1916
  %1918 = vmatmul.f32.gmra.mxu0 %v1807
  %v1919 = vpop.f32.mrf.mxu0
  %v1920 = vadd.f32 0.0, %v1919
  %1921 = vmatmul.f32.gmra.mxu0 %v1810
  %v1922 = vpop.f32.mrf.mxu0
  %v1923 = vadd.f32 0.0, %v1922
  %1924 = vmatmul.f32.gmra.mxu0 %v1813
  %v1925 = vpop.f32.mrf.mxu0
  %v1926 = vadd.f32 0.0, %v1925
  %1927 = vdwg.mxu0
  %v1928 = vmul.f32 %v1833, %v49
  %v1929 = vmul.f32 %v1836, %v50
  %v1930 = vmul.f32 %v1839, %v51
  %v1931 = vmul.f32 %v1842, %v52
  %v1932 = vmul.f32 %v1845, %v53
  %v1933 = vmul.f32 %v1848, %v54
  %v1934 = vmul.f32 %v1851, %v55
  %v1935 = vmul.f32 %v1854, %v56
  %v1936 = vmul.f32 %v1857, %v57
  %v1937 = vmul.f32 %v1860, %v58
  %v1938 = vmul.f32 %v1863, %v59
  %v1939 = vmul.f32 %v1866, %v60
  %v1940 = vmul.f32 %v1869, %v61
  %v1941 = vmul.f32 %v1872, %v62
  %v1942 = vmul.f32 %v1875, %v63
  %v1943 = vmul.f32 %v1878, %v64
  %v1944 = vmul.f32 %v1881, %v65
  %v1945 = vmul.f32 %v1884, %v66
  %v1946 = vmul.f32 %v1887, %v67
  %v1947 = vmul.f32 %v1890, %v68
  %v1948 = vmul.f32 %v1893, %v69
  %v1949 = vmul.f32 %v1896, %v70
  %v1950 = vmul.f32 %v1899, %v71
  %v1951 = vmul.f32 %v1902, %v72
  %v1952 = vmul.f32 %v1905, %v73
  %v1953 = vmul.f32 %v1908, %v74
  %v1954 = vmul.f32 %v1911, %v75
  %v1955 = vmul.f32 %v1914, %v76
  %v1956 = vmul.f32 %v1917, %v77
  %v1957 = vmul.f32 %v1920, %v78
  %v1958 = vmul.f32 %v1923, %v79
  %v1959 = vmul.f32 %v1926, %v80
  %v1960 = vrcp.pop %v1601
  %v1961 = vrcp.pop %v1604
  %v1962 = vrcp.pop %v1607
  %v1963 = vrcp.pop %v1610
  %v1964 = vrcp.pop %v1613
  %v1965 = vrcp.pop %v1616
  %v1966 = vrcp.pop %v1619
  %v1967 = vrcp.pop %v1622
  %v1968 = vrcp.pop %v1625
  %v1969 = vrcp.pop %v1628
  %v1970 = vrcp.pop %v1631
  %v1971 = vrcp.pop %v1634
  %v1972 = vrcp.pop %v1637
  %v1973 = vrcp.pop %v1640
  %v1974 = vrcp.pop %v1643
  %v1975 = vrcp.pop %v1646
  %v1976 = vrcp.pop %v1649
  %v1977 = vrcp.pop %v1652
  %v1978 = vrcp.pop %v1655
  %v1979 = vrcp.pop %v1658
  %v1980 = vrcp.pop %v1661
  %v1981 = vrcp.pop %v1664
  %v1982 = vrcp.pop %v1667
  %v1983 = vrcp.pop %v1670
  %v1984 = vrcp.pop %v1673
  %v1985 = vrcp.pop %v1676
  %v1986 = vrcp.pop %v1679
  %v1987 = vrcp.pop %v1682
  %v1988 = vrcp.pop %v1685
  %v1989 = vrcp.pop %v1688
  %v1990 = vrcp.pop %v1691
  %v1991 = vrcp.pop %v1694
  %v1992 = vmul.f32 %v1928, %v1960
  %v1993 = vmul.f32 %v1929, %v1961
  %v1994 = vmul.f32 %v1930, %v1962
  %v1995 = vmul.f32 %v1931, %v1963
  %v1996 = vmul.f32 %v1932, %v1964
  %v1997 = vmul.f32 %v1933, %v1965
  %v1998 = vmul.f32 %v1934, %v1966
  %v1999 = vmul.f32 %v1935, %v1967
  %v2000 = vmul.f32 %v1936, %v1968
  %v2001 = vmul.f32 %v1937, %v1969
  %v2002 = vmul.f32 %v1938, %v1970
  %v2003 = vmul.f32 %v1939, %v1971
  %v2004 = vmul.f32 %v1940, %v1972
  %v2005 = vmul.f32 %v1941, %v1973
  %v2006 = vmul.f32 %v1942, %v1974
  %v2007 = vmul.f32 %v1943, %v1975
  %v2008 = vmul.f32 %v1944, %v1976
  %v2009 = vmul.f32 %v1945, %v1977
  %v2010 = vmul.f32 %v1946, %v1978
  %v2011 = vmul.f32 %v1947, %v1979
  %v2012 = vmul.f32 %v1948, %v1980
  %v2013 = vmul.f32 %v1949, %v1981
  %v2014 = vmul.f32 %v1950, %v1982
  %v2015 = vmul.f32 %v1951, %v1983
  %v2016 = vmul.f32 %v1952, %v1984
  %v2017 = vmul.f32 %v1953, %v1985
  %v2018 = vmul.f32 %v1954, %v1986
  %v2019 = vmul.f32 %v1955, %v1987
  %v2020 = vmul.f32 %v1956, %v1988
  %v2021 = vmul.f32 %v1957, %v1989
  %v2022 = vmul.f32 %v1958, %v1990
  %v2023 = vmul.f32 %v1959, %v1991
  %v2024 = vadd.f32 %v1992, %v2000
  %v2025 = vadd.f32 %v1993, %v2001
  %v2026 = vadd.f32 %v1994, %v2002
  %v2027 = vadd.f32 %v1995, %v2003
  %v2028 = vadd.f32 %v1996, %v2004
  %v2029 = vadd.f32 %v1997, %v2005
  %v2030 = vadd.f32 %v1998, %v2006
  %v2031 = vadd.f32 %v1999, %v2007
  %v2032 = vadd.f32 %v2024, %v2008
  %v2033 = vadd.f32 %v2025, %v2009
  %v2034 = vadd.f32 %v2026, %v2010
  %v2035 = vadd.f32 %v2027, %v2011
  %v2036 = vadd.f32 %v2028, %v2012
  %v2037 = vadd.f32 %v2029, %v2013
  %v2038 = vadd.f32 %v2030, %v2014
  %v2039 = vadd.f32 %v2031, %v2015
  %v2040 = vadd.f32 %v2032, %v2016
  %v2041 = vadd.f32 %v2033, %v2017
  %v2042 = vadd.f32 %v2034, %v2018
  %v2043 = vadd.f32 %v2035, %v2019
  %v2044 = vadd.f32 %v2036, %v2020
  %v2045 = vadd.f32 %v2037, %v2021
  %v2046 = vadd.f32 %v2038, %v2022
  %v2047 = vadd.f32 %v2039, %v2023
  %v2048 = vld [vmem:[%s2] sm:$0xff]
  %v2049 = vld [vmem:[%s2 + $0x8] sm:$0xff]
  %v2050 = vld [vmem:[%s2 + $0x10] sm:$0xff]
  %v2051 = vld [vmem:[%s2 + $0x18] sm:$0xff]
  %v2052 = vld [vmem:[%s2 + $0x20] sm:$0xff]
  %v2053 = vld [vmem:[%s2 + $0x28] sm:$0xff]
  %v2054 = vld [vmem:[%s2 + $0x30] sm:$0xff]
  %v2055 = vld [vmem:[%s2 + $0x38] sm:$0xff]
  %v2056 = vld [vmem:[%s2 + $0x40] sm:$0xff]
  %v2057 = vld [vmem:[%s2 + $0x48] sm:$0xff]
  %v2058 = vld [vmem:[%s2 + $0x50] sm:$0xff]
  %v2059 = vld [vmem:[%s2 + $0x58] sm:$0xff]
  %v2060 = vld [vmem:[%s2 + $0x60] sm:$0xff]
  %v2061 = vld [vmem:[%s2 + $0x68] sm:$0xff]
  %v2062 = vld [vmem:[%s2 + $0x70] sm:$0xff]
  %v2063 = vld [vmem:[%s2 + $0x78] sm:$0xff]
  %2065 = vset.pattern.permute.xlu0 0
  %2066 = vperm.xlu0 %2065, %v2048
  %v2067 = vpop.permute.xlu0 %2066
  %2070 = vset.pattern.permute.xlu0 0
  %2071 = vperm.xlu0 %2070, %v2049
  %v2072 = vpop.permute.xlu0 %2071
  %2075 = vset.pattern.permute.xlu0 0
  %2076 = vperm.xlu0 %2075, %v2050
  %v2077 = vpop.permute.xlu0 %2076
  %2080 = vset.pattern.permute.xlu0 0
  %2081 = vperm.xlu0 %2080, %v2051
  %v2082 = vpop.permute.xlu0 %2081
  %2085 = vset.pattern.permute.xlu0 0
  %2086 = vperm.xlu0 %2085, %v2052
  %v2087 = vpop.permute.xlu0 %2086
  %2090 = vset.pattern.permute.xlu0 0
  %2091 = vperm.xlu0 %2090, %v2053
  %v2092 = vpop.permute.xlu0 %2091
  %2095 = vset.pattern.permute.xlu0 0
  %2096 = vperm.xlu0 %2095, %v2054
  %v2097 = vpop.permute.xlu0 %2096
  %2100 = vset.pattern.permute.xlu0 0
  %2101 = vperm.xlu0 %2100, %v2055
  %v2102 = vpop.permute.xlu0 %2101
  %2105 = vset.pattern.permute.xlu0 0
  %2106 = vperm.xlu0 %2105, %v2056
  %v2107 = vpop.permute.xlu0 %2106
  %2110 = vset.pattern.permute.xlu0 0
  %2111 = vperm.xlu0 %2110, %v2057
  %v2112 = vpop.permute.xlu0 %2111
  %2115 = vset.pattern.permute.xlu0 0
  %2116 = vperm.xlu0 %2115, %v2058
  %v2117 = vpop.permute.xlu0 %2116
  %2120 = vset.pattern.permute.xlu0 0
  %2121 = vperm.xlu0 %2120, %v2059
  %v2122 = vpop.permute.xlu0 %2121
  %2125 = vset.pattern.permute.xlu0 0
  %2126 = vperm.xlu0 %2125, %v2060
  %v2127 = vpop.permute.xlu0 %2126
  %2130 = vset.pattern.permute.xlu0 0
  %2131 = vperm.xlu0 %2130, %v2061
  %v2132 = vpop.permute.xlu0 %2131
  %2135 = vset.pattern.permute.xlu0 0
  %2136 = vperm.xlu0 %2135, %v2062
  %v2137 = vpop.permute.xlu0 %2136
  %2140 = vset.pattern.permute.xlu0 0
  %2141 = vperm.xlu0 %2140, %v2063
  %v2142 = vpop.permute.xlu0 %2141
  %v2144 = vmul.f32 %v1117, %v2067
  %v2145 = vmul.f32 %v1118, %v2072
  %v2146 = vmul.f32 %v1119, %v2077
  %v2147 = vmul.f32 %v1120, %v2082
  %v2148 = vmul.f32 %v1121, %v2087
  %v2149 = vmul.f32 %v1122, %v2092
  %v2150 = vmul.f32 %v1123, %v2097
  %v2151 = vmul.f32 %v1124, %v2102
  %v2152 = vmul.f32 %v2040, %v2107
  %v2153 = vmul.f32 %v2041, %v2112
  %v2154 = vmul.f32 %v2042, %v2117
  %v2155 = vmul.f32 %v2043, %v2122
  %v2156 = vmul.f32 %v2044, %v2127
  %v2157 = vmul.f32 %v2045, %v2132
  %v2158 = vmul.f32 %v2046, %v2137
  %v2159 = vmul.f32 %v2047, %v2142
  %v2160 = vld [vmem:[%s4] sm:$0xff]
  %v2161 = vld [vmem:[%s4 + $0x8] sm:$0xff]
  %v2162 = vld [vmem:[%s4 + $0x10] sm:$0xff]
  %v2163 = vld [vmem:[%s4 + $0x18] sm:$0xff]
  %v2164 = vperm.slane %v48, 2
  %v2166 = vsel %vm87, %v2144, 0
  %v2169 = vsel %vm87, %v2145, 0
  %v2172 = vsel %vm87, %v2146, 0
  %v2175 = vsel %vm87, %v2147, 0
  %v2178 = vsel %vm87, %v2148, 0
  %v2181 = vsel %vm87, %v2149, 0
  %v2184 = vsel %vm87, %v2150, 0
  %v2187 = vsel %vm87, %v2151, 0
  %v2190 = vsel %vm87, %v2152, 0
  %v2193 = vsel %vm87, %v2153, 0
  %v2196 = vsel %vm87, %v2154, 0
  %v2199 = vsel %vm87, %v2155, 0
  %v2202 = vsel %vm87, %v2156, 0
  %v2205 = vsel %vm87, %v2157, 0
  %v2208 = vsel %vm87, %v2158, 0
  %v2211 = vsel %vm87, %v2159, 0
  %2213 = vmatpush.msra.mxu0 0.0
  %2214 = vmatpush.msra.mxu0 0.0
  %2215 = vmatpush.msra.mxu0 0.0
  %2216 = vmatpush.msra.mxu0 0.0
  %2217 = vmatpush.msra.mxu0 0.0
  %2218 = vmatpush.msra.mxu0 0.0
  %2219 = vmatpush.msra.mxu0 0.0
  %2220 = vmatpush.msra.mxu0 0.0
  %2221 = vmatpush.msra.mxu0 0.0
  %2222 = vmatpush.msra.mxu0 0.0
  %2223 = vmatpush.msra.mxu0 0.0
  %2224 = vmatpush.msra.mxu0 0.0
  %2225 = vmatpush.msra.mxu0 %v2163
  %2226 = vmatpush.msra.mxu0 %v2162
  %2227 = vmatpush.msra.mxu0 %v2161
  %2228 = vmatpush.msra.mxu0 %v2160
  %2229 = vmatmul.f32.gmra.mxu0 %v2166
  %v2230 = vpop.f32.mrf.mxu0
  %v2231 = vadd.f32 %v2164, %v2230
  %2232 = vmatmul.f32.gmra.mxu0 %v2169
  %v2233 = vpop.f32.mrf.mxu0
  %v2234 = vadd.f32 %v2164, %v2233
  %2235 = vmatmul.f32.gmra.mxu0 %v2172
  %v2236 = vpop.f32.mrf.mxu0
  %v2237 = vadd.f32 %v2164, %v2236
  %2238 = vmatmul.f32.gmra.mxu0 %v2175
  %v2239 = vpop.f32.mrf.mxu0
  %v2240 = vadd.f32 %v2164, %v2239
  %2241 = vmatmul.f32.gmra.mxu0 %v2178
  %v2242 = vpop.f32.mrf.mxu0
  %v2243 = vadd.f32 %v2164, %v2242
  %2244 = vmatmul.f32.gmra.mxu0 %v2181
  %v2245 = vpop.f32.mrf.mxu0
  %v2246 = vadd.f32 %v2164, %v2245
  %2247 = vmatmul.f32.gmra.mxu0 %v2184
  %v2248 = vpop.f32.mrf.mxu0
  %v2249 = vadd.f32 %v2164, %v2248
  %2250 = vmatmul.f32.gmra.mxu0 %v2187
  %v2251 = vpop.f32.mrf.mxu0
  %v2252 = vadd.f32 %v2164, %v2251
  %2253 = vmatmul.f32.gmra.mxu0 %v2190
  %v2254 = vpop.f32.mrf.mxu0
  %v2255 = vadd.f32 %v2164, %v2254
  %2256 = vmatmul.f32.gmra.mxu0 %v2193
  %v2257 = vpop.f32.mrf.mxu0
  %v2258 = vadd.f32 %v2164, %v2257
  %2259 = vmatmul.f32.gmra.mxu0 %v2196
  %v2260 = vpop.f32.mrf.mxu0
  %v2261 = vadd.f32 %v2164, %v2260
  %2262 = vmatmul.f32.gmra.mxu0 %v2199
  %v2263 = vpop.f32.mrf.mxu0
  %v2264 = vadd.f32 %v2164, %v2263
  %2265 = vmatmul.f32.gmra.mxu0 %v2202
  %v2266 = vpop.f32.mrf.mxu0
  %v2267 = vadd.f32 %v2164, %v2266
  %2268 = vmatmul.f32.gmra.mxu0 %v2205
  %v2269 = vpop.f32.mrf.mxu0
  %v2270 = vadd.f32 %v2164, %v2269
  %2271 = vmatmul.f32.gmra.mxu0 %v2208
  %v2272 = vpop.f32.mrf.mxu0
  %v2273 = vadd.f32 %v2164, %v2272
  %2274 = vmatmul.f32.gmra.mxu0 %v2211
  %v2275 = vpop.f32.mrf.mxu0
  %v2276 = vadd.f32 %v2164, %v2275
  %2277 = vdwg.mxu0
  %v2278 = vadd.f32 %v32, %v2231
  %v2279 = vadd.f32 %v33, %v2234
  %v2280 = vadd.f32 %v34, %v2237
  %v2281 = vadd.f32 %v35, %v2240
  %v2282 = vadd.f32 %v36, %v2243
  %v2283 = vadd.f32 %v37, %v2246
  %v2284 = vadd.f32 %v38, %v2249
  %v2285 = vadd.f32 %v39, %v2252
  %v2286 = vadd.f32 %v40, %v2255
  %v2287 = vadd.f32 %v41, %v2258
  %v2288 = vadd.f32 %v42, %v2261
  %v2289 = vadd.f32 %v43, %v2264
  %v2290 = vadd.f32 %v44, %v2267
  %v2291 = vadd.f32 %v45, %v2270
  %v2292 = vadd.f32 %v46, %v2273
  %v2293 = vadd.f32 %v47, %v2276
  %v2294 = vsel %vm87, %v2278, 0.0
  %2295 = vadd.xlane.f32.xlu0 %v2294
  %v2296 = vpop.xlane.xlu0 %2295
  %v2297 = vsel %vm87, %v2279, 0.0
  %2298 = vadd.xlane.f32.xlu0 %v2297
  %v2299 = vpop.xlane.xlu0 %2298
  %v2300 = vsel %vm87, %v2280, 0.0
  %2301 = vadd.xlane.f32.xlu0 %v2300
  %v2302 = vpop.xlane.xlu0 %2301
  %v2303 = vsel %vm87, %v2281, 0.0
  %2304 = vadd.xlane.f32.xlu0 %v2303
  %v2305 = vpop.xlane.xlu0 %2304
  %v2306 = vsel %vm87, %v2282, 0.0
  %2307 = vadd.xlane.f32.xlu0 %v2306
  %v2308 = vpop.xlane.xlu0 %2307
  %v2309 = vsel %vm87, %v2283, 0.0
  %2310 = vadd.xlane.f32.xlu0 %v2309
  %v2311 = vpop.xlane.xlu0 %2310
  %v2312 = vsel %vm87, %v2284, 0.0
  %2313 = vadd.xlane.f32.xlu0 %v2312
  %v2314 = vpop.xlane.xlu0 %2313
  %v2315 = vsel %vm87, %v2285, 0.0
  %2316 = vadd.xlane.f32.xlu0 %v2315
  %v2317 = vpop.xlane.xlu0 %2316
  %v2318 = vsel %vm87, %v2286, 0.0
  %2319 = vadd.xlane.f32.xlu0 %v2318
  %v2320 = vpop.xlane.xlu0 %2319
  %v2321 = vsel %vm87, %v2287, 0.0
  %2322 = vadd.xlane.f32.xlu0 %v2321
  %v2323 = vpop.xlane.xlu0 %2322
  %v2324 = vsel %vm87, %v2288, 0.0
  %2325 = vadd.xlane.f32.xlu0 %v2324
  %v2326 = vpop.xlane.xlu0 %2325
  %v2327 = vsel %vm87, %v2289, 0.0
  %2328 = vadd.xlane.f32.xlu0 %v2327
  %v2329 = vpop.xlane.xlu0 %2328
  %v2330 = vsel %vm87, %v2290, 0.0
  %2331 = vadd.xlane.f32.xlu0 %v2330
  %v2332 = vpop.xlane.xlu0 %2331
  %v2333 = vsel %vm87, %v2291, 0.0
  %2334 = vadd.xlane.f32.xlu0 %v2333
  %v2335 = vpop.xlane.xlu0 %2334
  %v2336 = vsel %vm87, %v2292, 0.0
  %2337 = vadd.xlane.f32.xlu0 %v2336
  %v2338 = vpop.xlane.xlu0 %2337
  %v2339 = vsel %vm87, %v2293, 0.0
  %2340 = vadd.xlane.f32.xlu0 %v2339
  %v2341 = vpop.xlane.xlu0 %2340
  %v2342 = vrcp.pop 32.0
  %v2343 = vmul.f32 32.0, %v2342
  %v2344 = vsub.f32 1.0, %v2343
  %v2345 = vmul.f32 %v2342, %v2344
  %v2346 = vadd.f32 %v2342, %v2345
  %vm2347 = vweird.f32 %v2342
  %v2348 = vsel %vm2347, %v2342, %v2346
  %v2349 = vmul.f32 %v2296, %v2348
  %v2350 = vmul.f32 %v2299, %v2348
  %v2351 = vmul.f32 %v2302, %v2348
  %v2352 = vmul.f32 %v2305, %v2348
  %v2353 = vmul.f32 %v2308, %v2348
  %v2354 = vmul.f32 %v2311, %v2348
  %v2355 = vmul.f32 %v2314, %v2348
  %v2356 = vmul.f32 %v2317, %v2348
  %v2357 = vmul.f32 %v2320, %v2348
  %v2358 = vmul.f32 %v2323, %v2348
  %v2359 = vmul.f32 %v2326, %v2348
  %v2360 = vmul.f32 %v2329, %v2348
  %v2361 = vmul.f32 %v2332, %v2348
  %v2362 = vmul.f32 %v2335, %v2348
  %v2363 = vmul.f32 %v2338, %v2348
  %v2364 = vmul.f32 %v2341, %v2348
  %v2365 = vsub.f32 %v2278, %v2349
  %v2366 = vsub.f32 %v2279, %v2350
  %v2367 = vsub.f32 %v2280, %v2351
  %v2368 = vsub.f32 %v2281, %v2352
  %v2369 = vsub.f32 %v2282, %v2353
  %v2370 = vsub.f32 %v2283, %v2354
  %v2371 = vsub.f32 %v2284, %v2355
  %v2372 = vsub.f32 %v2285, %v2356
  %v2373 = vsub.f32 %v2286, %v2357
  %v2374 = vsub.f32 %v2287, %v2358
  %v2375 = vsub.f32 %v2288, %v2359
  %v2376 = vsub.f32 %v2289, %v2360
  %v2377 = vsub.f32 %v2290, %v2361
  %v2378 = vsub.f32 %v2291, %v2362
  %v2379 = vsub.f32 %v2292, %v2363
  %v2380 = vsub.f32 %v2293, %v2364
  %v2381 = vmul.f32 %v2365, %v2365
  %v2382 = vmul.f32 %v2366, %v2366
  %v2383 = vmul.f32 %v2367, %v2367
  %v2384 = vmul.f32 %v2368, %v2368
  %v2385 = vmul.f32 %v2369, %v2369
  %v2386 = vmul.f32 %v2370, %v2370
  %v2387 = vmul.f32 %v2371, %v2371
  %v2388 = vmul.f32 %v2372, %v2372
  %v2389 = vmul.f32 %v2373, %v2373
  %v2390 = vmul.f32 %v2374, %v2374
  %v2391 = vmul.f32 %v2375, %v2375
  %v2392 = vmul.f32 %v2376, %v2376
  %v2393 = vmul.f32 %v2377, %v2377
  %v2394 = vmul.f32 %v2378, %v2378
  %v2395 = vmul.f32 %v2379, %v2379
  %v2396 = vmul.f32 %v2380, %v2380
  %v2397 = vsel %vm87, %v2381, 0.0
  %2398 = vadd.xlane.f32.xlu0 %v2397
  %v2399 = vpop.xlane.xlu0 %2398
  %v2400 = vsel %vm87, %v2382, 0.0
  %2401 = vadd.xlane.f32.xlu0 %v2400
  %v2402 = vpop.xlane.xlu0 %2401
  %v2403 = vsel %vm87, %v2383, 0.0
  %2404 = vadd.xlane.f32.xlu0 %v2403
  %v2405 = vpop.xlane.xlu0 %2404
  %v2406 = vsel %vm87, %v2384, 0.0
  %2407 = vadd.xlane.f32.xlu0 %v2406
  %v2408 = vpop.xlane.xlu0 %2407
  %v2409 = vsel %vm87, %v2385, 0.0
  %2410 = vadd.xlane.f32.xlu0 %v2409
  %v2411 = vpop.xlane.xlu0 %2410
  %v2412 = vsel %vm87, %v2386, 0.0
  %2413 = vadd.xlane.f32.xlu0 %v2412
  %v2414 = vpop.xlane.xlu0 %2413
  %v2415 = vsel %vm87, %v2387, 0.0
  %2416 = vadd.xlane.f32.xlu0 %v2415
  %v2417 = vpop.xlane.xlu0 %2416
  %v2418 = vsel %vm87, %v2388, 0.0
  %2419 = vadd.xlane.f32.xlu0 %v2418
  %v2420 = vpop.xlane.xlu0 %2419
  %v2421 = vsel %vm87, %v2389, 0.0
  %2422 = vadd.xlane.f32.xlu0 %v2421
  %v2423 = vpop.xlane.xlu0 %2422
  %v2424 = vsel %vm87, %v2390, 0.0
  %2425 = vadd.xlane.f32.xlu0 %v2424
  %v2426 = vpop.xlane.xlu0 %2425
  %v2427 = vsel %vm87, %v2391, 0.0
  %2428 = vadd.xlane.f32.xlu0 %v2427
  %v2429 = vpop.xlane.xlu0 %2428
  %v2430 = vsel %vm87, %v2392, 0.0
  %2431 = vadd.xlane.f32.xlu0 %v2430
  %v2432 = vpop.xlane.xlu0 %2431
  %v2433 = vsel %vm87, %v2393, 0.0
  %2434 = vadd.xlane.f32.xlu0 %v2433
  %v2435 = vpop.xlane.xlu0 %2434
  %v2436 = vsel %vm87, %v2394, 0.0
  %2437 = vadd.xlane.f32.xlu0 %v2436
  %v2438 = vpop.xlane.xlu0 %2437
  %v2439 = vsel %vm87, %v2395, 0.0
  %2440 = vadd.xlane.f32.xlu0 %v2439
  %v2441 = vpop.xlane.xlu0 %2440
  %v2442 = vsel %vm87, %v2396, 0.0
  %2443 = vadd.xlane.f32.xlu0 %v2442
  %v2444 = vpop.xlane.xlu0 %2443
  %v2445 = vmul.f32 %v2399, %v2348
  %v2446 = vmul.f32 %v2402, %v2348
  %v2447 = vmul.f32 %v2405, %v2348
  %v2448 = vmul.f32 %v2408, %v2348
  %v2449 = vmul.f32 %v2411, %v2348
  %v2450 = vmul.f32 %v2414, %v2348
  %v2451 = vmul.f32 %v2417, %v2348
  %v2452 = vmul.f32 %v2420, %v2348
  %v2453 = vmul.f32 %v2423, %v2348
  %v2454 = vmul.f32 %v2426, %v2348
  %v2455 = vmul.f32 %v2429, %v2348
  %v2456 = vmul.f32 %v2432, %v2348
  %v2457 = vmul.f32 %v2435, %v2348
  %v2458 = vmul.f32 %v2438, %v2348
  %v2459 = vmul.f32 %v2441, %v2348
  %v2460 = vmul.f32 %v2444, %v2348
  %v2461 = vadd.f32 %v2445, 1e-05
  %v2462 = vadd.f32 %v2446, 1e-05
  %v2463 = vadd.f32 %v2447, 1e-05
  %v2464 = vadd.f32 %v2448, 1e-05
  %v2465 = vadd.f32 %v2449, 1e-05
  %v2466 = vadd.f32 %v2450, 1e-05
  %v2467 = vadd.f32 %v2451, 1e-05
  %v2468 = vadd.f32 %v2452, 1e-05
  %v2469 = vadd.f32 %v2453, 1e-05
  %v2470 = vadd.f32 %v2454, 1e-05
  %v2471 = vadd.f32 %v2455, 1e-05
  %v2472 = vadd.f32 %v2456, 1e-05
  %v2473 = vadd.f32 %v2457, 1e-05
  %v2474 = vadd.f32 %v2458, 1e-05
  %v2475 = vadd.f32 %v2459, 1e-05
  %v2476 = vadd.f32 %v2460, 1e-05
  %v2477 = vrsqrt.pop %v2461
  %v2478 = vmul.f32 %v2477, %v2461
  %v2479 = vmul.f32 %v2478, %v2477
  %v2480 = vmul.f32 0.5, %v2479
  %v2481 = vsub.f32 1.5, %v2480
  %v2482 = vmul.f32 %v2477, %v2481
  %vm2483 = vweird.f32 %v2461
  %vm2484 = vweird.f32 %v2477
  %vm2485 = vmor %vm2483, %vm2484
  %v2486 = vsel %vm2485, %v2477, %v2482
  %v2487 = vrsqrt.pop %v2462
  %v2488 = vmul.f32 %v2487, %v2462
  %v2489 = vmul.f32 %v2488, %v2487
  %v2490 = vmul.f32 0.5, %v2489
  %v2491 = vsub.f32 1.5, %v2490
  %v2492 = vmul.f32 %v2487, %v2491
  %vm2493 = vweird.f32 %v2462
  %vm2494 = vweird.f32 %v2487
  %vm2495 = vmor %vm2493, %vm2494
  %v2496 = vsel %vm2495, %v2487, %v2492
  %v2497 = vrsqrt.pop %v2463
  %v2498 = vmul.f32 %v2497, %v2463
  %v2499 = vmul.f32 %v2498, %v2497
  %v2500 = vmul.f32 0.5, %v2499
  %v2501 = vsub.f32 1.5, %v2500
  %v2502 = vmul.f32 %v2497, %v2501
  %vm2503 = vweird.f32 %v2463
  %vm2504 = vweird.f32 %v2497
  %vm2505 = vmor %vm2503, %vm2504
  %v2506 = vsel %vm2505, %v2497, %v2502
  %v2507 = vrsqrt.pop %v2464
  %v2508 = vmul.f32 %v2507, %v2464
  %v2509 = vmul.f32 %v2508, %v2507
  %v2510 = vmul.f32 0.5, %v2509
  %v2511 = vsub.f32 1.5, %v2510
  %v2512 = vmul.f32 %v2507, %v2511
  %vm2513 = vweird.f32 %v2464
  %vm2514 = vweird.f32 %v2507
  %vm2515 = vmor %vm2513, %vm2514
  %v2516 = vsel %vm2515, %v2507, %v2512
  %v2517 = vrsqrt.pop %v2465
  %v2518 = vmul.f32 %v2517, %v2465
  %v2519 = vmul.f32 %v2518, %v2517
  %v2520 = vmul.f32 0.5, %v2519
  %v2521 = vsub.f32 1.5, %v2520
  %v2522 = vmul.f32 %v2517, %v2521
  %vm2523 = vweird.f32 %v2465
  %vm2524 = vweird.f32 %v2517
  %vm2525 = vmor %vm2523, %vm2524
  %v2526 = vsel %vm2525, %v2517, %v2522
  %v2527 = vrsqrt.pop %v2466
  %v2528 = vmul.f32 %v2527, %v2466
  %v2529 = vmul.f32 %v2528, %v2527
  %v2530 = vmul.f32 0.5, %v2529
  %v2531 = vsub.f32 1.5, %v2530
  %v2532 = vmul.f32 %v2527, %v2531
  %vm2533 = vweird.f32 %v2466
  %vm2534 = vweird.f32 %v2527
  %vm2535 = vmor %vm2533, %vm2534
  %v2536 = vsel %vm2535, %v2527, %v2532
  %v2537 = vrsqrt.pop %v2467
  %v2538 = vmul.f32 %v2537, %v2467
  %v2539 = vmul.f32 %v2538, %v2537
  %v2540 = vmul.f32 0.5, %v2539
  %v2541 = vsub.f32 1.5, %v2540
  %v2542 = vmul.f32 %v2537, %v2541
  %vm2543 = vweird.f32 %v2467
  %vm2544 = vweird.f32 %v2537
  %vm2545 = vmor %vm2543, %vm2544
  %v2546 = vsel %vm2545, %v2537, %v2542
  %v2547 = vrsqrt.pop %v2468
  %v2548 = vmul.f32 %v2547, %v2468
  %v2549 = vmul.f32 %v2548, %v2547
  %v2550 = vmul.f32 0.5, %v2549
  %v2551 = vsub.f32 1.5, %v2550
  %v2552 = vmul.f32 %v2547, %v2551
  %vm2553 = vweird.f32 %v2468
  %vm2554 = vweird.f32 %v2547
  %vm2555 = vmor %vm2553, %vm2554
  %v2556 = vsel %vm2555, %v2547, %v2552
  %v2557 = vrsqrt.pop %v2469
  %v2558 = vmul.f32 %v2557, %v2469
  %v2559 = vmul.f32 %v2558, %v2557
  %v2560 = vmul.f32 0.5, %v2559
  %v2561 = vsub.f32 1.5, %v2560
  %v2562 = vmul.f32 %v2557, %v2561
  %vm2563 = vweird.f32 %v2469
  %vm2564 = vweird.f32 %v2557
  %vm2565 = vmor %vm2563, %vm2564
  %v2566 = vsel %vm2565, %v2557, %v2562
  %v2567 = vrsqrt.pop %v2470
  %v2568 = vmul.f32 %v2567, %v2470
  %v2569 = vmul.f32 %v2568, %v2567
  %v2570 = vmul.f32 0.5, %v2569
  %v2571 = vsub.f32 1.5, %v2570
  %v2572 = vmul.f32 %v2567, %v2571
  %vm2573 = vweird.f32 %v2470
  %vm2574 = vweird.f32 %v2567
  %vm2575 = vmor %vm2573, %vm2574
  %v2576 = vsel %vm2575, %v2567, %v2572
  %v2577 = vrsqrt.pop %v2471
  %v2578 = vmul.f32 %v2577, %v2471
  %v2579 = vmul.f32 %v2578, %v2577
  %v2580 = vmul.f32 0.5, %v2579
  %v2581 = vsub.f32 1.5, %v2580
  %v2582 = vmul.f32 %v2577, %v2581
  %vm2583 = vweird.f32 %v2471
  %vm2584 = vweird.f32 %v2577
  %vm2585 = vmor %vm2583, %vm2584
  %v2586 = vsel %vm2585, %v2577, %v2582
  %v2587 = vrsqrt.pop %v2472
  %v2588 = vmul.f32 %v2587, %v2472
  %v2589 = vmul.f32 %v2588, %v2587
  %v2590 = vmul.f32 0.5, %v2589
  %v2591 = vsub.f32 1.5, %v2590
  %v2592 = vmul.f32 %v2587, %v2591
  %vm2593 = vweird.f32 %v2472
  %vm2594 = vweird.f32 %v2587
  %vm2595 = vmor %vm2593, %vm2594
  %v2596 = vsel %vm2595, %v2587, %v2592
  %v2597 = vrsqrt.pop %v2473
  %v2598 = vmul.f32 %v2597, %v2473
  %v2599 = vmul.f32 %v2598, %v2597
  %v2600 = vmul.f32 0.5, %v2599
  %v2601 = vsub.f32 1.5, %v2600
  %v2602 = vmul.f32 %v2597, %v2601
  %vm2603 = vweird.f32 %v2473
  %vm2604 = vweird.f32 %v2597
  %vm2605 = vmor %vm2603, %vm2604
  %v2606 = vsel %vm2605, %v2597, %v2602
  %v2607 = vrsqrt.pop %v2474
  %v2608 = vmul.f32 %v2607, %v2474
  %v2609 = vmul.f32 %v2608, %v2607
  %v2610 = vmul.f32 0.5, %v2609
  %v2611 = vsub.f32 1.5, %v2610
  %v2612 = vmul.f32 %v2607, %v2611
  %vm2613 = vweird.f32 %v2474
  %vm2614 = vweird.f32 %v2607
  %vm2615 = vmor %vm2613, %vm2614
  %v2616 = vsel %vm2615, %v2607, %v2612
  %v2617 = vrsqrt.pop %v2475
  %v2618 = vmul.f32 %v2617, %v2475
  %v2619 = vmul.f32 %v2618, %v2617
  %v2620 = vmul.f32 0.5, %v2619
  %v2621 = vsub.f32 1.5, %v2620
  %v2622 = vmul.f32 %v2617, %v2621
  %vm2623 = vweird.f32 %v2475
  %vm2624 = vweird.f32 %v2617
  %vm2625 = vmor %vm2623, %vm2624
  %v2626 = vsel %vm2625, %v2617, %v2622
  %v2627 = vrsqrt.pop %v2476
  %v2628 = vmul.f32 %v2627, %v2476
  %v2629 = vmul.f32 %v2628, %v2627
  %v2630 = vmul.f32 0.5, %v2629
  %v2631 = vsub.f32 1.5, %v2630
  %v2632 = vmul.f32 %v2627, %v2631
  %vm2633 = vweird.f32 %v2476
  %vm2634 = vweird.f32 %v2627
  %vm2635 = vmor %vm2633, %vm2634
  %v2636 = vsel %vm2635, %v2627, %v2632
  %v2637 = vmul.f32 %v2365, %v2486
  %v2638 = vmul.f32 %v2366, %v2496
  %v2639 = vmul.f32 %v2367, %v2506
  %v2640 = vmul.f32 %v2368, %v2516
  %v2641 = vmul.f32 %v2369, %v2526
  %v2642 = vmul.f32 %v2370, %v2536
  %v2643 = vmul.f32 %v2371, %v2546
  %v2644 = vmul.f32 %v2372, %v2556
  %v2645 = vmul.f32 %v2373, %v2566
  %v2646 = vmul.f32 %v2374, %v2576
  %v2647 = vmul.f32 %v2375, %v2586
  %v2648 = vmul.f32 %v2376, %v2596
  %v2649 = vmul.f32 %v2377, %v2606
  %v2650 = vmul.f32 %v2378, %v2616
  %v2651 = vmul.f32 %v2379, %v2626
  %v2652 = vmul.f32 %v2380, %v2636
  %v2653 = vperm.slane %v48, 3
  %v2654 = vmul.f32 %v2637, %v2653
  %v2655 = vmul.f32 %v2638, %v2653
  %v2656 = vmul.f32 %v2639, %v2653
  %v2657 = vmul.f32 %v2640, %v2653
  %v2658 = vmul.f32 %v2641, %v2653
  %v2659 = vmul.f32 %v2642, %v2653
  %v2660 = vmul.f32 %v2643, %v2653
  %v2661 = vmul.f32 %v2644, %v2653
  %v2662 = vmul.f32 %v2645, %v2653
  %v2663 = vmul.f32 %v2646, %v2653
  %v2664 = vmul.f32 %v2647, %v2653
  %v2665 = vmul.f32 %v2648, %v2653
  %v2666 = vmul.f32 %v2649, %v2653
  %v2667 = vmul.f32 %v2650, %v2653
  %v2668 = vmul.f32 %v2651, %v2653
  %v2669 = vmul.f32 %v2652, %v2653
  %v2670 = vperm.slane %v48, 4
  %v2671 = vadd.f32 %v2654, %v2670
  %v2672 = vadd.f32 %v2655, %v2670
  %v2673 = vadd.f32 %v2656, %v2670
  %v2674 = vadd.f32 %v2657, %v2670
  %v2675 = vadd.f32 %v2658, %v2670
  %v2676 = vadd.f32 %v2659, %v2670
  %v2677 = vadd.f32 %v2660, %v2670
  %v2678 = vadd.f32 %v2661, %v2670
  %v2679 = vadd.f32 %v2662, %v2670
  %v2680 = vadd.f32 %v2663, %v2670
  %v2681 = vadd.f32 %v2664, %v2670
  %v2682 = vadd.f32 %v2665, %v2670
  %v2683 = vadd.f32 %v2666, %v2670
  %v2684 = vadd.f32 %v2667, %v2670
  %v2685 = vadd.f32 %v2668, %v2670
  %v2686 = vadd.f32 %v2669, %v2670
  %v2687 = vld [vmem:[%s5] sm:$0xff]
  %v2688 = vld [vmem:[%s5 + $0x8] sm:$0xff]
  %v2689 = vld [vmem:[%s5 + $0x10] sm:$0xff]
  %v2690 = vld [vmem:[%s5 + $0x18] sm:$0xff]
  %v2691 = vperm.slane %v48, 1
  %v2693 = vsel %vm87, %v2671, 0
  %v2696 = vsel %vm87, %v2672, 0
  %v2699 = vsel %vm87, %v2673, 0
  %v2702 = vsel %vm87, %v2674, 0
  %v2705 = vsel %vm87, %v2675, 0
  %v2708 = vsel %vm87, %v2676, 0
  %v2711 = vsel %vm87, %v2677, 0
  %v2714 = vsel %vm87, %v2678, 0
  %v2717 = vsel %vm87, %v2679, 0
  %v2720 = vsel %vm87, %v2680, 0
  %v2723 = vsel %vm87, %v2681, 0
  %v2726 = vsel %vm87, %v2682, 0
  %v2729 = vsel %vm87, %v2683, 0
  %v2732 = vsel %vm87, %v2684, 0
  %v2735 = vsel %vm87, %v2685, 0
  %v2738 = vsel %vm87, %v2686, 0
  %2740 = vmatpush.msra.mxu0 0.0
  %2741 = vmatpush.msra.mxu0 0.0
  %2742 = vmatpush.msra.mxu0 0.0
  %2743 = vmatpush.msra.mxu0 0.0
  %2744 = vmatpush.msra.mxu0 0.0
  %2745 = vmatpush.msra.mxu0 0.0
  %2746 = vmatpush.msra.mxu0 0.0
  %2747 = vmatpush.msra.mxu0 0.0
  %2748 = vmatpush.msra.mxu0 0.0
  %2749 = vmatpush.msra.mxu0 0.0
  %2750 = vmatpush.msra.mxu0 0.0
  %2751 = vmatpush.msra.mxu0 0.0
  %2752 = vmatpush.msra.mxu0 %v2690
  %2753 = vmatpush.msra.mxu0 %v2689
  %2754 = vmatpush.msra.mxu0 %v2688
  %2755 = vmatpush.msra.mxu0 %v2687
  %2756 = vmatmul.f32.gmra.mxu0 %v2693
  %v2757 = vpop.f32.mrf.mxu0
  %v2758 = vadd.f32 %v2691, %v2757
  %2759 = vmatmul.f32.gmra.mxu0 %v2696
  %v2760 = vpop.f32.mrf.mxu0
  %v2761 = vadd.f32 %v2691, %v2760
  %2762 = vmatmul.f32.gmra.mxu0 %v2699
  %v2763 = vpop.f32.mrf.mxu0
  %v2764 = vadd.f32 %v2691, %v2763
  %2765 = vmatmul.f32.gmra.mxu0 %v2702
  %v2766 = vpop.f32.mrf.mxu0
  %v2767 = vadd.f32 %v2691, %v2766
  %2768 = vmatmul.f32.gmra.mxu0 %v2705
  %v2769 = vpop.f32.mrf.mxu0
  %v2770 = vadd.f32 %v2691, %v2769
  %2771 = vmatmul.f32.gmra.mxu0 %v2708
  %v2772 = vpop.f32.mrf.mxu0
  %v2773 = vadd.f32 %v2691, %v2772
  %2774 = vmatmul.f32.gmra.mxu0 %v2711
  %v2775 = vpop.f32.mrf.mxu0
  %v2776 = vadd.f32 %v2691, %v2775
  %2777 = vmatmul.f32.gmra.mxu0 %v2714
  %v2778 = vpop.f32.mrf.mxu0
  %v2779 = vadd.f32 %v2691, %v2778
  %2780 = vmatmul.f32.gmra.mxu0 %v2717
  %v2781 = vpop.f32.mrf.mxu0
  %v2782 = vadd.f32 %v2691, %v2781
  %2783 = vmatmul.f32.gmra.mxu0 %v2720
  %v2784 = vpop.f32.mrf.mxu0
  %v2785 = vadd.f32 %v2691, %v2784
  %2786 = vmatmul.f32.gmra.mxu0 %v2723
  %v2787 = vpop.f32.mrf.mxu0
  %v2788 = vadd.f32 %v2691, %v2787
  %2789 = vmatmul.f32.gmra.mxu0 %v2726
  %v2790 = vpop.f32.mrf.mxu0
  %v2791 = vadd.f32 %v2691, %v2790
  %2792 = vmatmul.f32.gmra.mxu0 %v2729
  %v2793 = vpop.f32.mrf.mxu0
  %v2794 = vadd.f32 %v2691, %v2793
  %2795 = vmatmul.f32.gmra.mxu0 %v2732
  %v2796 = vpop.f32.mrf.mxu0
  %v2797 = vadd.f32 %v2691, %v2796
  %2798 = vmatmul.f32.gmra.mxu0 %v2735
  %v2799 = vpop.f32.mrf.mxu0
  %v2800 = vadd.f32 %v2691, %v2799
  %2801 = vmatmul.f32.gmra.mxu0 %v2738
  %v2802 = vpop.f32.mrf.mxu0
  %v2803 = vadd.f32 %v2691, %v2802
  %2804 = vdwg.mxu0
  %v2805 = vmul.f32 %v2758, 0.5
  %v2806 = vmul.f32 %v2761, 0.5
  %v2807 = vmul.f32 %v2764, 0.5
  %v2808 = vmul.f32 %v2767, 0.5
  %v2809 = vmul.f32 %v2770, 0.5
  %v2810 = vmul.f32 %v2773, 0.5
  %v2811 = vmul.f32 %v2776, 0.5
  %v2812 = vmul.f32 %v2779, 0.5
  %v2813 = vmul.f32 %v2782, 0.5
  %v2814 = vmul.f32 %v2785, 0.5
  %v2815 = vmul.f32 %v2788, 0.5
  %v2816 = vmul.f32 %v2791, 0.5
  %v2817 = vmul.f32 %v2794, 0.5
  %v2818 = vmul.f32 %v2797, 0.5
  %v2819 = vmul.f32 %v2800, 0.5
  %v2820 = vmul.f32 %v2803, 0.5
  %v2821 = vmul.f32 %v2758, 0.044715
  %v2822 = vmul.f32 %v2761, 0.044715
  %v2823 = vmul.f32 %v2764, 0.044715
  %v2824 = vmul.f32 %v2767, 0.044715
  %v2825 = vmul.f32 %v2770, 0.044715
  %v2826 = vmul.f32 %v2773, 0.044715
  %v2827 = vmul.f32 %v2776, 0.044715
  %v2828 = vmul.f32 %v2779, 0.044715
  %v2829 = vmul.f32 %v2782, 0.044715
  %v2830 = vmul.f32 %v2785, 0.044715
  %v2831 = vmul.f32 %v2788, 0.044715
  %v2832 = vmul.f32 %v2791, 0.044715
  %v2833 = vmul.f32 %v2794, 0.044715
  %v2834 = vmul.f32 %v2797, 0.044715
  %v2835 = vmul.f32 %v2800, 0.044715
  %v2836 = vmul.f32 %v2803, 0.044715
  %v2837 = vmul.f32 %v2821, %v2758
  %v2838 = vmul.f32 %v2822, %v2761
  %v2839 = vmul.f32 %v2823, %v2764
  %v2840 = vmul.f32 %v2824, %v2767
  %v2841 = vmul.f32 %v2825, %v2770
  %v2842 = vmul.f32 %v2826, %v2773
  %v2843 = vmul.f32 %v2827, %v2776
  %v2844 = vmul.f32 %v2828, %v2779
  %v2845 = vmul.f32 %v2829, %v2782
  %v2846 = vmul.f32 %v2830, %v2785
  %v2847 = vmul.f32 %v2831, %v2788
  %v2848 = vmul.f32 %v2832, %v2791
  %v2849 = vmul.f32 %v2833, %v2794
  %v2850 = vmul.f32 %v2834, %v2797
  %v2851 = vmul.f32 %v2835, %v2800
  %v2852 = vmul.f32 %v2836, %v2803
  %v2853 = vmul.f32 %v2837, %v2758
  %v2854 = vmul.f32 %v2838, %v2761
  %v2855 = vmul.f32 %v2839, %v2764
  %v2856 = vmul.f32 %v2840, %v2767
  %v2857 = vmul.f32 %v2841, %v2770
  %v2858 = vmul.f32 %v2842, %v2773
  %v2859 = vmul.f32 %v2843, %v2776
  %v2860 = vmul.f32 %v2844, %v2779
  %v2861 = vmul.f32 %v2845, %v2782
  %v2862 = vmul.f32 %v2846, %v2785
  %v2863 = vmul.f32 %v2847, %v2788
  %v2864 = vmul.f32 %v2848, %v2791
  %v2865 = vmul.f32 %v2849, %v2794
  %v2866 = vmul.f32 %v2850, %v2797
  %v2867 = vmul.f32 %v2851, %v2800
  %v2868 = vmul.f32 %v2852, %v2803
  %v2869 = vadd.f32 %v2758, %v2853
  %v2870 = vadd.f32 %v2761, %v2854
  %v2871 = vadd.f32 %v2764, %v2855
  %v2872 = vadd.f32 %v2767, %v2856
  %v2873 = vadd.f32 %v2770, %v2857
  %v2874 = vadd.f32 %v2773, %v2858
  %v2875 = vadd.f32 %v2776, %v2859
  %v2876 = vadd.f32 %v2779, %v2860
  %v2877 = vadd.f32 %v2782, %v2861
  %v2878 = vadd.f32 %v2785, %v2862
  %v2879 = vadd.f32 %v2788, %v2863
  %v2880 = vadd.f32 %v2791, %v2864
  %v2881 = vadd.f32 %v2794, %v2865
  %v2882 = vadd.f32 %v2797, %v2866
  %v2883 = vadd.f32 %v2800, %v2867
  %v2884 = vadd.f32 %v2803, %v2868
  %v2885 = vmul.f32 %v2869, 0.7978846
  %v2886 = vmul.f32 %v2870, 0.7978846
  %v2887 = vmul.f32 %v2871, 0.7978846
  %v2888 = vmul.f32 %v2872, 0.7978846
  %v2889 = vmul.f32 %v2873, 0.7978846
  %v2890 = vmul.f32 %v2874, 0.7978846
  %v2891 = vmul.f32 %v2875, 0.7978846
  %v2892 = vmul.f32 %v2876, 0.7978846
  %v2893 = vmul.f32 %v2877, 0.7978846
  %v2894 = vmul.f32 %v2878, 0.7978846
  %v2895 = vmul.f32 %v2879, 0.7978846
  %v2896 = vmul.f32 %v2880, 0.7978846
  %v2897 = vmul.f32 %v2881, 0.7978846
  %v2898 = vmul.f32 %v2882, 0.7978846
  %v2899 = vmul.f32 %v2883, 0.7978846
  %v2900 = vmul.f32 %v2884, 0.7978846
  %v2901 = vtanh.pop %v2885
  %v2902 = vtanh.pop %v2886
  %v2903 = vtanh.pop %v2887
  %v2904 = vtanh.pop %v2888
  %v2905 = vtanh.pop %v2889
  %v2906 = vtanh.pop %v2890
  %v2907 = vtanh.pop %v2891
  %v2908 = vtanh.pop %v2892
  %v2909 = vtanh.pop %v2893
  %v2910 = vtanh.pop %v2894
  %v2911 = vtanh.pop %v2895
  %v2912 = vtanh.pop %v2896
  %v2913 = vtanh.pop %v2897
  %v2914 = vtanh.pop %v2898
  %v2915 = vtanh.pop %v2899
  %v2916 = vtanh.pop %v2900
  %v2917 = vadd.f32 %v2901, 1.0
  %v2918 = vadd.f32 %v2902, 1.0
  %v2919 = vadd.f32 %v2903, 1.0
  %v2920 = vadd.f32 %v2904, 1.0
  %v2921 = vadd.f32 %v2905, 1.0
  %v2922 = vadd.f32 %v2906, 1.0
  %v2923 = vadd.f32 %v2907, 1.0
  %v2924 = vadd.f32 %v2908, 1.0
  %v2925 = vadd.f32 %v2909, 1.0
  %v2926 = vadd.f32 %v2910, 1.0
  %v2927 = vadd.f32 %v2911, 1.0
  %v2928 = vadd.f32 %v2912, 1.0
  %v2929 = vadd.f32 %v2913, 1.0
  %v2930 = vadd.f32 %v2914, 1.0
  %v2931 = vadd.f32 %v2915, 1.0
  %v2932 = vadd.f32 %v2916, 1.0
  %v2933 = vmul.f32 %v2805, %v2917
  %v2934 = vmul.f32 %v2806, %v2918
  %v2935 = vmul.f32 %v2807, %v2919
  %v2936 = vmul.f32 %v2808, %v2920
  %v2937 = vmul.f32 %v2809, %v2921
  %v2938 = vmul.f32 %v2810, %v2922
  %v2939 = vmul.f32 %v2811, %v2923
  %v2940 = vmul.f32 %v2812, %v2924
  %v2941 = vmul.f32 %v2813, %v2925
  %v2942 = vmul.f32 %v2814, %v2926
  %v2943 = vmul.f32 %v2815, %v2927
  %v2944 = vmul.f32 %v2816, %v2928
  %v2945 = vmul.f32 %v2817, %v2929
  %v2946 = vmul.f32 %v2818, %v2930
  %v2947 = vmul.f32 %v2819, %v2931
  %v2948 = vmul.f32 %v2820, %v2932
  %v2949 = vld [vmem:[%s6] sm:$0xff]
  %v2950 = vld [vmem:[%s6 + $0x8] sm:$0xff]
  %v2951 = vld [vmem:[%s6 + $0x10] sm:$0xff]
  %v2952 = vld [vmem:[%s6 + $0x18] sm:$0xff]
  %v2953 = vld [vmem:[%s6 + $0x20] sm:$0xff]
  %v2954 = vld [vmem:[%s6 + $0x28] sm:$0xff]
  %v2955 = vld [vmem:[%s6 + $0x30] sm:$0xff]
  %v2956 = vld [vmem:[%s6 + $0x38] sm:$0xff]
  %v2957 = vperm.slane %v48, 5
  %v2959 = vsel %vm483, %v2933, 0
  %v2962 = vsel %vm483, %v2934, 0
  %v2965 = vsel %vm483, %v2935, 0
  %v2968 = vsel %vm483, %v2936, 0
  %v2971 = vsel %vm483, %v2937, 0
  %v2974 = vsel %vm483, %v2938, 0
  %v2977 = vsel %vm483, %v2939, 0
  %v2980 = vsel %vm483, %v2940, 0
  %v2983 = vsel %vm483, %v2941, 0
  %v2986 = vsel %vm483, %v2942, 0
  %v2989 = vsel %vm483, %v2943, 0
  %v2992 = vsel %vm483, %v2944, 0
  %v2995 = vsel %vm483, %v2945, 0
  %v2998 = vsel %vm483, %v2946, 0
  %v3001 = vsel %vm483, %v2947, 0
  %v3004 = vsel %vm483, %v2948, 0
  %3006 = vmatpush.msra.mxu0 0.0
  %3007 = vmatpush.msra.mxu0 0.0
  %3008 = vmatpush.msra.mxu0 0.0
  %3009 = vmatpush.msra.mxu0 0.0
  %3010 = vmatpush.msra.mxu0 0.0
  %3011 = vmatpush.msra.mxu0 0.0
  %3012 = vmatpush.msra.mxu0 0.0
  %3013 = vmatpush.msra.mxu0 0.0
  %3014 = vmatpush.msra.mxu0 %v2956
  %3015 = vmatpush.msra.mxu0 %v2955
  %3016 = vmatpush.msra.mxu0 %v2954
  %3017 = vmatpush.msra.mxu0 %v2953
  %3018 = vmatpush.msra.mxu0 %v2952
  %3019 = vmatpush.msra.mxu0 %v2951
  %3020 = vmatpush.msra.mxu0 %v2950
  %3021 = vmatpush.msra.mxu0 %v2949
  %3022 = vmatmul.f32.gmra.mxu0 %v2959
  %v3023 = vpop.f32.mrf.mxu0
  %v3024 = vadd.f32 %v2957, %v3023
  %3025 = vmatmul.f32.gmra.mxu0 %v2962
  %v3026 = vpop.f32.mrf.mxu0
  %v3027 = vadd.f32 %v2957, %v3026
  %3028 = vmatmul.f32.gmra.mxu0 %v2965
  %v3029 = vpop.f32.mrf.mxu0
  %v3030 = vadd.f32 %v2957, %v3029
  %3031 = vmatmul.f32.gmra.mxu0 %v2968
  %v3032 = vpop.f32.mrf.mxu0
  %v3033 = vadd.f32 %v2957, %v3032
  %3034 = vmatmul.f32.gmra.mxu0 %v2971
  %v3035 = vpop.f32.mrf.mxu0
  %v3036 = vadd.f32 %v2957, %v3035
  %3037 = vmatmul.f32.gmra.mxu0 %v2974
  %v3038 = vpop.f32.mrf.mxu0
  %v3039 = vadd.f32 %v2957, %v3038
  %3040 = vmatmul.f32.gmra.mxu0 %v2977
  %v3041 = vpop.f32.mrf.mxu0
  %v3042 = vadd.f32 %v2957, %v3041
  %3043 = vmatmul.f32.gmra.mxu0 %v2980
  %v3044 = vpop.f32.mrf.mxu0
  %v3045 = vadd.f32 %v2957, %v3044
  %3046 = vmatmul.f32.gmra.mxu0 %v2983
  %v3047 = vpop.f32.mrf.mxu0
  %v3048 = vadd.f32 %v2957, %v3047
  %3049 = vmatmul.f32.gmra.mxu0 %v2986
  %v3050 = vpop.f32.mrf.mxu0
  %v3051 = vadd.f32 %v2957, %v3050
  %3052 = vmatmul.f32.gmra.mxu0 %v2989
  %v3053 = vpop.f32.mrf.mxu0
  %v3054 = vadd.f32 %v2957, %v3053
  %3055 = vmatmul.f32.gmra.mxu0 %v2992
  %v3056 = vpop.f32.mrf.mxu0
  %v3057 = vadd.f32 %v2957, %v3056
  %3058 = vmatmul.f32.gmra.mxu0 %v2995
  %v3059 = vpop.f32.mrf.mxu0
  %v3060 = vadd.f32 %v2957, %v3059
  %3061 = vmatmul.f32.gmra.mxu0 %v2998
  %v3062 = vpop.f32.mrf.mxu0
  %v3063 = vadd.f32 %v2957, %v3062
  %3064 = vmatmul.f32.gmra.mxu0 %v3001
  %v3065 = vpop.f32.mrf.mxu0
  %v3066 = vadd.f32 %v2957, %v3065
  %3067 = vmatmul.f32.gmra.mxu0 %v3004
  %v3068 = vpop.f32.mrf.mxu0
  %v3069 = vadd.f32 %v2957, %v3068
  %3070 = vdwg.mxu0
  %v3071 = vadd.f32 %v2671, %v3024
  %v3072 = vadd.f32 %v2672, %v3027
  %v3073 = vadd.f32 %v2673, %v3030
  %v3074 = vadd.f32 %v2674, %v3033
  %v3075 = vadd.f32 %v2675, %v3036
  %v3076 = vadd.f32 %v2676, %v3039
  %v3077 = vadd.f32 %v2677, %v3042
  %v3078 = vadd.f32 %v2678, %v3045
  %v3079 = vadd.f32 %v2679, %v3048
  %v3080 = vadd.f32 %v2680, %v3051
  %v3081 = vadd.f32 %v2681, %v3054
  %v3082 = vadd.f32 %v2682, %v3057
  %v3083 = vadd.f32 %v2683, %v3060
  %v3084 = vadd.f32 %v2684, %v3063
  %v3085 = vadd.f32 %v2685, %v3066
  %v3086 = vadd.f32 %v2686, %v3069
  %v3087 = vsel %vm87, %v3071, 0.0
  %3088 = vadd.xlane.f32.xlu0 %v3087
  %v3089 = vpop.xlane.xlu0 %3088
  %v3090 = vsel %vm87, %v3072, 0.0
  %3091 = vadd.xlane.f32.xlu0 %v3090
  %v3092 = vpop.xlane.xlu0 %3091
  %v3093 = vsel %vm87, %v3073, 0.0
  %3094 = vadd.xlane.f32.xlu0 %v3093
  %v3095 = vpop.xlane.xlu0 %3094
  %v3096 = vsel %vm87, %v3074, 0.0
  %3097 = vadd.xlane.f32.xlu0 %v3096
  %v3098 = vpop.xlane.xlu0 %3097
  %v3099 = vsel %vm87, %v3075, 0.0
  %3100 = vadd.xlane.f32.xlu0 %v3099
  %v3101 = vpop.xlane.xlu0 %3100
  %v3102 = vsel %vm87, %v3076, 0.0
  %3103 = vadd.xlane.f32.xlu0 %v3102
  %v3104 = vpop.xlane.xlu0 %3103
  %v3105 = vsel %vm87, %v3077, 0.0
  %3106 = vadd.xlane.f32.xlu0 %v3105
  %v3107 = vpop.xlane.xlu0 %3106
  %v3108 = vsel %vm87, %v3078, 0.0
  %3109 = vadd.xlane.f32.xlu0 %v3108
  %v3110 = vpop.xlane.xlu0 %3109
  %v3111 = vsel %vm87, %v3079, 0.0
  %3112 = vadd.xlane.f32.xlu0 %v3111
  %v3113 = vpop.xlane.xlu0 %3112
  %v3114 = vsel %vm87, %v3080, 0.0
  %3115 = vadd.xlane.f32.xlu0 %v3114
  %v3116 = vpop.xlane.xlu0 %3115
  %v3117 = vsel %vm87, %v3081, 0.0
  %3118 = vadd.xlane.f32.xlu0 %v3117
  %v3119 = vpop.xlane.xlu0 %3118
  %v3120 = vsel %vm87, %v3082, 0.0
  %3121 = vadd.xlane.f32.xlu0 %v3120
  %v3122 = vpop.xlane.xlu0 %3121
  %v3123 = vsel %vm87, %v3083, 0.0
  %3124 = vadd.xlane.f32.xlu0 %v3123
  %v3125 = vpop.xlane.xlu0 %3124
  %v3126 = vsel %vm87, %v3084, 0.0
  %3127 = vadd.xlane.f32.xlu0 %v3126
  %v3128 = vpop.xlane.xlu0 %3127
  %v3129 = vsel %vm87, %v3085, 0.0
  %3130 = vadd.xlane.f32.xlu0 %v3129
  %v3131 = vpop.xlane.xlu0 %3130
  %v3132 = vsel %vm87, %v3086, 0.0
  %3133 = vadd.xlane.f32.xlu0 %v3132
  %v3134 = vpop.xlane.xlu0 %3133
  %v3135 = vmul.f32 %v3089, %v2348
  %v3136 = vmul.f32 %v3092, %v2348
  %v3137 = vmul.f32 %v3095, %v2348
  %v3138 = vmul.f32 %v3098, %v2348
  %v3139 = vmul.f32 %v3101, %v2348
  %v3140 = vmul.f32 %v3104, %v2348
  %v3141 = vmul.f32 %v3107, %v2348
  %v3142 = vmul.f32 %v3110, %v2348
  %v3143 = vmul.f32 %v3113, %v2348
  %v3144 = vmul.f32 %v3116, %v2348
  %v3145 = vmul.f32 %v3119, %v2348
  %v3146 = vmul.f32 %v3122, %v2348
  %v3147 = vmul.f32 %v3125, %v2348
  %v3148 = vmul.f32 %v3128, %v2348
  %v3149 = vmul.f32 %v3131, %v2348
  %v3150 = vmul.f32 %v3134, %v2348
  %v3151 = vsub.f32 %v3071, %v3135
  %v3152 = vsub.f32 %v3072, %v3136
  %v3153 = vsub.f32 %v3073, %v3137
  %v3154 = vsub.f32 %v3074, %v3138
  %v3155 = vsub.f32 %v3075, %v3139
  %v3156 = vsub.f32 %v3076, %v3140
  %v3157 = vsub.f32 %v3077, %v3141
  %v3158 = vsub.f32 %v3078, %v3142
  %v3159 = vsub.f32 %v3079, %v3143
  %v3160 = vsub.f32 %v3080, %v3144
  %v3161 = vsub.f32 %v3081, %v3145
  %v3162 = vsub.f32 %v3082, %v3146
  %v3163 = vsub.f32 %v3083, %v3147
  %v3164 = vsub.f32 %v3084, %v3148
  %v3165 = vsub.f32 %v3085, %v3149
  %v3166 = vsub.f32 %v3086, %v3150
  %v3167 = vmul.f32 %v3151, %v3151
  %v3168 = vmul.f32 %v3152, %v3152
  %v3169 = vmul.f32 %v3153, %v3153
  %v3170 = vmul.f32 %v3154, %v3154
  %v3171 = vmul.f32 %v3155, %v3155
  %v3172 = vmul.f32 %v3156, %v3156
  %v3173 = vmul.f32 %v3157, %v3157
  %v3174 = vmul.f32 %v3158, %v3158
  %v3175 = vmul.f32 %v3159, %v3159
  %v3176 = vmul.f32 %v3160, %v3160
  %v3177 = vmul.f32 %v3161, %v3161
  %v3178 = vmul.f32 %v3162, %v3162
  %v3179 = vmul.f32 %v3163, %v3163
  %v3180 = vmul.f32 %v3164, %v3164
  %v3181 = vmul.f32 %v3165, %v3165
  %v3182 = vmul.f32 %v3166, %v3166
  %v3183 = vsel %vm87, %v3167, 0.0
  %3184 = vadd.xlane.f32.xlu0 %v3183
  %v3185 = vpop.xlane.xlu0 %3184
  %v3186 = vsel %vm87, %v3168, 0.0
  %3187 = vadd.xlane.f32.xlu0 %v3186
  %v3188 = vpop.xlane.xlu0 %3187
  %v3189 = vsel %vm87, %v3169, 0.0
  %3190 = vadd.xlane.f32.xlu0 %v3189
  %v3191 = vpop.xlane.xlu0 %3190
  %v3192 = vsel %vm87, %v3170, 0.0
  %3193 = vadd.xlane.f32.xlu0 %v3192
  %v3194 = vpop.xlane.xlu0 %3193
  %v3195 = vsel %vm87, %v3171, 0.0
  %3196 = vadd.xlane.f32.xlu0 %v3195
  %v3197 = vpop.xlane.xlu0 %3196
  %v3198 = vsel %vm87, %v3172, 0.0
  %3199 = vadd.xlane.f32.xlu0 %v3198
  %v3200 = vpop.xlane.xlu0 %3199
  %v3201 = vsel %vm87, %v3173, 0.0
  %3202 = vadd.xlane.f32.xlu0 %v3201
  %v3203 = vpop.xlane.xlu0 %3202
  %v3204 = vsel %vm87, %v3174, 0.0
  %3205 = vadd.xlane.f32.xlu0 %v3204
  %v3206 = vpop.xlane.xlu0 %3205
  %v3207 = vsel %vm87, %v3175, 0.0
  %3208 = vadd.xlane.f32.xlu0 %v3207
  %v3209 = vpop.xlane.xlu0 %3208
  %v3210 = vsel %vm87, %v3176, 0.0
  %3211 = vadd.xlane.f32.xlu0 %v3210
  %v3212 = vpop.xlane.xlu0 %3211
  %v3213 = vsel %vm87, %v3177, 0.0
  %3214 = vadd.xlane.f32.xlu0 %v3213
  %v3215 = vpop.xlane.xlu0 %3214
  %v3216 = vsel %vm87, %v3178, 0.0
  %3217 = vadd.xlane.f32.xlu0 %v3216
  %v3218 = vpop.xlane.xlu0 %3217
  %v3219 = vsel %vm87, %v3179, 0.0
  %3220 = vadd.xlane.f32.xlu0 %v3219
  %v3221 = vpop.xlane.xlu0 %3220
  %v3222 = vsel %vm87, %v3180, 0.0
  %3223 = vadd.xlane.f32.xlu0 %v3222
  %v3224 = vpop.xlane.xlu0 %3223
  %v3225 = vsel %vm87, %v3181, 0.0
  %3226 = vadd.xlane.f32.xlu0 %v3225
  %v3227 = vpop.xlane.xlu0 %3226
  %v3228 = vsel %vm87, %v3182, 0.0
  %3229 = vadd.xlane.f32.xlu0 %v3228
  %v3230 = vpop.xlane.xlu0 %3229
  %v3231 = vmul.f32 %v3185, %v2348
  %v3232 = vmul.f32 %v3188, %v2348
  %v3233 = vmul.f32 %v3191, %v2348
  %v3234 = vmul.f32 %v3194, %v2348
  %v3235 = vmul.f32 %v3197, %v2348
  %v3236 = vmul.f32 %v3200, %v2348
  %v3237 = vmul.f32 %v3203, %v2348
  %v3238 = vmul.f32 %v3206, %v2348
  %v3239 = vmul.f32 %v3209, %v2348
  %v3240 = vmul.f32 %v3212, %v2348
  %v3241 = vmul.f32 %v3215, %v2348
  %v3242 = vmul.f32 %v3218, %v2348
  %v3243 = vmul.f32 %v3221, %v2348
  %v3244 = vmul.f32 %v3224, %v2348
  %v3245 = vmul.f32 %v3227, %v2348
  %v3246 = vmul.f32 %v3230, %v2348
  %v3247 = vadd.f32 %v3231, 1e-05
  %v3248 = vadd.f32 %v3232, 1e-05
  %v3249 = vadd.f32 %v3233, 1e-05
  %v3250 = vadd.f32 %v3234, 1e-05
  %v3251 = vadd.f32 %v3235, 1e-05
  %v3252 = vadd.f32 %v3236, 1e-05
  %v3253 = vadd.f32 %v3237, 1e-05
  %v3254 = vadd.f32 %v3238, 1e-05
  %v3255 = vadd.f32 %v3239, 1e-05
  %v3256 = vadd.f32 %v3240, 1e-05
  %v3257 = vadd.f32 %v3241, 1e-05
  %v3258 = vadd.f32 %v3242, 1e-05
  %v3259 = vadd.f32 %v3243, 1e-05
  %v3260 = vadd.f32 %v3244, 1e-05
  %v3261 = vadd.f32 %v3245, 1e-05
  %v3262 = vadd.f32 %v3246, 1e-05
  %v3263 = vrsqrt.pop %v3247
  %v3264 = vmul.f32 %v3263, %v3247
  %v3265 = vmul.f32 %v3264, %v3263
  %v3266 = vmul.f32 0.5, %v3265
  %v3267 = vsub.f32 1.5, %v3266
  %v3268 = vmul.f32 %v3263, %v3267
  %vm3269 = vweird.f32 %v3247
  %vm3270 = vweird.f32 %v3263
  %vm3271 = vmor %vm3269, %vm3270
  %v3272 = vsel %vm3271, %v3263, %v3268
  %v3273 = vrsqrt.pop %v3248
  %v3274 = vmul.f32 %v3273, %v3248
  %v3275 = vmul.f32 %v3274, %v3273
  %v3276 = vmul.f32 0.5, %v3275
  %v3277 = vsub.f32 1.5, %v3276
  %v3278 = vmul.f32 %v3273, %v3277
  %vm3279 = vweird.f32 %v3248
  %vm3280 = vweird.f32 %v3273
  %vm3281 = vmor %vm3279, %vm3280
  %v3282 = vsel %vm3281, %v3273, %v3278
  %v3283 = vrsqrt.pop %v3249
  %v3284 = vmul.f32 %v3283, %v3249
  %v3285 = vmul.f32 %v3284, %v3283
  %v3286 = vmul.f32 0.5, %v3285
  %v3287 = vsub.f32 1.5, %v3286
  %v3288 = vmul.f32 %v3283, %v3287
  %vm3289 = vweird.f32 %v3249
  %vm3290 = vweird.f32 %v3283
  %vm3291 = vmor %vm3289, %vm3290
  %v3292 = vsel %vm3291, %v3283, %v3288
  %v3293 = vrsqrt.pop %v3250
  %v3294 = vmul.f32 %v3293, %v3250
  %v3295 = vmul.f32 %v3294, %v3293
  %v3296 = vmul.f32 0.5, %v3295
  %v3297 = vsub.f32 1.5, %v3296
  %v3298 = vmul.f32 %v3293, %v3297
  %vm3299 = vweird.f32 %v3250
  %vm3300 = vweird.f32 %v3293
  %vm3301 = vmor %vm3299, %vm3300
  %v3302 = vsel %vm3301, %v3293, %v3298
  %v3303 = vrsqrt.pop %v3251
  %v3304 = vmul.f32 %v3303, %v3251
  %v3305 = vmul.f32 %v3304, %v3303
  %v3306 = vmul.f32 0.5, %v3305
  %v3307 = vsub.f32 1.5, %v3306
  %v3308 = vmul.f32 %v3303, %v3307
  %vm3309 = vweird.f32 %v3251
  %vm3310 = vweird.f32 %v3303
  %vm3311 = vmor %vm3309, %vm3310
  %v3312 = vsel %vm3311, %v3303, %v3308
  %v3313 = vrsqrt.pop %v3252
  %v3314 = vmul.f32 %v3313, %v3252
  %v3315 = vmul.f32 %v3314, %v3313
  %v3316 = vmul.f32 0.5, %v3315
  %v3317 = vsub.f32 1.5, %v3316
  %v3318 = vmul.f32 %v3313, %v3317
  %vm3319 = vweird.f32 %v3252
  %vm3320 = vweird.f32 %v3313
  %vm3321 = vmor %vm3319, %vm3320
  %v3322 = vsel %vm3321, %v3313, %v3318
  %v3323 = vrsqrt.pop %v3253
  %v3324 = vmul.f32 %v3323, %v3253
  %v3325 = vmul.f32 %v3324, %v3323
  %v3326 = vmul.f32 0.5, %v3325
  %v3327 = vsub.f32 1.5, %v3326
  %v3328 = vmul.f32 %v3323, %v3327
  %vm3329 = vweird.f32 %v3253
  %vm3330 = vweird.f32 %v3323
  %vm3331 = vmor %vm3329, %vm3330
  %v3332 = vsel %vm3331, %v3323, %v3328
  %v3333 = vrsqrt.pop %v3254
  %v3334 = vmul.f32 %v3333, %v3254
  %v3335 = vmul.f32 %v3334, %v3333
  %v3336 = vmul.f32 0.5, %v3335
  %v3337 = vsub.f32 1.5, %v3336
  %v3338 = vmul.f32 %v3333, %v3337
  %vm3339 = vweird.f32 %v3254
  %vm3340 = vweird.f32 %v3333
  %vm3341 = vmor %vm3339, %vm3340
  %v3342 = vsel %vm3341, %v3333, %v3338
  %v3343 = vrsqrt.pop %v3255
  %v3344 = vmul.f32 %v3343, %v3255
  %v3345 = vmul.f32 %v3344, %v3343
  %v3346 = vmul.f32 0.5, %v3345
  %v3347 = vsub.f32 1.5, %v3346
  %v3348 = vmul.f32 %v3343, %v3347
  %vm3349 = vweird.f32 %v3255
  %vm3350 = vweird.f32 %v3343
  %vm3351 = vmor %vm3349, %vm3350
  %v3352 = vsel %vm3351, %v3343, %v3348
  %v3353 = vrsqrt.pop %v3256
  %v3354 = vmul.f32 %v3353, %v3256
  %v3355 = vmul.f32 %v3354, %v3353
  %v3356 = vmul.f32 0.5, %v3355
  %v3357 = vsub.f32 1.5, %v3356
  %v3358 = vmul.f32 %v3353, %v3357
  %vm3359 = vweird.f32 %v3256
  %vm3360 = vweird.f32 %v3353
  %vm3361 = vmor %vm3359, %vm3360
  %v3362 = vsel %vm3361, %v3353, %v3358
  %v3363 = vrsqrt.pop %v3257
  %v3364 = vmul.f32 %v3363, %v3257
  %v3365 = vmul.f32 %v3364, %v3363
  %v3366 = vmul.f32 0.5, %v3365
  %v3367 = vsub.f32 1.5, %v3366
  %v3368 = vmul.f32 %v3363, %v3367
  %vm3369 = vweird.f32 %v3257
  %vm3370 = vweird.f32 %v3363
  %vm3371 = vmor %vm3369, %vm3370
  %v3372 = vsel %vm3371, %v3363, %v3368
  %v3373 = vrsqrt.pop %v3258
  %v3374 = vmul.f32 %v3373, %v3258
  %v3375 = vmul.f32 %v3374, %v3373
  %v3376 = vmul.f32 0.5, %v3375
  %v3377 = vsub.f32 1.5, %v3376
  %v3378 = vmul.f32 %v3373, %v3377
  %vm3379 = vweird.f32 %v3258
  %vm3380 = vweird.f32 %v3373
  %vm3381 = vmor %vm3379, %vm3380
  %v3382 = vsel %vm3381, %v3373, %v3378
  %v3383 = vrsqrt.pop %v3259
  %v3384 = vmul.f32 %v3383, %v3259
  %v3385 = vmul.f32 %v3384, %v3383
  %v3386 = vmul.f32 0.5, %v3385
  %v3387 = vsub.f32 1.5, %v3386
  %v3388 = vmul.f32 %v3383, %v3387
  %vm3389 = vweird.f32 %v3259
  %vm3390 = vweird.f32 %v3383
  %vm3391 = vmor %vm3389, %vm3390
  %v3392 = vsel %vm3391, %v3383, %v3388
  %v3393 = vrsqrt.pop %v3260
  %v3394 = vmul.f32 %v3393, %v3260
  %v3395 = vmul.f32 %v3394, %v3393
  %v3396 = vmul.f32 0.5, %v3395
  %v3397 = vsub.f32 1.5, %v3396
  %v3398 = vmul.f32 %v3393, %v3397
  %vm3399 = vweird.f32 %v3260
  %vm3400 = vweird.f32 %v3393
  %vm3401 = vmor %vm3399, %vm3400
  %v3402 = vsel %vm3401, %v3393, %v3398
  %v3403 = vrsqrt.pop %v3261
  %v3404 = vmul.f32 %v3403, %v3261
  %v3405 = vmul.f32 %v3404, %v3403
  %v3406 = vmul.f32 0.5, %v3405
  %v3407 = vsub.f32 1.5, %v3406
  %v3408 = vmul.f32 %v3403, %v3407
  %vm3409 = vweird.f32 %v3261
  %vm3410 = vweird.f32 %v3403
  %vm3411 = vmor %vm3409, %vm3410
  %v3412 = vsel %vm3411, %v3403, %v3408
  %v3413 = vrsqrt.pop %v3262
  %v3414 = vmul.f32 %v3413, %v3262
  %v3415 = vmul.f32 %v3414, %v3413
  %v3416 = vmul.f32 0.5, %v3415
  %v3417 = vsub.f32 1.5, %v3416
  %v3418 = vmul.f32 %v3413, %v3417
  %vm3419 = vweird.f32 %v3262
  %vm3420 = vweird.f32 %v3413
  %vm3421 = vmor %vm3419, %vm3420
  %v3422 = vsel %vm3421, %v3413, %v3418
  %v3423 = vmul.f32 %v3151, %v3272
  %v3424 = vmul.f32 %v3152, %v3282
  %v3425 = vmul.f32 %v3153, %v3292
  %v3426 = vmul.f32 %v3154, %v3302
  %v3427 = vmul.f32 %v3155, %v3312
  %v3428 = vmul.f32 %v3156, %v3322
  %v3429 = vmul.f32 %v3157, %v3332
  %v3430 = vmul.f32 %v3158, %v3342
  %v3431 = vmul.f32 %v3159, %v3352
  %v3432 = vmul.f32 %v3160, %v3362
  %v3433 = vmul.f32 %v3161, %v3372
  %v3434 = vmul.f32 %v3162, %v3382
  %v3435 = vmul.f32 %v3163, %v3392
  %v3436 = vmul.f32 %v3164, %v3402
  %v3437 = vmul.f32 %v3165, %v3412
  %v3438 = vmul.f32 %v3166, %v3422
  %v3439 = vperm.slane %v48, 6
  %v3440 = vmul.f32 %v3423, %v3439
  %v3441 = vmul.f32 %v3424, %v3439
  %v3442 = vmul.f32 %v3425, %v3439
  %v3443 = vmul.f32 %v3426, %v3439
  %v3444 = vmul.f32 %v3427, %v3439
  %v3445 = vmul.f32 %v3428, %v3439
  %v3446 = vmul.f32 %v3429, %v3439
  %v3447 = vmul.f32 %v3430, %v3439
  %v3448 = vmul.f32 %v3431, %v3439
  %v3449 = vmul.f32 %v3432, %v3439
  %v3450 = vmul.f32 %v3433, %v3439
  %v3451 = vmul.f32 %v3434, %v3439
  %v3452 = vmul.f32 %v3435, %v3439
  %v3453 = vmul.f32 %v3436, %v3439
  %v3454 = vmul.f32 %v3437, %v3439
  %v3455 = vmul.f32 %v3438, %v3439
  %v3456 = vperm.slane %v48, 7
  %v3457 = vadd.f32 %v3440, %v3456
  %v3458 = vadd.f32 %v3441, %v3456
  %v3459 = vadd.f32 %v3442, %v3456
  %v3460 = vadd.f32 %v3443, %v3456
  %v3461 = vadd.f32 %v3444, %v3456
  %v3462 = vadd.f32 %v3445, %v3456
  %v3463 = vadd.f32 %v3446, %v3456
  %v3464 = vadd.f32 %v3447, %v3456
  %v3465 = vadd.f32 %v3448, %v3456
  %v3466 = vadd.f32 %v3449, %v3456
  %v3467 = vadd.f32 %v3450, %v3456
  %v3468 = vadd.f32 %v3451, %v3456
  %v3469 = vadd.f32 %v3452, %v3456
  %v3470 = vadd.f32 %v3453, %v3456
  %v3471 = vadd.f32 %v3454, %v3456
  %v3472 = vadd.f32 %v3455, %v3456
  %3473 = vst.msk [vmem:[%s9] sm:$0xff] %vm87, %v3457
  %3474 = vst.msk [vmem:[%s9 + $0x8] sm:$0xff] %vm87, %v3458
  %3475 = vst.msk [vmem:[%s9 + $0x10] sm:$0xff] %vm87, %v3459
  %3476 = vst.msk [vmem:[%s9 + $0x18] sm:$0xff] %vm87, %v3460
  %3477 = vst.msk [vmem:[%s9 + $0x20] sm:$0xff] %vm87, %v3461
  %3478 = vst.msk [vmem:[%s9 + $0x28] sm:$0xff] %vm87, %v3462
  %3479 = vst.msk [vmem:[%s9 + $0x30] sm:$0xff] %vm87, %v3463
  %3480 = vst.msk [vmem:[%s9 + $0x38] sm:$0xff] %vm87, %v3464
  %3481 = vst.msk [vmem:[%s9 + $0x40] sm:$0xff] %vm87, %v3465
  %3482 = vst.msk [vmem:[%s9 + $0x48] sm:$0xff] %vm87, %v3466
  %3483 = vst.msk [vmem:[%s9 + $0x50] sm:$0xff] %vm87, %v3467
  %3484 = vst.msk [vmem:[%s9 + $0x58] sm:$0xff] %vm87, %v3468
  %3485 = vst.msk [vmem:[%s9 + $0x60] sm:$0xff] %vm87, %v3469
  %3486 = vst.msk [vmem:[%s9 + $0x68] sm:$0xff] %vm87, %v3470
  %3487 = vst.msk [vmem:[%s9 + $0x70] sm:$0xff] %vm87, %v3471
  %3488 = vst.msk [vmem:[%s9 + $0x78] sm:$0xff] %vm87, %v3472
  // Predicated region
  $region38: #{tpu_custom_call.1} parent=0 // pred_check
    _
  $region39: #{tpu_custom_call.1} parent=0 // pred_check_branch
    %3490 = sbr.rel (0) target = $region41
  $region40: #{tpu_custom_call.1} parent=0 // pred_region
    _
  $region41: #{tpu_custom_call.1} parent=0 // pred_fallthru
    _
  // Predicated region
  $region42: #{tpu_custom_call.1} parent=0 // pred_check
    _
  $region43: #{tpu_custom_call.1} parent=0 // pred_check_branch
    %3492 = sbr.rel (0) target = $region45
  $region44: #{tpu_custom_call.1} parent=0 // pred_region
    _
  $region45: #{tpu_custom_call.1} parent=0 // pred_fallthru
    _

</llo_original>
